<compile_context>
chip_gen: v5e
topology: v5e:2x2
jax: 0.10.0
libtpu: 0.0.40
codegen_flags: <defaults>
</compile_context>

<pallas_src>
import math
import functools

import jax
import jax.numpy as jnp
from jax.experimental import pallas as pl
from jax.experimental.pallas import tpu as pltpu


def _round_up(v, m):
    return ((v + m - 1) // m) * m


# -----------------------------------------------------------------------------
# Kernel factory: whole model (all layers, both directions, FC) in ONE kernel.
# -----------------------------------------------------------------------------
def _make_fused_gru_kernel(T, Bp, layer_dim, HDp, Gp):
    """Build the fused GRU kernel.

    Layouts (all 128-lane / 8-sublane aligned):
      activations : (T*Bp, features) time-major slabs; step s occupies rows
                    [s*Bp, (s+1)*Bp) -- full sublane tiles.
      gates       : Gp = 3*HDp lanes, gate-major blocks [r | z | n], each HDp
                    wide; inside a block, lanes [0:H] = forward direction,
                    [H:2H] = backward direction, rest zero padding.
      hidden h    : (Bp, HDp) = [h_fwd | h_bwd | 0-pad].
    The fused recurrence step s advances the forward direction at original
    time s and the backward direction at original time T-1-s simultaneously
    (block-diagonal recurrent weights keep them independent).
    """

    def kernel(*refs):
        # refs = x2d, (wa, wb, whh, gb, bn) * layer_dim, fcw1, fcw2, fcb,
        #        out_ref, gxa_scr, gxb_scr, hs_scr
        x_ref = refs[0]
        pos = 1
        layers = []
        for _ in range(layer_dim):
            layers.append(refs[pos:pos + 5])
            pos += 5
        fcw1_ref, fcw2_ref, fcb_ref = refs[pos], refs[pos + 1], refs[pos + 2]
        out_ref = refs[pos + 3]
        gxa_ref, gxb_ref, hs_ref = refs[pos + 4], refs[pos + 5], refs[pos + 6]

        def rows(s):  # static, sublane-tile-aligned row window for step s
            return pl.ds(s * Bp, Bp)

        a2d = x_ref[...]                         # (T*Bp, Din) time-major slab
        for wa_ref, wb_ref, whh_ref, gb_ref, bn_ref in layers:
            # --- Hoisted input projections (off the recurrence) -------------
            # One matmul per direction stream over the whole sequence, written
            # straight into VMEM scratch (no lists kept live across the loop).
            # wa is consumed at fused-step index s, wb at index T-1-s; the
            # inter-layer direction reassembly is absorbed into wa/wb packing.
            gxa_ref[...] = (jnp.dot(a2d, wa_ref[...],
                                    preferred_element_type=jnp.float32)
                            + gb_ref[...])
            gxb_ref[...] = jnp.dot(a2d, wb_ref[...],
                                   preferred_element_type=jnp.float32)

            whh = whh_ref[...]                               # (HDp, Gp) blockdiag
            bn = jnp.broadcast_to(bn_ref[...], (Bp, HDp))    # hoisted b_hn bcast

            # --- Serial recurrence ------------------------------------------
            # Per step: one (Bp,HDp)@(HDp,Gp) matmul + gate math.  All slices
            # are 128-lane-aligned; h is a single vreg row; per-step h goes
            # straight to VMEM scratch (no hs list / concat).
            h = jnp.zeros((Bp, HDp), jnp.float32)    # [h_fwd | h_bwd | 0-pad]
            for s in range(T):                       # small static T: unrolled
                g = gxa_ref[rows(s), :] + gxb_ref[rows(T - 1 - s), :]
                gh = jnp.dot(h, whh, preferred_element_type=jnp.float32)
                r = jax.nn.sigmoid(g[:, 0:HDp] + gh[:, 0:HDp])
                z = jax.nn.sigmoid(g[:, HDp:2 * HDp] + gh[:, HDp:2 * HDp])
                n = jnp.tanh(g[:, 2 * HDp:3 * HDp]
                             + r * (gh[:, 2 * HDp:3 * HDp] + bn))
                h = (1.0 - z) * n + z * h
                hs_ref[rows(s), :] = h
            # Next layer consumes the fused-step slab directly.
            a2d = hs_ref[...]

        # --- Final Linear on out[:, -1, :] = [h_f(T-1) | h_b(T-1)] -----------
        # h_f(T-1) lives in fused step T-1, h_b(T-1) in fused step 0; the FC
        # weights are row-split at pack time so no concat is built.
        out_ref[...] = (
            jnp.dot(hs_ref[rows(T - 1), :], fcw1_ref[...],
                    preferred_element_type=jnp.float32)
            + jnp.dot(hs_ref[rows(0), :], fcw2_ref[...],
                      preferred_element_type=jnp.float32)
            + fcb_ref[...])

    return kernel


# -----------------------------------------------------------------------------
# Weight packing (trace-time, plain JAX)
# -----------------------------------------------------------------------------
def _pack_layer_weights(p, H, bichoice, is_first, din, GATE):
    """Pack torch-shaped per-layer GRU weights into the 128-lane-aligned fused
    layout.

    Returns (wa, wb, whh, gb, bn):
      wa  (din, 3*GATE): forward-time stream, consumed at fused step s with
          input row-block s.
      wb  (din, 3*GATE): reversed-time stream, consumed at fused step s with
          input row-block T-1-s.  (All zeros for unidirectional layers.)
      whh (GATE, 3*GATE): block-diagonal recurrent weights.
      gb  (1, 3*GATE): folded biases (b_ih + b_hh for r/z, b_ih only for n).
      bn  (1, GATE): b_hh of the n gate (stays inside the r*(.) term).

    For layers > 0 the previous layer's fused slab has lanes
    [0:H] = h_f(s) and [H:2H] = h_b(T-1-s); wa/wb route those halves to the
    correct direction's gate columns so no inter-layer concat is needed.
    """
    Gp = 3 * GATE
    Wf = jnp.transpose(p["wih_f"])          # (din_raw, 3H), columns [r | z | n]
    Uf = jnp.transpose(p["whh_f"])          # (H, 3H)
    bif, bhf = p["bih_f"], p["bhh_f"]

    wa = jnp.zeros((din, Gp), jnp.float32)
    wb = jnp.zeros((din, Gp), jnp.float32)
    whh = jnp.zeros((GATE, Gp), jnp.float32)
    gb = jnp.zeros((Gp,), jnp.float32)
    bn = jnp.zeros((GATE,), jnp.float32)

    for g in range(3):
        c0 = g * GATE                        # start of this gate's lane block
        wcol = slice(g * H, (g + 1) * H)     # torch column block for this gate
        whh = whh.at[0:H, c0:c0 + H].set(Uf[:, wcol])
        if is_first:
            wa = wa.at[:, c0:c0 + H].set(Wf[:, wcol])              # x(s) -> fwd
        else:
            wa = wa.at[0:H, c0:c0 + H].set(Wf[0:H, wcol])          # h_f(s) -> fwd

    gb = gb.at[0:H].set(bif[0:H] + bhf[0:H])
    gb = gb.at[GATE:GATE + H].set(bif[H:2 * H] + bhf[H:2 * H])
    gb = gb.at[2 * GATE:2 * GATE + H].set(bif[2 * H:3 * H])
    bn = bn.at[0:H].set(bhf[2 * H:3 * H])

    if bichoice:
        Wb_ = jnp.transpose(p["wih_b"])
        Ub = jnp.transpose(p["whh_b"])
        bib, bhb = p["bih_b"], p["bhh_b"]
        for g in range(3):
            c0 = g * GATE
            wcol = slice(g * H, (g + 1) * H)
            whh = whh.at[H:2 * H, c0 + H:c0 + 2 * H].set(Ub[:, wcol])
            if is_first:
                wb = wb.at[:, c0 + H:c0 + 2 * H].set(Wb_[:, wcol])  # x(T-1-s)->bwd
            else:
                # h_b(T-1-s) (lanes H:2H of slab row s)      -> bwd columns
                wa = wa.at[H:2 * H, c0 + H:c0 + 2 * H].set(Wb_[H:2 * H, wcol])
                # h_f(T-1-s) (lanes 0:H of slab row T-1-s)   -> bwd columns
                wb = wb.at[0:H, c0 + H:c0 + 2 * H].set(Wb_[0:H, wcol])
                # h_b(s)     (lanes H:2H of slab row T-1-s)  -> fwd columns
                wb = wb.at[H:2 * H, c0:c0 + H].set(Wf[H:2 * H, wcol])
        gb = gb.at[H:2 * H].set(bib[0:H] + bhb[0:H])
        gb = gb.at[GATE + H:GATE + 2 * H].set(bib[H:2 * H] + bhb[H:2 * H])
        gb = gb.at[2 * GATE + H:2 * GATE + 2 * H].set(bib[2 * H:3 * H])
        bn = bn.at[H:2 * H].set(bhb[2 * H:3 * H])

    return [wa, wb, whh, gb[None, :], bn[None, :]]


def _pack_fc_weights(fc_w, fc_b, H, bichoice, HDp, Op):
    """Row-split FC weights: fcw1 multiplies fused step T-1 (h_f(T-1)), fcw2
    multiplies fused step 0 (h_b(T-1)).  Output padded to Op lanes."""
    O = fc_w.shape[0]
    fcT = jnp.transpose(fc_w)                       # (num_dir*H, O)
    w1 = jnp.zeros((HDp, Op), jnp.float32).at[0:H, 0:O].set(fcT[0:H])
    w2 = jnp.zeros((HDp, Op), jnp.float32)
    if bichoice:
        w2 = w2.at[H:2 * H, 0:O].set(fcT[H:2 * H])
    b = jnp.zeros((1, Op), jnp.float32).at[0, 0:O].set(fc_b)
    return [w1, w2, b]


# -----------------------------------------------------------------------------
# Forward wrapper: single pallas_call for the entire module
# -----------------------------------------------------------------------------
def gru_model_forward(params, x, hidden_dim, layer_dim, bichoice):
    x = x.astype(jnp.float32)
    B, T, Din = x.shape
    H = hidden_dim
    num_dir = 2 if bichoice else 1
    O = params["fc_w"].shape[0]

    GATE = _round_up(max(num_dir * H, 128), 128)   # lanes per gate block
    HDp = GATE                                     # padded fused hidden width
    Gp = 3 * GATE
    Bp = _round_up(max(B, 8), 8)                   # full sublane tiles
    Op = _round_up(max(O, 128), 128)               # lane-dense FC output

    # batch_first -> time-major, zero-pad batch to Bp, flatten to a 2D slab so
    # every per-step row window inside the kernel is a full 8-sublane tile.
    x_tm = jnp.zeros((T, Bp, Din), jnp.float32).at[:, :B, :].set(
        jnp.transpose(x, (1, 0, 2)))
    x2d = x_tm.reshape(T * Bp, Din)

    inputs = [x2d]
    for l in range(layer_dim):
        din = Din if l == 0 else HDp
        inputs.extend(_pack_layer_weights(params["gru"][l], H, bichoice,
                                          l == 0, din, GATE))
    inputs.extend(_pack_fc_weights(params["fc_w"], params["fc_b"], H,
                                   bichoice, HDp, Op))

    kernel = _make_fused_gru_kernel(T, Bp, layer_dim, HDp, Gp)

    scratch_shapes = [
        pltpu.VMEM((T * Bp, Gp), jnp.float32),     # gxa: forward-time stream
        pltpu.VMEM((T * Bp, Gp), jnp.float32),     # gxb: reversed-time stream
        pltpu.VMEM((T * Bp, HDp), jnp.float32),    # fused per-step hidden slab
    ]

    # Explicit VMEM budget (v5e default scoped limit is only 16 MiB).
    in_bytes = sum(int(a.size) * 4 for a in inputs)
    scr_bytes = (2 * T * Bp * Gp + T * Bp * HDp + Bp * Op) * 4
    vmem_limit = int(min(100 * 1024 * 1024,
                         max(16 * 1024 * 1024, 2 * (in_bytes + scr_bytes))))

    out = pl.pallas_call(
        kernel,
        out_shape=jax.ShapeDtypeStruct((Bp, Op), jnp.float32),
        in_specs=[pl.BlockSpec(memory_space=pltpu.MemorySpace.VMEM)] * len(inputs),
        out_specs=pl.BlockSpec(memory_space=pltpu.MemorySpace.VMEM),
        scratch_shapes=scratch_shapes,
        compiler_params=pltpu.CompilerParams(vmem_limit_bytes=vmem_limit),
    )(*inputs)
    return out[:B, :O]


# -----------------------------------------------------------------------------
# Deterministic parameter init (same shapes / init range as torch nn.GRU)
# -----------------------------------------------------------------------------
def init_params(key, input_dim, hidden_dim, layer_dim, output_dim, bichoice):
    k = 1.0 / math.sqrt(hidden_dim)
    num_dir = 2 if bichoice else 1

    def unif(key, shape):
        return jax.random.uniform(key, shape, jnp.float32, -k, k)

    params = {"gru": []}
    for l in range(layer_dim):
        din = input_dim if l == 0 else hidden_dim * num_dir
        layer = {}
        for tag in (["f", "b"] if bichoice else ["f"]):
            key, k1, k2, k3, k4 = jax.random.split(key, 5)
            layer[f"wih_{tag}"] = unif(k1, (3 * hidden_dim, din))
            layer[f"whh_{tag}"] = unif(k2, (3 * hidden_dim, hidden_dim))
            layer[f"bih_{tag}"] = unif(k3, (3 * hidden_dim,))
            layer[f"bhh_{tag}"] = unif(k4, (3 * hidden_dim,))
        params["gru"].append(layer)

    key, k1, k2 = jax.random.split(key, 3)
    fin = hidden_dim * num_dir
    kf = 1.0 / math.sqrt(fin)
    params["fc_w"] = jax.random.uniform(k1, (output_dim, fin), jnp.float32, -kf, kf)
    params["fc_b"] = jax.random.uniform(k2, (output_dim,), jnp.float32, -kf, kf)
    return params


# -----------------------------------------------------------------------------
# Pure-JAX reference (silent correctness check, matches torch nn.GRU semantics)
# -----------------------------------------------------------------------------
def gru_dir_ref(x_tbd, wih, whh, bih, bhh, hidden):
    T, B, _ = x_tbd.shape
    h = jnp.zeros((B, hidden), jnp.float32)
    outs = []
    for t in range(T):
        gx = x_tbd[t] @ wih.T + bih
        gh = h @ whh.T + bhh
        r = jax.nn.sigmoid(gx[:, :hidden] + gh[:, :hidden])
        z = jax.nn.sigmoid(gx[:, hidden:2 * hidden] + gh[:, hidden:2 * hidden])
        n = jnp.tanh(gx[:, 2 * hidden:] + r * gh[:, 2 * hidden:])
        h = (1.0 - z) * n + z * h
        outs.append(h)
    return jnp.stack(outs, axis=0)


def forward_ref(params, x, hidden_dim, layer_dim, bichoice):
    x_tbd = jnp.transpose(x.astype(jnp.float32), (1, 0, 2))
    layer_in = x_tbd
    for l in range(layer_dim):
        p = params["gru"][l]
        out_f = gru_dir_ref(layer_in, p["wih_f"], p["whh_f"],
                            p["bih_f"], p["bhh_f"], hidden_dim)
        if bichoice:
            out_b = gru_dir_ref(layer_in[::-1], p["wih_b"], p["whh_b"],
                                p["bih_b"], p["bhh_b"], hidden_dim)[::-1]
            layer_in = jnp.concatenate([out_f, out_b], axis=-1)
        else:
            layer_in = out_f
    return layer_in[-1] @ params["fc_w"].T + params["fc_b"]


# -----------------------------------------------------------------------------
if __name__ == "__main__":
    input_dim, hidden_dim, layer_dim, output_dim = 16, 32, 2, 4
    bichoice = True
    batch, seq = 2, 8

    key = jax.random.PRNGKey(0)
    key, kx, kp = jax.random.split(key, 3)
    x = jax.random.normal(kx, (batch, seq, input_dim), jnp.float32)
    params = init_params(kp, input_dim, hidden_dim, layer_dim, output_dim, bichoice)

    fwd = jax.jit(functools.partial(gru_model_forward, hidden_dim=hidden_dim,
                                    layer_dim=layer_dim, bichoice=bichoice))
    out = jax.block_until_ready(fwd(params, x))

    ref = forward_ref(params, x, hidden_dim, layer_dim, bichoice)
    assert out.shape == (batch, output_dim)
    assert jnp.allclose(out, ref, atol=1e-4, rtol=1e-4), "mismatch vs reference"

    print("KERNEL_OK")
</pallas_src>

<mosaic_0001>
module attributes {stable_mosaic.version = 11 : i64} {
  func.func @kernel(%arg0: memref<64x16xf32, #tpu.memory_space<vmem>>, %arg1: memref<16x384xf32, #tpu.memory_space<vmem>>, %arg2: memref<16x384xf32, #tpu.memory_space<vmem>>, %arg3: memref<128x384xf32, #tpu.memory_space<vmem>>, %arg4: memref<1x384xf32, #tpu.memory_space<vmem>>, %arg5: memref<1x128xf32, #tpu.memory_space<vmem>>, %arg6: memref<128x384xf32, #tpu.memory_space<vmem>>, %arg7: memref<128x384xf32, #tpu.memory_space<vmem>>, %arg8: memref<128x384xf32, #tpu.memory_space<vmem>>, %arg9: memref<1x384xf32, #tpu.memory_space<vmem>>, %arg10: memref<1x128xf32, #tpu.memory_space<vmem>>, %arg11: memref<128x128xf32, #tpu.memory_space<vmem>>, %arg12: memref<128x128xf32, #tpu.memory_space<vmem>>, %arg13: memref<1x128xf32, #tpu.memory_space<vmem>>, %arg14: memref<8x128xf32, #tpu.memory_space<vmem>>, %arg15: memref<64x384xf32, #tpu.memory_space<vmem>>, %arg16: memref<64x384xf32, #tpu.memory_space<vmem>>, %arg17: memref<64x128xf32, #tpu.memory_space<vmem>>) attributes {dimension_semantics = [], scalar_prefetch = 0 : i64, scratch_operands = 3 : i64, tpu.core_type = #tpu.core_type<tc>} {
    %c0 = arith.constant 0 : index
    %c0_0 = arith.constant 0 : index
    %0 = vector.load %arg0[%c0, %c0_0] : memref<64x16xf32, #tpu.memory_space<vmem>>, vector<64x16xf32>
    %c0_1 = arith.constant 0 : index
    %c0_2 = arith.constant 0 : index
    %1 = vector.load %arg1[%c0_1, %c0_2] : memref<16x384xf32, #tpu.memory_space<vmem>>, vector<16x384xf32>
    %cst = arith.constant dense<0.000000e+00> : vector<64x384xf32>
    %2 = tpu.matmul %0, %1, %cst {dimension_numbers = #tpu.dot_dimension_numbers<[1], [0], [0], [1], [0, 0, 1, 1], [], []>} : vector<64x16xf32>, vector<16x384xf32>, vector<64x384xf32> -> vector<64x384xf32>
    %c0_3 = arith.constant 0 : index
    %c0_4 = arith.constant 0 : index
    %3 = vector.load %arg4[%c0_3, %c0_4] : memref<1x384xf32, #tpu.memory_space<vmem>>, vector<1x384xf32>
    %4 = vector.broadcast %3 : vector<1x384xf32> to vector<64x384xf32>
    %5 = arith.addf %2, %4 : vector<64x384xf32>
    %c0_5 = arith.constant 0 : index
    %c0_6 = arith.constant 0 : index
    %6 = vector.load %arg15[%c0_5, %c0_6] : memref<64x384xf32, #tpu.memory_space<vmem>>, vector<64x384xf32>
    tpu.vector_store %arg15[%c0_5, %c0_6], %5 {strides = array<i32>} : memref<64x384xf32, #tpu.memory_space<vmem>>, vector<64x384xf32>,
    %c0_7 = arith.constant 0 : index
    %c0_8 = arith.constant 0 : index
    %7 = vector.load %arg2[%c0_7, %c0_8] : memref<16x384xf32, #tpu.memory_space<vmem>>, vector<16x384xf32>
    %cst_9 = arith.constant dense<0.000000e+00> : vector<64x384xf32>
    %8 = tpu.matmul %0, %7, %cst_9 {dimension_numbers = #tpu.dot_dimension_numbers<[1], [0], [0], [1], [0, 0, 1, 1], [], []>} : vector<64x16xf32>, vector<16x384xf32>, vector<64x384xf32> -> vector<64x384xf32>
    %c0_10 = arith.constant 0 : index
    %c0_11 = arith.constant 0 : index
    %9 = vector.load %arg16[%c0_10, %c0_11] : memref<64x384xf32, #tpu.memory_space<vmem>>, vector<64x384xf32>
    tpu.vector_store %arg16[%c0_10, %c0_11], %8 {strides = array<i32>} : memref<64x384xf32, #tpu.memory_space<vmem>>, vector<64x384xf32>,
    %c0_12 = arith.constant 0 : index
    %c0_13 = arith.constant 0 : index
    %10 = vector.load %arg3[%c0_12, %c0_13] : memref<128x384xf32, #tpu.memory_space<vmem>>, vector<128x384xf32>
    %c0_14 = arith.constant 0 : index
    %c0_15 = arith.constant 0 : index
    %11 = vector.load %arg5[%c0_14, %c0_15] : memref<1x128xf32, #tpu.memory_space<vmem>>, vector<1x128xf32>
    %12 = vector.shape_cast %11 : vector<1x128xf32> to vector<1x128xf32>
    %13 = vector.broadcast %12 : vector<1x128xf32> to vector<8x128xf32>
    %cst_16 = arith.constant 0.000000e+00 : f32
    %14 = vector.broadcast %cst_16 : f32 to vector<8x128xf32>
    %c0_17 = arith.constant 0 : index
    %c0_18 = arith.constant 0 : index
    %15 = vector.load %arg15[%c0_17, %c0_18] : memref<64x384xf32, #tpu.memory_space<vmem>>, vector<8x384xf32>
    %c56 = arith.constant 56 : index
    %c0_19 = arith.constant 0 : index
    %16 = vector.load %arg16[%c56, %c0_19] : memref<64x384xf32, #tpu.memory_space<vmem>>, vector<8x384xf32>
    %17 = arith.addf %15, %16 : vector<8x384xf32>
    %cst_20 = arith.constant dense<0.000000e+00> : vector<8x384xf32>
    %18 = tpu.matmul %14, %10, %cst_20 {dimension_numbers = #tpu.dot_dimension_numbers<[1], [0], [0], [1], [0, 0, 1, 1], [], []>} : vector<8x128xf32>, vector<128x384xf32>, vector<8x384xf32> -> vector<8x384xf32>
    %19 = vector.extract_strided_slice %17 {offsets = [0, 0], sizes = [8, 128], strides = [1, 1]} : vector<8x384xf32> to vector<8x128xf32>
    %20 = vector.extract_strided_slice %18 {offsets = [0, 0], sizes = [8, 128], strides = [1, 1]} : vector<8x384xf32> to vector<8x128xf32>
    %21 = arith.addf %19, %20 : vector<8x128xf32>
    %22 = arith.negf %21 : vector<8x128xf32>
    %23 = math.exp %22 : vector<8x128xf32>
    %cst_21 = arith.constant 1.000000e+00 : f32
    %24 = vector.broadcast %cst_21 : f32 to vector<8x128xf32>
    %25 = arith.addf %24, %23 : vector<8x128xf32>
    %26 = arith.divf %24, %25 : vector<8x128xf32>
    %27 = vector.extract_strided_slice %17 {offsets = [0, 128], sizes = [8, 128], strides = [1, 1]} : vector<8x384xf32> to vector<8x128xf32>
    %28 = vector.extract_strided_slice %18 {offsets = [0, 128], sizes = [8, 128], strides = [1, 1]} : vector<8x384xf32> to vector<8x128xf32>
    %29 = arith.addf %27, %28 : vector<8x128xf32>
    %30 = arith.negf %29 : vector<8x128xf32>
    %31 = math.exp %30 : vector<8x128xf32>
    %cst_22 = arith.constant 1.000000e+00 : f32
    %32 = vector.broadcast %cst_22 : f32 to vector<8x128xf32>
    %33 = arith.addf %32, %31 : vector<8x128xf32>
    %34 = arith.divf %32, %33 : vector<8x128xf32>
    %35 = vector.extract_strided_slice %17 {offsets = [0, 256], sizes = [8, 128], strides = [1, 1]} : vector<8x384xf32> to vector<8x128xf32>
    %36 = vector.extract_strided_slice %18 {offsets = [0, 256], sizes = [8, 128], strides = [1, 1]} : vector<8x384xf32> to vector<8x128xf32>
    %37 = arith.addf %36, %13 : vector<8x128xf32>
    %38 = arith.mulf %26, %37 : vector<8x128xf32>
    %39 = arith.addf %35, %38 : vector<8x128xf32>
    %40 = math.tanh %39 : vector<8x128xf32>
    %cst_23 = arith.constant 1.000000e+00 : f32
    %41 = vector.broadcast %cst_23 : f32 to vector<8x128xf32>
    %42 = arith.subf %41, %34 : vector<8x128xf32>
    %43 = arith.mulf %42, %40 : vector<8x128xf32>
    %44 = arith.mulf %34, %14 : vector<8x128xf32>
    %45 = arith.addf %43, %44 : vector<8x128xf32>
    %c0_24 = arith.constant 0 : index
    %c0_25 = arith.constant 0 : index
    %46 = vector.load %arg17[%c0_24, %c0_25] : memref<64x128xf32, #tpu.memory_space<vmem>>, vector<8x128xf32>
    tpu.vector_store %arg17[%c0_24, %c0_25], %45 {strides = array<i32>} : memref<64x128xf32, #tpu.memory_space<vmem>>, vector<8x128xf32>,
    %c8 = arith.constant 8 : index
    %c0_26 = arith.constant 0 : index
    %47 = vector.load %arg15[%c8, %c0_26] : memref<64x384xf32, #tpu.memory_space<vmem>>, vector<8x384xf32>
    %c48 = arith.constant 48 : index
    %c0_27 = arith.constant 0 : index
    %48 = vector.load %arg16[%c48, %c0_27] : memref<64x384xf32, #tpu.memory_space<vmem>>, vector<8x384xf32>
    %49 = arith.addf %47, %48 : vector<8x384xf32>
    %cst_28 = arith.constant dense<0.000000e+00> : vector<8x384xf32>
    %50 = tpu.matmul %45, %10, %cst_28 {dimension_numbers = #tpu.dot_dimension_numbers<[1], [0], [0], [1], [0, 0, 1, 1], [], []>} : vector<8x128xf32>, vector<128x384xf32>, vector<8x384xf32> -> vector<8x384xf32>
    %51 = vector.extract_strided_slice %49 {offsets = [0, 0], sizes = [8, 128], strides = [1, 1]} : vector<8x384xf32> to vector<8x128xf32>
    %52 = vector.extract_strided_slice %50 {offsets = [0, 0], sizes = [8, 128], strides = [1, 1]} : vector<8x384xf32> to vector<8x128xf32>
    %53 = arith.addf %51, %52 : vector<8x128xf32>
    %54 = arith.negf %53 : vector<8x128xf32>
    %55 = math.exp %54 : vector<8x128xf32>
    %cst_29 = arith.constant 1.000000e+00 : f32
    %56 = vector.broadcast %cst_29 : f32 to vector<8x128xf32>
    %57 = arith.addf %56, %55 : vector<8x128xf32>
    %58 = arith.divf %56, %57 : vector<8x128xf32>
    %59 = vector.extract_strided_slice %49 {offsets = [0, 128], sizes = [8, 128], strides = [1, 1]} : vector<8x384xf32> to vector<8x128xf32>
    %60 = vector.extract_strided_slice %50 {offsets = [0, 128], sizes = [8, 128], strides = [1, 1]} : vector<8x384xf32> to vector<8x128xf32>
    %61 = arith.addf %59, %60 : vector<8x128xf32>
    %62 = arith.negf %61 : vector<8x128xf32>
    %63 = math.exp %62 : vector<8x128xf32>
    %cst_30 = arith.constant 1.000000e+00 : f32
    %64 = vector.broadcast %cst_30 : f32 to vector<8x128xf32>
    %65 = arith.addf %64, %63 : vector<8x128xf32>
    %66 = arith.divf %64, %65 : vector<8x128xf32>
    %67 = vector.extract_strided_slice %49 {offsets = [0, 256], sizes = [8, 128], strides = [1, 1]} : vector<8x384xf32> to vector<8x128xf32>
    %68 = vector.extract_strided_slice %50 {offsets = [0, 256], sizes = [8, 128], strides = [1, 1]} : vector<8x384xf32> to vector<8x128xf32>
    %69 = arith.addf %68, %13 : vector<8x128xf32>
    %70 = arith.mulf %58, %69 : vector<8x128xf32>
    %71 = arith.addf %67, %70 : vector<8x128xf32>
    %72 = math.tanh %71 : vector<8x128xf32>
    %cst_31 = arith.constant 1.000000e+00 : f32
    %73 = vector.broadcast %cst_31 : f32 to vector<8x128xf32>
    %74 = arith.subf %73, %66 : vector<8x128xf32>
    %75 = arith.mulf %74, %72 : vector<8x128xf32>
    %76 = arith.mulf %66, %45 : vector<8x128xf32>
    %77 = arith.addf %75, %76 : vector<8x128xf32>
    %c8_32 = arith.constant 8 : index
    %c0_33 = arith.constant 0 : index
    %78 = vector.load %arg17[%c8_32, %c0_33] : memref<64x128xf32, #tpu.memory_space<vmem>>, vector<8x128xf32>
    tpu.vector_store %arg17[%c8_32, %c0_33], %77 {strides = array<i32>} : memref<64x128xf32, #tpu.memory_space<vmem>>, vector<8x128xf32>,
    %c16 = arith.constant 16 : index
    %c0_34 = arith.constant 0 : index
    %79 = vector.load %arg15[%c16, %c0_34] : memref<64x384xf32, #tpu.memory_space<vmem>>, vector<8x384xf32>
    %c40 = arith.constant 40 : index
    %c0_35 = arith.constant 0 : index
    %80 = vector.load %arg16[%c40, %c0_35] : memref<64x384xf32, #tpu.memory_space<vmem>>, vector<8x384xf32>
    %81 = arith.addf %79, %80 : vector<8x384xf32>
    %cst_36 = arith.constant dense<0.000000e+00> : vector<8x384xf32>
    %82 = tpu.matmul %77, %10, %cst_36 {dimension_numbers = #tpu.dot_dimension_numbers<[1], [0], [0], [1], [0, 0, 1, 1], [], []>} : vector<8x128xf32>, vector<128x384xf32>, vector<8x384xf32> -> vector<8x384xf32>
    %83 = vector.extract_strided_slice %81 {offsets = [0, 0], sizes = [8, 128], strides = [1, 1]} : vector<8x384xf32> to vector<8x128xf32>
    %84 = vector.extract_strided_slice %82 {offsets = [0, 0], sizes = [8, 128], strides = [1, 1]} : vector<8x384xf32> to vector<8x128xf32>
    %85 = arith.addf %83, %84 : vector<8x128xf32>
    %86 = arith.negf %85 : vector<8x128xf32>
    %87 = math.exp %86 : vector<8x128xf32>
    %cst_37 = arith.constant 1.000000e+00 : f32
    %88 = vector.broadcast %cst_37 : f32 to vector<8x128xf32>
    %89 = arith.addf %88, %87 : vector<8x128xf32>
    %90 = arith.divf %88, %89 : vector<8x128xf32>
    %91 = vector.extract_strided_slice %81 {offsets = [0, 128], sizes = [8, 128], strides = [1, 1]} : vector<8x384xf32> to vector<8x128xf32>
    %92 = vector.extract_strided_slice %82 {offsets = [0, 128], sizes = [8, 128], strides = [1, 1]} : vector<8x384xf32> to vector<8x128xf32>
    %93 = arith.addf %91, %92 : vector<8x128xf32>
    %94 = arith.negf %93 : vector<8x128xf32>
    %95 = math.exp %94 : vector<8x128xf32>
    %cst_38 = arith.constant 1.000000e+00 : f32
    %96 = vector.broadcast %cst_38 : f32 to vector<8x128xf32>
    %97 = arith.addf %96, %95 : vector<8x128xf32>
    %98 = arith.divf %96, %97 : vector<8x128xf32>
    %99 = vector.extract_strided_slice %81 {offsets = [0, 256], sizes = [8, 128], strides = [1, 1]} : vector<8x384xf32> to vector<8x128xf32>
    %100 = vector.extract_strided_slice %82 {offsets = [0, 256], sizes = [8, 128], strides = [1, 1]} : vector<8x384xf32> to vector<8x128xf32>
    %101 = arith.addf %100, %13 : vector<8x128xf32>
    %102 = arith.mulf %90, %101 : vector<8x128xf32>
    %103 = arith.addf %99, %102 : vector<8x128xf32>
    %104 = math.tanh %103 : vector<8x128xf32>
    %cst_39 = arith.constant 1.000000e+00 : f32
    %105 = vector.broadcast %cst_39 : f32 to vector<8x128xf32>
    %106 = arith.subf %105, %98 : vector<8x128xf32>
    %107 = arith.mulf %106, %104 : vector<8x128xf32>
    %108 = arith.mulf %98, %77 : vector<8x128xf32>
    %109 = arith.addf %107, %108 : vector<8x128xf32>
    %c16_40 = arith.constant 16 : index
    %c0_41 = arith.constant 0 : index
    %110 = vector.load %arg17[%c16_40, %c0_41] : memref<64x128xf32, #tpu.memory_space<vmem>>, vector<8x128xf32>
    tpu.vector_store %arg17[%c16_40, %c0_41], %109 {strides = array<i32>} : memref<64x128xf32, #tpu.memory_space<vmem>>, vector<8x128xf32>,
    %c24 = arith.constant 24 : index
    %c0_42 = arith.constant 0 : index
    %111 = vector.load %arg15[%c24, %c0_42] : memref<64x384xf32, #tpu.memory_space<vmem>>, vector<8x384xf32>
    %c32 = arith.constant 32 : index
    %c0_43 = arith.constant 0 : index
    %112 = vector.load %arg16[%c32, %c0_43] : memref<64x384xf32, #tpu.memory_space<vmem>>, vector<8x384xf32>
    %113 = arith.addf %111, %112 : vector<8x384xf32>
    %cst_44 = arith.constant dense<0.000000e+00> : vector<8x384xf32>
    %114 = tpu.matmul %109, %10, %cst_44 {dimension_numbers = #tpu.dot_dimension_numbers<[1], [0], [0], [1], [0, 0, 1, 1], [], []>} : vector<8x128xf32>, vector<128x384xf32>, vector<8x384xf32> -> vector<8x384xf32>
    %115 = vector.extract_strided_slice %113 {offsets = [0, 0], sizes = [8, 128], strides = [1, 1]} : vector<8x384xf32> to vector<8x128xf32>
    %116 = vector.extract_strided_slice %114 {offsets = [0, 0], sizes = [8, 128], strides = [1, 1]} : vector<8x384xf32> to vector<8x128xf32>
    %117 = arith.addf %115, %116 : vector<8x128xf32>
    %118 = arith.negf %117 : vector<8x128xf32>
    %119 = math.exp %118 : vector<8x128xf32>
    %cst_45 = arith.constant 1.000000e+00 : f32
    %120 = vector.broadcast %cst_45 : f32 to vector<8x128xf32>
    %121 = arith.addf %120, %119 : vector<8x128xf32>
    %122 = arith.divf %120, %121 : vector<8x128xf32>
    %123 = vector.extract_strided_slice %113 {offsets = [0, 128], sizes = [8, 128], strides = [1, 1]} : vector<8x384xf32> to vector<8x128xf32>
    %124 = vector.extract_strided_slice %114 {offsets = [0, 128], sizes = [8, 128], strides = [1, 1]} : vector<8x384xf32> to vector<8x128xf32>
    %125 = arith.addf %123, %124 : vector<8x128xf32>
    %126 = arith.negf %125 : vector<8x128xf32>
    %127 = math.exp %126 : vector<8x128xf32>
    %cst_46 = arith.constant 1.000000e+00 : f32
    %128 = vector.broadcast %cst_46 : f32 to vector<8x128xf32>
    %129 = arith.addf %128, %127 : vector<8x128xf32>
    %130 = arith.divf %128, %129 : vector<8x128xf32>
    %131 = vector.extract_strided_slice %113 {offsets = [0, 256], sizes = [8, 128], strides = [1, 1]} : vector<8x384xf32> to vector<8x128xf32>
    %132 = vector.extract_strided_slice %114 {offsets = [0, 256], sizes = [8, 128], strides = [1, 1]} : vector<8x384xf32> to vector<8x128xf32>
    %133 = arith.addf %132, %13 : vector<8x128xf32>
    %134 = arith.mulf %122, %133 : vector<8x128xf32>
    %135 = arith.addf %131, %134 : vector<8x128xf32>
    %136 = math.tanh %135 : vector<8x128xf32>
    %cst_47 = arith.constant 1.000000e+00 : f32
    %137 = vector.broadcast %cst_47 : f32 to vector<8x128xf32>
    %138 = arith.subf %137, %130 : vector<8x128xf32>
    %139 = arith.mulf %138, %136 : vector<8x128xf32>
    %140 = arith.mulf %130, %109 : vector<8x128xf32>
    %141 = arith.addf %139, %140 : vector<8x128xf32>
    %c24_48 = arith.constant 24 : index
    %c0_49 = arith.constant 0 : index
    %142 = vector.load %arg17[%c24_48, %c0_49] : memref<64x128xf32, #tpu.memory_space<vmem>>, vector<8x128xf32>
    tpu.vector_store %arg17[%c24_48, %c0_49], %141 {strides = array<i32>} : memref<64x128xf32, #tpu.memory_space<vmem>>, vector<8x128xf32>,
    %c32_50 = arith.constant 32 : index
    %c0_51 = arith.constant 0 : index
    %143 = vector.load %arg15[%c32_50, %c0_51] : memref<64x384xf32, #tpu.memory_space<vmem>>, vector<8x384xf32>
    %c24_52 = arith.constant 24 : index
    %c0_53 = arith.constant 0 : index
    %144 = vector.load %arg16[%c24_52, %c0_53] : memref<64x384xf32, #tpu.memory_space<vmem>>, vector<8x384xf32>
    %145 = arith.addf %143, %144 : vector<8x384xf32>
    %cst_54 = arith.constant dense<0.000000e+00> : vector<8x384xf32>
    %146 = tpu.matmul %141, %10, %cst_54 {dimension_numbers = #tpu.dot_dimension_numbers<[1], [0], [0], [1], [0, 0, 1, 1], [], []>} : vector<8x128xf32>, vector<128x384xf32>, vector<8x384xf32> -> vector<8x384xf32>
    %147 = vector.extract_strided_slice %145 {offsets = [0, 0], sizes = [8, 128], strides = [1, 1]} : vector<8x384xf32> to vector<8x128xf32>
    %148 = vector.extract_strided_slice %146 {offsets = [0, 0], sizes = [8, 128], strides = [1, 1]} : vector<8x384xf32> to vector<8x128xf32>
    %149 = arith.addf %147, %148 : vector<8x128xf32>
    %150 = arith.negf %149 : vector<8x128xf32>
    %151 = math.exp %150 : vector<8x128xf32>
    %cst_55 = arith.constant 1.000000e+00 : f32
    %152 = vector.broadcast %cst_55 : f32 to vector<8x128xf32>
    %153 = arith.addf %152, %151 : vector<8x128xf32>
    %154 = arith.divf %152, %153 : vector<8x128xf32>
    %155 = vector.extract_strided_slice %145 {offsets = [0, 128], sizes = [8, 128], strides = [1, 1]} : vector<8x384xf32> to vector<8x128xf32>
    %156 = vector.extract_strided_slice %146 {offsets = [0, 128], sizes = [8, 128], strides = [1, 1]} : vector<8x384xf32> to vector<8x128xf32>
    %157 = arith.addf %155, %156 : vector<8x128xf32>
    %158 = arith.negf %157 : vector<8x128xf32>
    %159 = math.exp %158 : vector<8x128xf32>
    %cst_56 = arith.constant 1.000000e+00 : f32
    %160 = vector.broadcast %cst_56 : f32 to vector<8x128xf32>
    %161 = arith.addf %160, %159 : vector<8x128xf32>
    %162 = arith.divf %160, %161 : vector<8x128xf32>
    %163 = vector.extract_strided_slice %145 {offsets = [0, 256], sizes = [8, 128], strides = [1, 1]} : vector<8x384xf32> to vector<8x128xf32>
    %164 = vector.extract_strided_slice %146 {offsets = [0, 256], sizes = [8, 128], strides = [1, 1]} : vector<8x384xf32> to vector<8x128xf32>
    %165 = arith.addf %164, %13 : vector<8x128xf32>
    %166 = arith.mulf %154, %165 : vector<8x128xf32>
    %167 = arith.addf %163, %166 : vector<8x128xf32>
    %168 = math.tanh %167 : vector<8x128xf32>
    %cst_57 = arith.constant 1.000000e+00 : f32
    %169 = vector.broadcast %cst_57 : f32 to vector<8x128xf32>
    %170 = arith.subf %169, %162 : vector<8x128xf32>
    %171 = arith.mulf %170, %168 : vector<8x128xf32>
    %172 = arith.mulf %162, %141 : vector<8x128xf32>
    %173 = arith.addf %171, %172 : vector<8x128xf32>
    %c32_58 = arith.constant 32 : index
    %c0_59 = arith.constant 0 : index
    %174 = vector.load %arg17[%c32_58, %c0_59] : memref<64x128xf32, #tpu.memory_space<vmem>>, vector<8x128xf32>
    tpu.vector_store %arg17[%c32_58, %c0_59], %173 {strides = array<i32>} : memref<64x128xf32, #tpu.memory_space<vmem>>, vector<8x128xf32>,
    %c40_60 = arith.constant 40 : index
    %c0_61 = arith.constant 0 : index
    %175 = vector.load %arg15[%c40_60, %c0_61] : memref<64x384xf32, #tpu.memory_space<vmem>>, vector<8x384xf32>
    %c16_62 = arith.constant 16 : index
    %c0_63 = arith.constant 0 : index
    %176 = vector.load %arg16[%c16_62, %c0_63] : memref<64x384xf32, #tpu.memory_space<vmem>>, vector<8x384xf32>
    %177 = arith.addf %175, %176 : vector<8x384xf32>
    %cst_64 = arith.constant dense<0.000000e+00> : vector<8x384xf32>
    %178 = tpu.matmul %173, %10, %cst_64 {dimension_numbers = #tpu.dot_dimension_numbers<[1], [0], [0], [1], [0, 0, 1, 1], [], []>} : vector<8x128xf32>, vector<128x384xf32>, vector<8x384xf32> -> vector<8x384xf32>
    %179 = vector.extract_strided_slice %177 {offsets = [0, 0], sizes = [8, 128], strides = [1, 1]} : vector<8x384xf32> to vector<8x128xf32>
    %180 = vector.extract_strided_slice %178 {offsets = [0, 0], sizes = [8, 128], strides = [1, 1]} : vector<8x384xf32> to vector<8x128xf32>
    %181 = arith.addf %179, %180 : vector<8x128xf32>
    %182 = arith.negf %181 : vector<8x128xf32>
    %183 = math.exp %182 : vector<8x128xf32>
    %cst_65 = arith.constant 1.000000e+00 : f32
    %184 = vector.broadcast %cst_65 : f32 to vector<8x128xf32>
    %185 = arith.addf %184, %183 : vector<8x128xf32>
    %186 = arith.divf %184, %185 : vector<8x128xf32>
    %187 = vector.extract_strided_slice %177 {offsets = [0, 128], sizes = [8, 128], strides = [1, 1]} : vector<8x384xf32> to vector<8x128xf32>
    %188 = vector.extract_strided_slice %178 {offsets = [0, 128], sizes = [8, 128], strides = [1, 1]} : vector<8x384xf32> to vector<8x128xf32>
    %189 = arith.addf %187, %188 : vector<8x128xf32>
    %190 = arith.negf %189 : vector<8x128xf32>
    %191 = math.exp %190 : vector<8x128xf32>
    %cst_66 = arith.constant 1.000000e+00 : f32
    %192 = vector.broadcast %cst_66 : f32 to vector<8x128xf32>
    %193 = arith.addf %192, %191 : vector<8x128xf32>
    %194 = arith.divf %192, %193 : vector<8x128xf32>
    %195 = vector.extract_strided_slice %177 {offsets = [0, 256], sizes = [8, 128], strides = [1, 1]} : vector<8x384xf32> to vector<8x128xf32>
    %196 = vector.extract_strided_slice %178 {offsets = [0, 256], sizes = [8, 128], strides = [1, 1]} : vector<8x384xf32> to vector<8x128xf32>
    %197 = arith.addf %196, %13 : vector<8x128xf32>
    %198 = arith.mulf %186, %197 : vector<8x128xf32>
    %199 = arith.addf %195, %198 : vector<8x128xf32>
    %200 = math.tanh %199 : vector<8x128xf32>
    %cst_67 = arith.constant 1.000000e+00 : f32
    %201 = vector.broadcast %cst_67 : f32 to vector<8x128xf32>
    %202 = arith.subf %201, %194 : vector<8x128xf32>
    %203 = arith.mulf %202, %200 : vector<8x128xf32>
    %204 = arith.mulf %194, %173 : vector<8x128xf32>
    %205 = arith.addf %203, %204 : vector<8x128xf32>
    %c40_68 = arith.constant 40 : index
    %c0_69 = arith.constant 0 : index
    %206 = vector.load %arg17[%c40_68, %c0_69] : memref<64x128xf32, #tpu.memory_space<vmem>>, vector<8x128xf32>
    tpu.vector_store %arg17[%c40_68, %c0_69], %205 {strides = array<i32>} : memref<64x128xf32, #tpu.memory_space<vmem>>, vector<8x128xf32>,
    %c48_70 = arith.constant 48 : index
    %c0_71 = arith.constant 0 : index
    %207 = vector.load %arg15[%c48_70, %c0_71] : memref<64x384xf32, #tpu.memory_space<vmem>>, vector<8x384xf32>
    %c8_72 = arith.constant 8 : index
    %c0_73 = arith.constant 0 : index
    %208 = vector.load %arg16[%c8_72, %c0_73] : memref<64x384xf32, #tpu.memory_space<vmem>>, vector<8x384xf32>
    %209 = arith.addf %207, %208 : vector<8x384xf32>
    %cst_74 = arith.constant dense<0.000000e+00> : vector<8x384xf32>
    %210 = tpu.matmul %205, %10, %cst_74 {dimension_numbers = #tpu.dot_dimension_numbers<[1], [0], [0], [1], [0, 0, 1, 1], [], []>} : vector<8x128xf32>, vector<128x384xf32>, vector<8x384xf32> -> vector<8x384xf32>
    %211 = vector.extract_strided_slice %209 {offsets = [0, 0], sizes = [8, 128], strides = [1, 1]} : vector<8x384xf32> to vector<8x128xf32>
    %212 = vector.extract_strided_slice %210 {offsets = [0, 0], sizes = [8, 128], strides = [1, 1]} : vector<8x384xf32> to vector<8x128xf32>
    %213 = arith.addf %211, %212 : vector<8x128xf32>
    %214 = arith.negf %213 : vector<8x128xf32>
    %215 = math.exp %214 : vector<8x128xf32>
    %cst_75 = arith.constant 1.000000e+00 : f32
    %216 = vector.broadcast %cst_75 : f32 to vector<8x128xf32>
    %217 = arith.addf %216, %215 : vector<8x128xf32>
    %218 = arith.divf %216, %217 : vector<8x128xf32>
    %219 = vector.extract_strided_slice %209 {offsets = [0, 128], sizes = [8, 128], strides = [1, 1]} : vector<8x384xf32> to vector<8x128xf32>
    %220 = vector.extract_strided_slice %210 {offsets = [0, 128], sizes = [8, 128], strides = [1, 1]} : vector<8x384xf32> to vector<8x128xf32>
    %221 = arith.addf %219, %220 : vector<8x128xf32>
    %222 = arith.negf %221 : vector<8x128xf32>
    %223 = math.exp %222 : vector<8x128xf32>
    %cst_76 = arith.constant 1.000000e+00 : f32
    %224 = vector.broadcast %cst_76 : f32 to vector<8x128xf32>
    %225 = arith.addf %224, %223 : vector<8x128xf32>
    %226 = arith.divf %224, %225 : vector<8x128xf32>
    %227 = vector.extract_strided_slice %209 {offsets = [0, 256], sizes = [8, 128], strides = [1, 1]} : vector<8x384xf32> to vector<8x128xf32>
    %228 = vector.extract_strided_slice %210 {offsets = [0, 256], sizes = [8, 128], strides = [1, 1]} : vector<8x384xf32> to vector<8x128xf32>
    %229 = arith.addf %228, %13 : vector<8x128xf32>
    %230 = arith.mulf %218, %229 : vector<8x128xf32>
    %231 = arith.addf %227, %230 : vector<8x128xf32>
    %232 = math.tanh %231 : vector<8x128xf32>
    %cst_77 = arith.constant 1.000000e+00 : f32
    %233 = vector.broadcast %cst_77 : f32 to vector<8x128xf32>
    %234 = arith.subf %233, %226 : vector<8x128xf32>
    %235 = arith.mulf %234, %232 : vector<8x128xf32>
    %236 = arith.mulf %226, %205 : vector<8x128xf32>
    %237 = arith.addf %235, %236 : vector<8x128xf32>
    %c48_78 = arith.constant 48 : index
    %c0_79 = arith.constant 0 : index
    %238 = vector.load %arg17[%c48_78, %c0_79] : memref<64x128xf32, #tpu.memory_space<vmem>>, vector<8x128xf32>
    tpu.vector_store %arg17[%c48_78, %c0_79], %237 {strides = array<i32>} : memref<64x128xf32, #tpu.memory_space<vmem>>, vector<8x128xf32>,
    %c56_80 = arith.constant 56 : index
    %c0_81 = arith.constant 0 : index
    %239 = vector.load %arg15[%c56_80, %c0_81] : memref<64x384xf32, #tpu.memory_space<vmem>>, vector<8x384xf32>
    %c0_82 = arith.constant 0 : index
    %c0_83 = arith.constant 0 : index
    %240 = vector.load %arg16[%c0_82, %c0_83] : memref<64x384xf32, #tpu.memory_space<vmem>>, vector<8x384xf32>
    %241 = arith.addf %239, %240 : vector<8x384xf32>
    %cst_84 = arith.constant dense<0.000000e+00> : vector<8x384xf32>
    %242 = tpu.matmul %237, %10, %cst_84 {dimension_numbers = #tpu.dot_dimension_numbers<[1], [0], [0], [1], [0, 0, 1, 1], [], []>} : vector<8x128xf32>, vector<128x384xf32>, vector<8x384xf32> -> vector<8x384xf32>
    %243 = vector.extract_strided_slice %241 {offsets = [0, 0], sizes = [8, 128], strides = [1, 1]} : vector<8x384xf32> to vector<8x128xf32>
    %244 = vector.extract_strided_slice %242 {offsets = [0, 0], sizes = [8, 128], strides = [1, 1]} : vector<8x384xf32> to vector<8x128xf32>
    %245 = arith.addf %243, %244 : vector<8x128xf32>
    %246 = arith.negf %245 : vector<8x128xf32>
    %247 = math.exp %246 : vector<8x128xf32>
    %cst_85 = arith.constant 1.000000e+00 : f32
    %248 = vector.broadcast %cst_85 : f32 to vector<8x128xf32>
    %249 = arith.addf %248, %247 : vector<8x128xf32>
    %250 = arith.divf %248, %249 : vector<8x128xf32>
    %251 = vector.extract_strided_slice %241 {offsets = [0, 128], sizes = [8, 128], strides = [1, 1]} : vector<8x384xf32> to vector<8x128xf32>
    %252 = vector.extract_strided_slice %242 {offsets = [0, 128], sizes = [8, 128], strides = [1, 1]} : vector<8x384xf32> to vector<8x128xf32>
    %253 = arith.addf %251, %252 : vector<8x128xf32>
    %254 = arith.negf %253 : vector<8x128xf32>
    %255 = math.exp %254 : vector<8x128xf32>
    %cst_86 = arith.constant 1.000000e+00 : f32
    %256 = vector.broadcast %cst_86 : f32 to vector<8x128xf32>
    %257 = arith.addf %256, %255 : vector<8x128xf32>
    %258 = arith.divf %256, %257 : vector<8x128xf32>
    %259 = vector.extract_strided_slice %241 {offsets = [0, 256], sizes = [8, 128], strides = [1, 1]} : vector<8x384xf32> to vector<8x128xf32>
    %260 = vector.extract_strided_slice %242 {offsets = [0, 256], sizes = [8, 128], strides = [1, 1]} : vector<8x384xf32> to vector<8x128xf32>
    %261 = arith.addf %260, %13 : vector<8x128xf32>
    %262 = arith.mulf %250, %261 : vector<8x128xf32>
    %263 = arith.addf %259, %262 : vector<8x128xf32>
    %264 = math.tanh %263 : vector<8x128xf32>
    %cst_87 = arith.constant 1.000000e+00 : f32
    %265 = vector.broadcast %cst_87 : f32 to vector<8x128xf32>
    %266 = arith.subf %265, %258 : vector<8x128xf32>
    %267 = arith.mulf %266, %264 : vector<8x128xf32>
    %268 = arith.mulf %258, %237 : vector<8x128xf32>
    %269 = arith.addf %267, %268 : vector<8x128xf32>
    %c56_88 = arith.constant 56 : index
    %c0_89 = arith.constant 0 : index
    %270 = vector.load %arg17[%c56_88, %c0_89] : memref<64x128xf32, #tpu.memory_space<vmem>>, vector<8x128xf32>
    tpu.vector_store %arg17[%c56_88, %c0_89], %269 {strides = array<i32>} : memref<64x128xf32, #tpu.memory_space<vmem>>, vector<8x128xf32>,
    %c0_90 = arith.constant 0 : index
    %c0_91 = arith.constant 0 : index
    %271 = vector.load %arg17[%c0_90, %c0_91] : memref<64x128xf32, #tpu.memory_space<vmem>>, vector<64x128xf32>
    %c0_92 = arith.constant 0 : index
    %c0_93 = arith.constant 0 : index
    %272 = vector.load %arg6[%c0_92, %c0_93] : memref<128x384xf32, #tpu.memory_space<vmem>>, vector<128x384xf32>
    %cst_94 = arith.constant dense<0.000000e+00> : vector<64x384xf32>
    %273 = tpu.matmul %271, %272, %cst_94 {dimension_numbers = #tpu.dot_dimension_numbers<[1], [0], [0], [1], [0, 0, 1, 1], [], []>} : vector<64x128xf32>, vector<128x384xf32>, vector<64x384xf32> -> vector<64x384xf32>
    %c0_95 = arith.constant 0 : index
    %c0_96 = arith.constant 0 : index
    %274 = vector.load %arg9[%c0_95, %c0_96] : memref<1x384xf32, #tpu.memory_space<vmem>>, vector<1x384xf32>
    %275 = vector.broadcast %274 : vector<1x384xf32> to vector<64x384xf32>
    %276 = arith.addf %273, %275 : vector<64x384xf32>
    %c0_97 = arith.constant 0 : index
    %c0_98 = arith.constant 0 : index
    %277 = vector.load %arg15[%c0_97, %c0_98] : memref<64x384xf32, #tpu.memory_space<vmem>>, vector<64x384xf32>
    tpu.vector_store %arg15[%c0_97, %c0_98], %276 {strides = array<i32>} : memref<64x384xf32, #tpu.memory_space<vmem>>, vector<64x384xf32>,
    %c0_99 = arith.constant 0 : index
    %c0_100 = arith.constant 0 : index
    %278 = vector.load %arg7[%c0_99, %c0_100] : memref<128x384xf32, #tpu.memory_space<vmem>>, vector<128x384xf32>
    %cst_101 = arith.constant dense<0.000000e+00> : vector<64x384xf32>
    %279 = tpu.matmul %271, %278, %cst_101 {dimension_numbers = #tpu.dot_dimension_numbers<[1], [0], [0], [1], [0, 0, 1, 1], [], []>} : vector<64x128xf32>, vector<128x384xf32>, vector<64x384xf32> -> vector<64x384xf32>
    %c0_102 = arith.constant 0 : index
    %c0_103 = arith.constant 0 : index
    %280 = vector.load %arg16[%c0_102, %c0_103] : memref<64x384xf32, #tpu.memory_space<vmem>>, vector<64x384xf32>
    tpu.vector_store %arg16[%c0_102, %c0_103], %279 {strides = array<i32>} : memref<64x384xf32, #tpu.memory_space<vmem>>, vector<64x384xf32>,
    %c0_104 = arith.constant 0 : index
    %c0_105 = arith.constant 0 : index
    %281 = vector.load %arg8[%c0_104, %c0_105] : memref<128x384xf32, #tpu.memory_space<vmem>>, vector<128x384xf32>
    %c0_106 = arith.constant 0 : index
    %c0_107 = arith.constant 0 : index
    %282 = vector.load %arg10[%c0_106, %c0_107] : memref<1x128xf32, #tpu.memory_space<vmem>>, vector<1x128xf32>
    %283 = vector.shape_cast %282 : vector<1x128xf32> to vector<1x128xf32>
    %284 = vector.broadcast %283 : vector<1x128xf32> to vector<8x128xf32>
    %cst_108 = arith.constant 0.000000e+00 : f32
    %285 = vector.broadcast %cst_108 : f32 to vector<8x128xf32>
    %c0_109 = arith.constant 0 : index
    %c0_110 = arith.constant 0 : index
    %286 = vector.load %arg15[%c0_109, %c0_110] : memref<64x384xf32, #tpu.memory_space<vmem>>, vector<8x384xf32>
    %c56_111 = arith.constant 56 : index
    %c0_112 = arith.constant 0 : index
    %287 = vector.load %arg16[%c56_111, %c0_112] : memref<64x384xf32, #tpu.memory_space<vmem>>, vector<8x384xf32>
    %288 = arith.addf %286, %287 : vector<8x384xf32>
    %cst_113 = arith.constant dense<0.000000e+00> : vector<8x384xf32>
    %289 = tpu.matmul %285, %281, %cst_113 {dimension_numbers = #tpu.dot_dimension_numbers<[1], [0], [0], [1], [0, 0, 1, 1], [], []>} : vector<8x128xf32>, vector<128x384xf32>, vector<8x384xf32> -> vector<8x384xf32>
    %290 = vector.extract_strided_slice %288 {offsets = [0, 0], sizes = [8, 128], strides = [1, 1]} : vector<8x384xf32> to vector<8x128xf32>
    %291 = vector.extract_strided_slice %289 {offsets = [0, 0], sizes = [8, 128], strides = [1, 1]} : vector<8x384xf32> to vector<8x128xf32>
    %292 = arith.addf %290, %291 : vector<8x128xf32>
    %293 = arith.negf %292 : vector<8x128xf32>
    %294 = math.exp %293 : vector<8x128xf32>
    %cst_114 = arith.constant 1.000000e+00 : f32
    %295 = vector.broadcast %cst_114 : f32 to vector<8x128xf32>
    %296 = arith.addf %295, %294 : vector<8x128xf32>
    %297 = arith.divf %295, %296 : vector<8x128xf32>
    %298 = vector.extract_strided_slice %288 {offsets = [0, 128], sizes = [8, 128], strides = [1, 1]} : vector<8x384xf32> to vector<8x128xf32>
    %299 = vector.extract_strided_slice %289 {offsets = [0, 128], sizes = [8, 128], strides = [1, 1]} : vector<8x384xf32> to vector<8x128xf32>
    %300 = arith.addf %298, %299 : vector<8x128xf32>
    %301 = arith.negf %300 : vector<8x128xf32>
    %302 = math.exp %301 : vector<8x128xf32>
    %cst_115 = arith.constant 1.000000e+00 : f32
    %303 = vector.broadcast %cst_115 : f32 to vector<8x128xf32>
    %304 = arith.addf %303, %302 : vector<8x128xf32>
    %305 = arith.divf %303, %304 : vector<8x128xf32>
    %306 = vector.extract_strided_slice %288 {offsets = [0, 256], sizes = [8, 128], strides = [1, 1]} : vector<8x384xf32> to vector<8x128xf32>
    %307 = vector.extract_strided_slice %289 {offsets = [0, 256], sizes = [8, 128], strides = [1, 1]} : vector<8x384xf32> to vector<8x128xf32>
    %308 = arith.addf %307, %284 : vector<8x128xf32>
    %309 = arith.mulf %297, %308 : vector<8x128xf32>
    %310 = arith.addf %306, %309 : vector<8x128xf32>
    %311 = math.tanh %310 : vector<8x128xf32>
    %cst_116 = arith.constant 1.000000e+00 : f32
    %312 = vector.broadcast %cst_116 : f32 to vector<8x128xf32>
    %313 = arith.subf %312, %305 : vector<8x128xf32>
    %314 = arith.mulf %313, %311 : vector<8x128xf32>
    %315 = arith.mulf %305, %285 : vector<8x128xf32>
    %316 = arith.addf %314, %315 : vector<8x128xf32>
    %c0_117 = arith.constant 0 : index
    %c0_118 = arith.constant 0 : index
    %317 = vector.load %arg17[%c0_117, %c0_118] : memref<64x128xf32, #tpu.memory_space<vmem>>, vector<8x128xf32>
    tpu.vector_store %arg17[%c0_117, %c0_118], %316 {strides = array<i32>} : memref<64x128xf32, #tpu.memory_space<vmem>>, vector<8x128xf32>,
    %c8_119 = arith.constant 8 : index
    %c0_120 = arith.constant 0 : index
    %318 = vector.load %arg15[%c8_119, %c0_120] : memref<64x384xf32, #tpu.memory_space<vmem>>, vector<8x384xf32>
    %c48_121 = arith.constant 48 : index
    %c0_122 = arith.constant 0 : index
    %319 = vector.load %arg16[%c48_121, %c0_122] : memref<64x384xf32, #tpu.memory_space<vmem>>, vector<8x384xf32>
    %320 = arith.addf %318, %319 : vector<8x384xf32>
    %cst_123 = arith.constant dense<0.000000e+00> : vector<8x384xf32>
    %321 = tpu.matmul %316, %281, %cst_123 {dimension_numbers = #tpu.dot_dimension_numbers<[1], [0], [0], [1], [0, 0, 1, 1], [], []>} : vector<8x128xf32>, vector<128x384xf32>, vector<8x384xf32> -> vector<8x384xf32>
    %322 = vector.extract_strided_slice %320 {offsets = [0, 0], sizes = [8, 128], strides = [1, 1]} : vector<8x384xf32> to vector<8x128xf32>
    %323 = vector.extract_strided_slice %321 {offsets = [0, 0], sizes = [8, 128], strides = [1, 1]} : vector<8x384xf32> to vector<8x128xf32>
    %324 = arith.addf %322, %323 : vector<8x128xf32>
    %325 = arith.negf %324 : vector<8x128xf32>
    %326 = math.exp %325 : vector<8x128xf32>
    %cst_124 = arith.constant 1.000000e+00 : f32
    %327 = vector.broadcast %cst_124 : f32 to vector<8x128xf32>
    %328 = arith.addf %327, %326 : vector<8x128xf32>
    %329 = arith.divf %327, %328 : vector<8x128xf32>
    %330 = vector.extract_strided_slice %320 {offsets = [0, 128], sizes = [8, 128], strides = [1, 1]} : vector<8x384xf32> to vector<8x128xf32>
    %331 = vector.extract_strided_slice %321 {offsets = [0, 128], sizes = [8, 128], strides = [1, 1]} : vector<8x384xf32> to vector<8x128xf32>
    %332 = arith.addf %330, %331 : vector<8x128xf32>
    %333 = arith.negf %332 : vector<8x128xf32>
    %334 = math.exp %333 : vector<8x128xf32>
    %cst_125 = arith.constant 1.000000e+00 : f32
    %335 = vector.broadcast %cst_125 : f32 to vector<8x128xf32>
    %336 = arith.addf %335, %334 : vector<8x128xf32>
    %337 = arith.divf %335, %336 : vector<8x128xf32>
    %338 = vector.extract_strided_slice %320 {offsets = [0, 256], sizes = [8, 128], strides = [1, 1]} : vector<8x384xf32> to vector<8x128xf32>
    %339 = vector.extract_strided_slice %321 {offsets = [0, 256], sizes = [8, 128], strides = [1, 1]} : vector<8x384xf32> to vector<8x128xf32>
    %340 = arith.addf %339, %284 : vector<8x128xf32>
    %341 = arith.mulf %329, %340 : vector<8x128xf32>
    %342 = arith.addf %338, %341 : vector<8x128xf32>
    %343 = math.tanh %342 : vector<8x128xf32>
    %cst_126 = arith.constant 1.000000e+00 : f32
    %344 = vector.broadcast %cst_126 : f32 to vector<8x128xf32>
    %345 = arith.subf %344, %337 : vector<8x128xf32>
    %346 = arith.mulf %345, %343 : vector<8x128xf32>
    %347 = arith.mulf %337, %316 : vector<8x128xf32>
    %348 = arith.addf %346, %347 : vector<8x128xf32>
    %c8_127 = arith.constant 8 : index
    %c0_128 = arith.constant 0 : index
    %349 = vector.load %arg17[%c8_127, %c0_128] : memref<64x128xf32, #tpu.memory_space<vmem>>, vector<8x128xf32>
    tpu.vector_store %arg17[%c8_127, %c0_128], %348 {strides = array<i32>} : memref<64x128xf32, #tpu.memory_space<vmem>>, vector<8x128xf32>,
    %c16_129 = arith.constant 16 : index
    %c0_130 = arith.constant 0 : index
    %350 = vector.load %arg15[%c16_129, %c0_130] : memref<64x384xf32, #tpu.memory_space<vmem>>, vector<8x384xf32>
    %c40_131 = arith.constant 40 : index
    %c0_132 = arith.constant 0 : index
    %351 = vector.load %arg16[%c40_131, %c0_132] : memref<64x384xf32, #tpu.memory_space<vmem>>, vector<8x384xf32>
    %352 = arith.addf %350, %351 : vector<8x384xf32>
    %cst_133 = arith.constant dense<0.000000e+00> : vector<8x384xf32>
    %353 = tpu.matmul %348, %281, %cst_133 {dimension_numbers = #tpu.dot_dimension_numbers<[1], [0], [0], [1], [0, 0, 1, 1], [], []>} : vector<8x128xf32>, vector<128x384xf32>, vector<8x384xf32> -> vector<8x384xf32>
    %354 = vector.extract_strided_slice %352 {offsets = [0, 0], sizes = [8, 128], strides = [1, 1]} : vector<8x384xf32> to vector<8x128xf32>
    %355 = vector.extract_strided_slice %353 {offsets = [0, 0], sizes = [8, 128], strides = [1, 1]} : vector<8x384xf32> to vector<8x128xf32>
    %356 = arith.addf %354, %355 : vector<8x128xf32>
    %357 = arith.negf %356 : vector<8x128xf32>
    %358 = math.exp %357 : vector<8x128xf32>
    %cst_134 = arith.constant 1.000000e+00 : f32
    %359 = vector.broadcast %cst_134 : f32 to vector<8x128xf32>
    %360 = arith.addf %359, %358 : vector<8x128xf32>
    %361 = arith.divf %359, %360 : vector<8x128xf32>
    %362 = vector.extract_strided_slice %352 {offsets = [0, 128], sizes = [8, 128], strides = [1, 1]} : vector<8x384xf32> to vector<8x128xf32>
    %363 = vector.extract_strided_slice %353 {offsets = [0, 128], sizes = [8, 128], strides = [1, 1]} : vector<8x384xf32> to vector<8x128xf32>
    %364 = arith.addf %362, %363 : vector<8x128xf32>
    %365 = arith.negf %364 : vector<8x128xf32>
    %366 = math.exp %365 : vector<8x128xf32>
    %cst_135 = arith.constant 1.000000e+00 : f32
    %367 = vector.broadcast %cst_135 : f32 to vector<8x128xf32>
    %368 = arith.addf %367, %366 : vector<8x128xf32>
    %369 = arith.divf %367, %368 : vector<8x128xf32>
    %370 = vector.extract_strided_slice %352 {offsets = [0, 256], sizes = [8, 128], strides = [1, 1]} : vector<8x384xf32> to vector<8x128xf32>
    %371 = vector.extract_strided_slice %353 {offsets = [0, 256], sizes = [8, 128], strides = [1, 1]} : vector<8x384xf32> to vector<8x128xf32>
    %372 = arith.addf %371, %284 : vector<8x128xf32>
    %373 = arith.mulf %361, %372 : vector<8x128xf32>
    %374 = arith.addf %370, %373 : vector<8x128xf32>
    %375 = math.tanh %374 : vector<8x128xf32>
    %cst_136 = arith.constant 1.000000e+00 : f32
    %376 = vector.broadcast %cst_136 : f32 to vector<8x128xf32>
    %377 = arith.subf %376, %369 : vector<8x128xf32>
    %378 = arith.mulf %377, %375 : vector<8x128xf32>
    %379 = arith.mulf %369, %348 : vector<8x128xf32>
    %380 = arith.addf %378, %379 : vector<8x128xf32>
    %c16_137 = arith.constant 16 : index
    %c0_138 = arith.constant 0 : index
    %381 = vector.load %arg17[%c16_137, %c0_138] : memref<64x128xf32, #tpu.memory_space<vmem>>, vector<8x128xf32>
    tpu.vector_store %arg17[%c16_137, %c0_138], %380 {strides = array<i32>} : memref<64x128xf32, #tpu.memory_space<vmem>>, vector<8x128xf32>,
    %c24_139 = arith.constant 24 : index
    %c0_140 = arith.constant 0 : index
    %382 = vector.load %arg15[%c24_139, %c0_140] : memref<64x384xf32, #tpu.memory_space<vmem>>, vector<8x384xf32>
    %c32_141 = arith.constant 32 : index
    %c0_142 = arith.constant 0 : index
    %383 = vector.load %arg16[%c32_141, %c0_142] : memref<64x384xf32, #tpu.memory_space<vmem>>, vector<8x384xf32>
    %384 = arith.addf %382, %383 : vector<8x384xf32>
    %cst_143 = arith.constant dense<0.000000e+00> : vector<8x384xf32>
    %385 = tpu.matmul %380, %281, %cst_143 {dimension_numbers = #tpu.dot_dimension_numbers<[1], [0], [0], [1], [0, 0, 1, 1], [], []>} : vector<8x128xf32>, vector<128x384xf32>, vector<8x384xf32> -> vector<8x384xf32>
    %386 = vector.extract_strided_slice %384 {offsets = [0, 0], sizes = [8, 128], strides = [1, 1]} : vector<8x384xf32> to vector<8x128xf32>
    %387 = vector.extract_strided_slice %385 {offsets = [0, 0], sizes = [8, 128], strides = [1, 1]} : vector<8x384xf32> to vector<8x128xf32>
    %388 = arith.addf %386, %387 : vector<8x128xf32>
    %389 = arith.negf %388 : vector<8x128xf32>
    %390 = math.exp %389 : vector<8x128xf32>
    %cst_144 = arith.constant 1.000000e+00 : f32
    %391 = vector.broadcast %cst_144 : f32 to vector<8x128xf32>
    %392 = arith.addf %391, %390 : vector<8x128xf32>
    %393 = arith.divf %391, %392 : vector<8x128xf32>
    %394 = vector.extract_strided_slice %384 {offsets = [0, 128], sizes = [8, 128], strides = [1, 1]} : vector<8x384xf32> to vector<8x128xf32>
    %395 = vector.extract_strided_slice %385 {offsets = [0, 128], sizes = [8, 128], strides = [1, 1]} : vector<8x384xf32> to vector<8x128xf32>
    %396 = arith.addf %394, %395 : vector<8x128xf32>
    %397 = arith.negf %396 : vector<8x128xf32>
    %398 = math.exp %397 : vector<8x128xf32>
    %cst_145 = arith.constant 1.000000e+00 : f32
    %399 = vector.broadcast %cst_145 : f32 to vector<8x128xf32>
    %400 = arith.addf %399, %398 : vector<8x128xf32>
    %401 = arith.divf %399, %400 : vector<8x128xf32>
    %402 = vector.extract_strided_slice %384 {offsets = [0, 256], sizes = [8, 128], strides = [1, 1]} : vector<8x384xf32> to vector<8x128xf32>
    %403 = vector.extract_strided_slice %385 {offsets = [0, 256], sizes = [8, 128], strides = [1, 1]} : vector<8x384xf32> to vector<8x128xf32>
    %404 = arith.addf %403, %284 : vector<8x128xf32>
    %405 = arith.mulf %393, %404 : vector<8x128xf32>
    %406 = arith.addf %402, %405 : vector<8x128xf32>
    %407 = math.tanh %406 : vector<8x128xf32>
    %cst_146 = arith.constant 1.000000e+00 : f32
    %408 = vector.broadcast %cst_146 : f32 to vector<8x128xf32>
    %409 = arith.subf %408, %401 : vector<8x128xf32>
    %410 = arith.mulf %409, %407 : vector<8x128xf32>
    %411 = arith.mulf %401, %380 : vector<8x128xf32>
    %412 = arith.addf %410, %411 : vector<8x128xf32>
    %c24_147 = arith.constant 24 : index
    %c0_148 = arith.constant 0 : index
    %413 = vector.load %arg17[%c24_147, %c0_148] : memref<64x128xf32, #tpu.memory_space<vmem>>, vector<8x128xf32>
    tpu.vector_store %arg17[%c24_147, %c0_148], %412 {strides = array<i32>} : memref<64x128xf32, #tpu.memory_space<vmem>>, vector<8x128xf32>,
    %c32_149 = arith.constant 32 : index
    %c0_150 = arith.constant 0 : index
    %414 = vector.load %arg15[%c32_149, %c0_150] : memref<64x384xf32, #tpu.memory_space<vmem>>, vector<8x384xf32>
    %c24_151 = arith.constant 24 : index
    %c0_152 = arith.constant 0 : index
    %415 = vector.load %arg16[%c24_151, %c0_152] : memref<64x384xf32, #tpu.memory_space<vmem>>, vector<8x384xf32>
    %416 = arith.addf %414, %415 : vector<8x384xf32>
    %cst_153 = arith.constant dense<0.000000e+00> : vector<8x384xf32>
    %417 = tpu.matmul %412, %281, %cst_153 {dimension_numbers = #tpu.dot_dimension_numbers<[1], [0], [0], [1], [0, 0, 1, 1], [], []>} : vector<8x128xf32>, vector<128x384xf32>, vector<8x384xf32> -> vector<8x384xf32>
    %418 = vector.extract_strided_slice %416 {offsets = [0, 0], sizes = [8, 128], strides = [1, 1]} : vector<8x384xf32> to vector<8x128xf32>
    %419 = vector.extract_strided_slice %417 {offsets = [0, 0], sizes = [8, 128], strides = [1, 1]} : vector<8x384xf32> to vector<8x128xf32>
    %420 = arith.addf %418, %419 : vector<8x128xf32>
    %421 = arith.negf %420 : vector<8x128xf32>
    %422 = math.exp %421 : vector<8x128xf32>
    %cst_154 = arith.constant 1.000000e+00 : f32
    %423 = vector.broadcast %cst_154 : f32 to vector<8x128xf32>
    %424 = arith.addf %423, %422 : vector<8x128xf32>
    %425 = arith.divf %423, %424 : vector<8x128xf32>
    %426 = vector.extract_strided_slice %416 {offsets = [0, 128], sizes = [8, 128], strides = [1, 1]} : vector<8x384xf32> to vector<8x128xf32>
    %427 = vector.extract_strided_slice %417 {offsets = [0, 128], sizes = [8, 128], strides = [1, 1]} : vector<8x384xf32> to vector<8x128xf32>
    %428 = arith.addf %426, %427 : vector<8x128xf32>
    %429 = arith.negf %428 : vector<8x128xf32>
    %430 = math.exp %429 : vector<8x128xf32>
    %cst_155 = arith.constant 1.000000e+00 : f32
    %431 = vector.broadcast %cst_155 : f32 to vector<8x128xf32>
    %432 = arith.addf %431, %430 : vector<8x128xf32>
    %433 = arith.divf %431, %432 : vector<8x128xf32>
    %434 = vector.extract_strided_slice %416 {offsets = [0, 256], sizes = [8, 128], strides = [1, 1]} : vector<8x384xf32> to vector<8x128xf32>
    %435 = vector.extract_strided_slice %417 {offsets = [0, 256], sizes = [8, 128], strides = [1, 1]} : vector<8x384xf32> to vector<8x128xf32>
    %436 = arith.addf %435, %284 : vector<8x128xf32>
    %437 = arith.mulf %425, %436 : vector<8x128xf32>
    %438 = arith.addf %434, %437 : vector<8x128xf32>
    %439 = math.tanh %438 : vector<8x128xf32>
    %cst_156 = arith.constant 1.000000e+00 : f32
    %440 = vector.broadcast %cst_156 : f32 to vector<8x128xf32>
    %441 = arith.subf %440, %433 : vector<8x128xf32>
    %442 = arith.mulf %441, %439 : vector<8x128xf32>
    %443 = arith.mulf %433, %412 : vector<8x128xf32>
    %444 = arith.addf %442, %443 : vector<8x128xf32>
    %c32_157 = arith.constant 32 : index
    %c0_158 = arith.constant 0 : index
    %445 = vector.load %arg17[%c32_157, %c0_158] : memref<64x128xf32, #tpu.memory_space<vmem>>, vector<8x128xf32>
    tpu.vector_store %arg17[%c32_157, %c0_158], %444 {strides = array<i32>} : memref<64x128xf32, #tpu.memory_space<vmem>>, vector<8x128xf32>,
    %c40_159 = arith.constant 40 : index
    %c0_160 = arith.constant 0 : index
    %446 = vector.load %arg15[%c40_159, %c0_160] : memref<64x384xf32, #tpu.memory_space<vmem>>, vector<8x384xf32>
    %c16_161 = arith.constant 16 : index
    %c0_162 = arith.constant 0 : index
    %447 = vector.load %arg16[%c16_161, %c0_162] : memref<64x384xf32, #tpu.memory_space<vmem>>, vector<8x384xf32>
    %448 = arith.addf %446, %447 : vector<8x384xf32>
    %cst_163 = arith.constant dense<0.000000e+00> : vector<8x384xf32>
    %449 = tpu.matmul %444, %281, %cst_163 {dimension_numbers = #tpu.dot_dimension_numbers<[1], [0], [0], [1], [0, 0, 1, 1], [], []>} : vector<8x128xf32>, vector<128x384xf32>, vector<8x384xf32> -> vector<8x384xf32>
    %450 = vector.extract_strided_slice %448 {offsets = [0, 0], sizes = [8, 128], strides = [1, 1]} : vector<8x384xf32> to vector<8x128xf32>
    %451 = vector.extract_strided_slice %449 {offsets = [0, 0], sizes = [8, 128], strides = [1, 1]} : vector<8x384xf32> to vector<8x128xf32>
    %452 = arith.addf %450, %451 : vector<8x128xf32>
    %453 = arith.negf %452 : vector<8x128xf32>
    %454 = math.exp %453 : vector<8x128xf32>
    %cst_164 = arith.constant 1.000000e+00 : f32
    %455 = vector.broadcast %cst_164 : f32 to vector<8x128xf32>
    %456 = arith.addf %455, %454 : vector<8x128xf32>
    %457 = arith.divf %455, %456 : vector<8x128xf32>
    %458 = vector.extract_strided_slice %448 {offsets = [0, 128], sizes = [8, 128], strides = [1, 1]} : vector<8x384xf32> to vector<8x128xf32>
    %459 = vector.extract_strided_slice %449 {offsets = [0, 128], sizes = [8, 128], strides = [1, 1]} : vector<8x384xf32> to vector<8x128xf32>
    %460 = arith.addf %458, %459 : vector<8x128xf32>
    %461 = arith.negf %460 : vector<8x128xf32>
    %462 = math.exp %461 : vector<8x128xf32>
    %cst_165 = arith.constant 1.000000e+00 : f32
    %463 = vector.broadcast %cst_165 : f32 to vector<8x128xf32>
    %464 = arith.addf %463, %462 : vector<8x128xf32>
    %465 = arith.divf %463, %464 : vector<8x128xf32>
    %466 = vector.extract_strided_slice %448 {offsets = [0, 256], sizes = [8, 128], strides = [1, 1]} : vector<8x384xf32> to vector<8x128xf32>
    %467 = vector.extract_strided_slice %449 {offsets = [0, 256], sizes = [8, 128], strides = [1, 1]} : vector<8x384xf32> to vector<8x128xf32>
    %468 = arith.addf %467, %284 : vector<8x128xf32>
    %469 = arith.mulf %457, %468 : vector<8x128xf32>
    %470 = arith.addf %466, %469 : vector<8x128xf32>
    %471 = math.tanh %470 : vector<8x128xf32>
    %cst_166 = arith.constant 1.000000e+00 : f32
    %472 = vector.broadcast %cst_166 : f32 to vector<8x128xf32>
    %473 = arith.subf %472, %465 : vector<8x128xf32>
    %474 = arith.mulf %473, %471 : vector<8x128xf32>
    %475 = arith.mulf %465, %444 : vector<8x128xf32>
    %476 = arith.addf %474, %475 : vector<8x128xf32>
    %c40_167 = arith.constant 40 : index
    %c0_168 = arith.constant 0 : index
    %477 = vector.load %arg17[%c40_167, %c0_168] : memref<64x128xf32, #tpu.memory_space<vmem>>, vector<8x128xf32>
    tpu.vector_store %arg17[%c40_167, %c0_168], %476 {strides = array<i32>} : memref<64x128xf32, #tpu.memory_space<vmem>>, vector<8x128xf32>,
    %c48_169 = arith.constant 48 : index
    %c0_170 = arith.constant 0 : index
    %478 = vector.load %arg15[%c48_169, %c0_170] : memref<64x384xf32, #tpu.memory_space<vmem>>, vector<8x384xf32>
    %c8_171 = arith.constant 8 : index
    %c0_172 = arith.constant 0 : index
    %479 = vector.load %arg16[%c8_171, %c0_172] : memref<64x384xf32, #tpu.memory_space<vmem>>, vector<8x384xf32>
    %480 = arith.addf %478, %479 : vector<8x384xf32>
    %cst_173 = arith.constant dense<0.000000e+00> : vector<8x384xf32>
    %481 = tpu.matmul %476, %281, %cst_173 {dimension_numbers = #tpu.dot_dimension_numbers<[1], [0], [0], [1], [0, 0, 1, 1], [], []>} : vector<8x128xf32>, vector<128x384xf32>, vector<8x384xf32> -> vector<8x384xf32>
    %482 = vector.extract_strided_slice %480 {offsets = [0, 0], sizes = [8, 128], strides = [1, 1]} : vector<8x384xf32> to vector<8x128xf32>
    %483 = vector.extract_strided_slice %481 {offsets = [0, 0], sizes = [8, 128], strides = [1, 1]} : vector<8x384xf32> to vector<8x128xf32>
    %484 = arith.addf %482, %483 : vector<8x128xf32>
    %485 = arith.negf %484 : vector<8x128xf32>
    %486 = math.exp %485 : vector<8x128xf32>
    %cst_174 = arith.constant 1.000000e+00 : f32
    %487 = vector.broadcast %cst_174 : f32 to vector<8x128xf32>
    %488 = arith.addf %487, %486 : vector<8x128xf32>
    %489 = arith.divf %487, %488 : vector<8x128xf32>
    %490 = vector.extract_strided_slice %480 {offsets = [0, 128], sizes = [8, 128], strides = [1, 1]} : vector<8x384xf32> to vector<8x128xf32>
    %491 = vector.extract_strided_slice %481 {offsets = [0, 128], sizes = [8, 128], strides = [1, 1]} : vector<8x384xf32> to vector<8x128xf32>
    %492 = arith.addf %490, %491 : vector<8x128xf32>
    %493 = arith.negf %492 : vector<8x128xf32>
    %494 = math.exp %493 : vector<8x128xf32>
    %cst_175 = arith.constant 1.000000e+00 : f32
    %495 = vector.broadcast %cst_175 : f32 to vector<8x128xf32>
    %496 = arith.addf %495, %494 : vector<8x128xf32>
    %497 = arith.divf %495, %496 : vector<8x128xf32>
    %498 = vector.extract_strided_slice %480 {offsets = [0, 256], sizes = [8, 128], strides = [1, 1]} : vector<8x384xf32> to vector<8x128xf32>
    %499 = vector.extract_strided_slice %481 {offsets = [0, 256], sizes = [8, 128], strides = [1, 1]} : vector<8x384xf32> to vector<8x128xf32>
    %500 = arith.addf %499, %284 : vector<8x128xf32>
    %501 = arith.mulf %489, %500 : vector<8x128xf32>
    %502 = arith.addf %498, %501 : vector<8x128xf32>
    %503 = math.tanh %502 : vector<8x128xf32>
    %cst_176 = arith.constant 1.000000e+00 : f32
    %504 = vector.broadcast %cst_176 : f32 to vector<8x128xf32>
    %505 = arith.subf %504, %497 : vector<8x128xf32>
    %506 = arith.mulf %505, %503 : vector<8x128xf32>
    %507 = arith.mulf %497, %476 : vector<8x128xf32>
    %508 = arith.addf %506, %507 : vector<8x128xf32>
    %c48_177 = arith.constant 48 : index
    %c0_178 = arith.constant 0 : index
    %509 = vector.load %arg17[%c48_177, %c0_178] : memref<64x128xf32, #tpu.memory_space<vmem>>, vector<8x128xf32>
    tpu.vector_store %arg17[%c48_177, %c0_178], %508 {strides = array<i32>} : memref<64x128xf32, #tpu.memory_space<vmem>>, vector<8x128xf32>,
    %c56_179 = arith.constant 56 : index
    %c0_180 = arith.constant 0 : index
    %510 = vector.load %arg15[%c56_179, %c0_180] : memref<64x384xf32, #tpu.memory_space<vmem>>, vector<8x384xf32>
    %c0_181 = arith.constant 0 : index
    %c0_182 = arith.constant 0 : index
    %511 = vector.load %arg16[%c0_181, %c0_182] : memref<64x384xf32, #tpu.memory_space<vmem>>, vector<8x384xf32>
    %512 = arith.addf %510, %511 : vector<8x384xf32>
    %cst_183 = arith.constant dense<0.000000e+00> : vector<8x384xf32>
    %513 = tpu.matmul %508, %281, %cst_183 {dimension_numbers = #tpu.dot_dimension_numbers<[1], [0], [0], [1], [0, 0, 1, 1], [], []>} : vector<8x128xf32>, vector<128x384xf32>, vector<8x384xf32> -> vector<8x384xf32>
    %514 = vector.extract_strided_slice %512 {offsets = [0, 0], sizes = [8, 128], strides = [1, 1]} : vector<8x384xf32> to vector<8x128xf32>
    %515 = vector.extract_strided_slice %513 {offsets = [0, 0], sizes = [8, 128], strides = [1, 1]} : vector<8x384xf32> to vector<8x128xf32>
    %516 = arith.addf %514, %515 : vector<8x128xf32>
    %517 = arith.negf %516 : vector<8x128xf32>
    %518 = math.exp %517 : vector<8x128xf32>
    %cst_184 = arith.constant 1.000000e+00 : f32
    %519 = vector.broadcast %cst_184 : f32 to vector<8x128xf32>
    %520 = arith.addf %519, %518 : vector<8x128xf32>
    %521 = arith.divf %519, %520 : vector<8x128xf32>
    %522 = vector.extract_strided_slice %512 {offsets = [0, 128], sizes = [8, 128], strides = [1, 1]} : vector<8x384xf32> to vector<8x128xf32>
    %523 = vector.extract_strided_slice %513 {offsets = [0, 128], sizes = [8, 128], strides = [1, 1]} : vector<8x384xf32> to vector<8x128xf32>
    %524 = arith.addf %522, %523 : vector<8x128xf32>
    %525 = arith.negf %524 : vector<8x128xf32>
    %526 = math.exp %525 : vector<8x128xf32>
    %cst_185 = arith.constant 1.000000e+00 : f32
    %527 = vector.broadcast %cst_185 : f32 to vector<8x128xf32>
    %528 = arith.addf %527, %526 : vector<8x128xf32>
    %529 = arith.divf %527, %528 : vector<8x128xf32>
    %530 = vector.extract_strided_slice %512 {offsets = [0, 256], sizes = [8, 128], strides = [1, 1]} : vector<8x384xf32> to vector<8x128xf32>
    %531 = vector.extract_strided_slice %513 {offsets = [0, 256], sizes = [8, 128], strides = [1, 1]} : vector<8x384xf32> to vector<8x128xf32>
    %532 = arith.addf %531, %284 : vector<8x128xf32>
    %533 = arith.mulf %521, %532 : vector<8x128xf32>
    %534 = arith.addf %530, %533 : vector<8x128xf32>
    %535 = math.tanh %534 : vector<8x128xf32>
    %cst_186 = arith.constant 1.000000e+00 : f32
    %536 = vector.broadcast %cst_186 : f32 to vector<8x128xf32>
    %537 = arith.subf %536, %529 : vector<8x128xf32>
    %538 = arith.mulf %537, %535 : vector<8x128xf32>
    %539 = arith.mulf %529, %508 : vector<8x128xf32>
    %540 = arith.addf %538, %539 : vector<8x128xf32>
    %c56_187 = arith.constant 56 : index
    %c0_188 = arith.constant 0 : index
    %541 = vector.load %arg17[%c56_187, %c0_188] : memref<64x128xf32, #tpu.memory_space<vmem>>, vector<8x128xf32>
    tpu.vector_store %arg17[%c56_187, %c0_188], %540 {strides = array<i32>} : memref<64x128xf32, #tpu.memory_space<vmem>>, vector<8x128xf32>,
    %c56_189 = arith.constant 56 : index
    %c0_190 = arith.constant 0 : index
    %542 = vector.load %arg17[%c56_189, %c0_190] : memref<64x128xf32, #tpu.memory_space<vmem>>, vector<8x128xf32>
    %c0_191 = arith.constant 0 : index
    %c0_192 = arith.constant 0 : index
    %543 = vector.load %arg11[%c0_191, %c0_192] : memref<128x128xf32, #tpu.memory_space<vmem>>, vector<128x128xf32>
    %cst_193 = arith.constant dense<0.000000e+00> : vector<8x128xf32>
    %544 = tpu.matmul %542, %543, %cst_193 {dimension_numbers = #tpu.dot_dimension_numbers<[1], [0], [0], [1], [0, 0, 1, 1], [], []>} : vector<8x128xf32>, vector<128x128xf32>, vector<8x128xf32> -> vector<8x128xf32>
    %c0_194 = arith.constant 0 : index
    %c0_195 = arith.constant 0 : index
    %545 = vector.load %arg17[%c0_194, %c0_195] : memref<64x128xf32, #tpu.memory_space<vmem>>, vector<8x128xf32>
    %c0_196 = arith.constant 0 : index
    %c0_197 = arith.constant 0 : index
    %546 = vector.load %arg12[%c0_196, %c0_197] : memref<128x128xf32, #tpu.memory_space<vmem>>, vector<128x128xf32>
    %cst_198 = arith.constant dense<0.000000e+00> : vector<8x128xf32>
    %547 = tpu.matmul %545, %546, %cst_198 {dimension_numbers = #tpu.dot_dimension_numbers<[1], [0], [0], [1], [0, 0, 1, 1], [], []>} : vector<8x128xf32>, vector<128x128xf32>, vector<8x128xf32> -> vector<8x128xf32>
    %548 = arith.addf %544, %547 : vector<8x128xf32>
    %c0_199 = arith.constant 0 : index
    %c0_200 = arith.constant 0 : index
    %549 = vector.load %arg13[%c0_199, %c0_200] : memref<1x128xf32, #tpu.memory_space<vmem>>, vector<1x128xf32>
    %550 = vector.broadcast %549 : vector<1x128xf32> to vector<8x128xf32>
    %551 = arith.addf %548, %550 : vector<8x128xf32>
    %c0_201 = arith.constant 0 : index
    %c0_202 = arith.constant 0 : index
    %552 = vector.load %arg14[%c0_201, %c0_202] : memref<8x128xf32, #tpu.memory_space<vmem>>, vector<8x128xf32>
    tpu.vector_store %arg14[%c0_201, %c0_202], %551 {strides = array<i32>} : memref<8x128xf32, #tpu.memory_space<vmem>>, vector<8x128xf32>,
    return
  }
}

</mosaic_0001>

<llo_original>
// kernel: gru_model_forward.1
$region0: #{gru_model_forward.1}
  #allocation0 [shape = 'u32[]', space=smem, size = 0x4, offset = 0x4, fixed_abs, tag = 'smem constant byte address 0x4 - core index']
  #allocation1 [shape = 'u32[72,128]{1,0:T(1,128)}', space=vmem, size = 0x9000, scoped, tag = 'internal scratch']
  #allocation2 [shape = 'f32[64,384]{1,0:T(8,128)}', space=vmem, size = 0x18000, scoped, tag = 'scratch operand']
  #allocation3 [shape = 'f32[64,384]{1,0:T(8,128)}', space=vmem, size = 0x18000, scoped, tag = 'scratch operand']
  #allocation4 [shape = 'f32[64,128]{1,0:T(8,128)}', space=vmem, size = 0x8000, scoped, tag = 'scratch operand']
  %s0 = inlined_call_operand.vmem [shape: f32[64,16], index: 0, kind: input, shape index: {}]
  %s1 = inlined_call_operand.vmem [shape: f32[16,384], index: 1, kind: input, shape index: {}]
  %s2 = inlined_call_operand.vmem [shape: f32[16,384], index: 2, kind: input, shape index: {}]
  %s3 = inlined_call_operand.vmem [shape: f32[128,384], index: 3, kind: input, shape index: {}]
  %s4 = inlined_call_operand.vmem [shape: f32[1,384], index: 4, kind: input, shape index: {}]
  %s5 = inlined_call_operand.vmem [shape: f32[1,128], index: 5, kind: input, shape index: {}]
  %s6 = inlined_call_operand.vmem [shape: f32[128,384], index: 6, kind: input, shape index: {}]
  %s7 = inlined_call_operand.vmem [shape: f32[128,384], index: 7, kind: input, shape index: {}]
  %s8 = inlined_call_operand.vmem [shape: f32[128,384], index: 8, kind: input, shape index: {}]
  %s9 = inlined_call_operand.vmem [shape: f32[1,384], index: 9, kind: input, shape index: {}]
  %s10 = inlined_call_operand.vmem [shape: f32[1,128], index: 10, kind: input, shape index: {}]
  %s11 = inlined_call_operand.vmem [shape: f32[128,128], index: 11, kind: input, shape index: {}]
  %s12 = inlined_call_operand.vmem [shape: f32[128,128], index: 12, kind: input, shape index: {}]
  %s13 = inlined_call_operand.vmem [shape: f32[1,128], index: 13, kind: input, shape index: {}]
  %s14 = inlined_call_operand.vmem [shape: f32[8,128], index: 14, kind: output, shape index: {}]
  %s15 = sld [smem:[#allocation0]]
  $region66: #{gru_model_forward.1} parent=0
    _
  %s17 = ssub.s32 1, %s15
  %s18 = scalar_select 0, %s17, %s15
  // Predicated region
  $region2: #{gru_model_forward.1} parent=0 // pred_check
    _
  $region3: #{gru_model_forward.1} parent=0 // pred_check_branch
    %20 = sbr.rel (0) target = $region5
  $region4: #{gru_model_forward.1} parent=0 // pred_region
    _
  $region5: #{gru_model_forward.1} parent=0 // pred_fallthru
    _
  // Predicated region
  $region6: #{gru_model_forward.1} parent=0 // pred_check
    _
  $region7: #{gru_model_forward.1} parent=0 // pred_check_branch
    %22 = sbr.rel (0) target = $region9
  $region8: #{gru_model_forward.1} parent=0 // pred_region
    _
  $region9: #{gru_model_forward.1} parent=0 // pred_fallthru
    _
  // Predicated region
  $region10: #{gru_model_forward.1} parent=0 // pred_check
    _
  $region11: #{gru_model_forward.1} parent=0 // pred_check_branch
    %24 = sbr.rel (0) target = $region13
  $region12: #{gru_model_forward.1} parent=0 // pred_region
    _
  $region13: #{gru_model_forward.1} parent=0 // pred_fallthru
    _
  // Predicated region
  $region14: #{gru_model_forward.1} parent=0 // pred_check
    _
  $region15: #{gru_model_forward.1} parent=0 // pred_check_branch
    %26 = sbr.rel (0) target = $region17
  $region16: #{gru_model_forward.1} parent=0 // pred_region
    _
  $region17: #{gru_model_forward.1} parent=0 // pred_fallthru
    _
  // Predicated region
  $region18: #{gru_model_forward.1} parent=0 // pred_check
    _
  $region19: #{gru_model_forward.1} parent=0 // pred_check_branch
    %28 = sbr.rel (0) target = $region21
  $region20: #{gru_model_forward.1} parent=0 // pred_region
    _
  $region21: #{gru_model_forward.1} parent=0 // pred_fallthru
    _
  // Predicated region
  $region22: #{gru_model_forward.1} parent=0 // pred_check
    _
  $region23: #{gru_model_forward.1} parent=0 // pred_check_branch
    %30 = sbr.rel (0) target = $region25
  $region24: #{gru_model_forward.1} parent=0 // pred_region
    _
  $region25: #{gru_model_forward.1} parent=0 // pred_fallthru
    _
  // Predicated region
  $region26: #{gru_model_forward.1} parent=0 // pred_check
    _
  $region27: #{gru_model_forward.1} parent=0 // pred_check_branch
    %32 = sbr.rel (0) target = $region29
  $region28: #{gru_model_forward.1} parent=0 // pred_region
    _
  $region29: #{gru_model_forward.1} parent=0 // pred_fallthru
    _
  // Predicated region
  $region30: #{gru_model_forward.1} parent=0 // pred_check
    _
  $region31: #{gru_model_forward.1} parent=0 // pred_check_branch
    %34 = sbr.rel (0) target = $region33
  $region32: #{gru_model_forward.1} parent=0 // pred_region
    _
  $region33: #{gru_model_forward.1} parent=0 // pred_fallthru
    _
  // Predicated region
  $region34: #{gru_model_forward.1} parent=0 // pred_check
    _
  $region35: #{gru_model_forward.1} parent=0 // pred_check_branch
    %36 = sbr.rel (0) target = $region37
  $region36: #{gru_model_forward.1} parent=0 // pred_region
    _
  $region37: #{gru_model_forward.1} parent=0 // pred_fallthru
    _
  // Predicated region
  $region38: #{gru_model_forward.1} parent=0 // pred_check
    _
  $region39: #{gru_model_forward.1} parent=0 // pred_check_branch
    %38 = sbr.rel (0) target = $region41
  $region40: #{gru_model_forward.1} parent=0 // pred_region
    _
  $region41: #{gru_model_forward.1} parent=0 // pred_fallthru
    _
  // Predicated region
  $region42: #{gru_model_forward.1} parent=0 // pred_check
    _
  $region43: #{gru_model_forward.1} parent=0 // pred_check_branch
    %40 = sbr.rel (0) target = $region45
  $region44: #{gru_model_forward.1} parent=0 // pred_region
    _
  $region45: #{gru_model_forward.1} parent=0 // pred_fallthru
    _
  // Predicated region
  $region46: #{gru_model_forward.1} parent=0 // pred_check
    _
  $region47: #{gru_model_forward.1} parent=0 // pred_check_branch
    %42 = sbr.rel (0) target = $region49
  $region48: #{gru_model_forward.1} parent=0 // pred_region
    _
  $region49: #{gru_model_forward.1} parent=0 // pred_fallthru
    _
  // Predicated region
  $region50: #{gru_model_forward.1} parent=0 // pred_check
    _
  $region51: #{gru_model_forward.1} parent=0 // pred_check_branch
    %44 = sbr.rel (0) target = $region53
  $region52: #{gru_model_forward.1} parent=0 // pred_region
    _
  $region53: #{gru_model_forward.1} parent=0 // pred_fallthru
    _
  // Predicated region
  $region54: #{gru_model_forward.1} parent=0 // pred_check
    _
  $region55: #{gru_model_forward.1} parent=0 // pred_check_branch
    %46 = sbr.rel (0) target = $region57
  $region56: #{gru_model_forward.1} parent=0 // pred_region
    _
  $region57: #{gru_model_forward.1} parent=0 // pred_fallthru
    _
  %v47 = vld [vmem:[%s0] sm:$0xff]
  %v48 = vld [vmem:[%s0 + $0x8] sm:$0xff]
  %v49 = vld [vmem:[%s0 + $0x10] sm:$0xff]
  %v50 = vld [vmem:[%s0 + $0x18] sm:$0xff]
  %v51 = vld [vmem:[%s0 + $0x20] sm:$0xff]
  %v52 = vld [vmem:[%s0 + $0x28] sm:$0xff]
  %v53 = vld [vmem:[%s0 + $0x30] sm:$0xff]
  %v54 = vld [vmem:[%s0 + $0x38] sm:$0xff]
  %v55 = vld [vmem:[%s1] sm:$0xff]
  %v56 = vld [vmem:[%s1 + $0x8] sm:$0xff]
  %v57 = vld [vmem:[%s1 + $0x10] sm:$0xff]
  %v58 = vld [vmem:[%s1 + $0x18] sm:$0xff]
  %v59 = vld [vmem:[%s1 + $0x20] sm:$0xff]
  %v60 = vld [vmem:[%s1 + $0x28] sm:$0xff]
  %v61 = vld [vmem:[%s4] sm:$0x7]
  %v63 = vperm.slane %v61, 0
  %v64 = vperm.slane %v61, 1
  %v65 = vperm.slane %v61, 2
  %vm69 = vcmask 130048
  %v71 = vsel %vm69, %v47, 0
  %v74 = vsel %vm69, %v48, 0
  %v77 = vsel %vm69, %v49, 0
  %v80 = vsel %vm69, %v50, 0
  %v83 = vsel %vm69, %v51, 0
  %v86 = vsel %vm69, %v52, 0
  %v89 = vsel %vm69, %v53, 0
  %v92 = vsel %vm69, %v54, 0
  %94 = vmatpush.msra.mxu0 0.0
  %95 = vmatpush.msra.mxu0 0.0
  %96 = vmatpush.msra.mxu0 0.0
  %97 = vmatpush.msra.mxu0 0.0
  %98 = vmatpush.msra.mxu0 0.0
  %99 = vmatpush.msra.mxu0 0.0
  %100 = vmatpush.msra.mxu0 0.0
  %101 = vmatpush.msra.mxu0 0.0
  %102 = vmatpush.msra.mxu0 0.0
  %103 = vmatpush.msra.mxu0 0.0
  %104 = vmatpush.msra.mxu0 0.0
  %105 = vmatpush.msra.mxu0 0.0
  %106 = vmatpush.msra.mxu0 0.0
  %107 = vmatpush.msra.mxu0 0.0
  %108 = vmatpush.msra.mxu0 %v58
  %109 = vmatpush.msra.mxu0 %v55
  %110 = vmatmul.f32.gmra.mxu0 %v71
  %v111 = vpop.f32.mrf.mxu0
  %v112 = vadd.f32 %v63, %v111
  %113 = vmatmul.f32.gmra.mxu0 %v74
  %v114 = vpop.f32.mrf.mxu0
  %v115 = vadd.f32 %v63, %v114
  %116 = vmatmul.f32.gmra.mxu0 %v77
  %v117 = vpop.f32.mrf.mxu0
  %v118 = vadd.f32 %v63, %v117
  %119 = vmatmul.f32.gmra.mxu0 %v80
  %v120 = vpop.f32.mrf.mxu0
  %v121 = vadd.f32 %v63, %v120
  %122 = vmatmul.f32.gmra.mxu0 %v83
  %v123 = vpop.f32.mrf.mxu0
  %v124 = vadd.f32 %v63, %v123
  %125 = vmatmul.f32.gmra.mxu0 %v86
  %v126 = vpop.f32.mrf.mxu0
  %v127 = vadd.f32 %v63, %v126
  %128 = vmatmul.f32.gmra.mxu0 %v89
  %v129 = vpop.f32.mrf.mxu0
  %v130 = vadd.f32 %v63, %v129
  %131 = vmatmul.f32.gmra.mxu0 %v92
  %v132 = vpop.f32.mrf.mxu0
  %v133 = vadd.f32 %v63, %v132
  %134 = vdwg.mxu0
  %135 = vmatpush.msra.mxu0 0.0
  %136 = vmatpush.msra.mxu0 0.0
  %137 = vmatpush.msra.mxu0 0.0
  %138 = vmatpush.msra.mxu0 0.0
  %139 = vmatpush.msra.mxu0 0.0
  %140 = vmatpush.msra.mxu0 0.0
  %141 = vmatpush.msra.mxu0 0.0
  %142 = vmatpush.msra.mxu0 0.0
  %143 = vmatpush.msra.mxu0 0.0
  %144 = vmatpush.msra.mxu0 0.0
  %145 = vmatpush.msra.mxu0 0.0
  %146 = vmatpush.msra.mxu0 0.0
  %147 = vmatpush.msra.mxu0 0.0
  %148 = vmatpush.msra.mxu0 0.0
  %149 = vmatpush.msra.mxu0 %v59
  %150 = vmatpush.msra.mxu0 %v56
  %151 = vmatmul.f32.gmra.mxu0 %v71
  %v152 = vpop.f32.mrf.mxu0
  %v153 = vadd.f32 %v64, %v152
  %154 = vmatmul.f32.gmra.mxu0 %v74
  %v155 = vpop.f32.mrf.mxu0
  %v156 = vadd.f32 %v64, %v155
  %157 = vmatmul.f32.gmra.mxu0 %v77
  %v158 = vpop.f32.mrf.mxu0
  %v159 = vadd.f32 %v64, %v158
  %160 = vmatmul.f32.gmra.mxu0 %v80
  %v161 = vpop.f32.mrf.mxu0
  %v162 = vadd.f32 %v64, %v161
  %163 = vmatmul.f32.gmra.mxu0 %v83
  %v164 = vpop.f32.mrf.mxu0
  %v165 = vadd.f32 %v64, %v164
  %166 = vmatmul.f32.gmra.mxu0 %v86
  %v167 = vpop.f32.mrf.mxu0
  %v168 = vadd.f32 %v64, %v167
  %169 = vmatmul.f32.gmra.mxu0 %v89
  %v170 = vpop.f32.mrf.mxu0
  %v171 = vadd.f32 %v64, %v170
  %172 = vmatmul.f32.gmra.mxu0 %v92
  %v173 = vpop.f32.mrf.mxu0
  %v174 = vadd.f32 %v64, %v173
  %175 = vdwg.mxu0
  %176 = vmatpush.msra.mxu0 0.0
  %177 = vmatpush.msra.mxu0 0.0
  %178 = vmatpush.msra.mxu0 0.0
  %179 = vmatpush.msra.mxu0 0.0
  %180 = vmatpush.msra.mxu0 0.0
  %181 = vmatpush.msra.mxu0 0.0
  %182 = vmatpush.msra.mxu0 0.0
  %183 = vmatpush.msra.mxu0 0.0
  %184 = vmatpush.msra.mxu0 0.0
  %185 = vmatpush.msra.mxu0 0.0
  %186 = vmatpush.msra.mxu0 0.0
  %187 = vmatpush.msra.mxu0 0.0
  %188 = vmatpush.msra.mxu0 0.0
  %189 = vmatpush.msra.mxu0 0.0
  %190 = vmatpush.msra.mxu0 %v60
  %191 = vmatpush.msra.mxu0 %v57
  %192 = vmatmul.f32.gmra.mxu0 %v71
  %v193 = vpop.f32.mrf.mxu0
  %v194 = vadd.f32 %v65, %v193
  %195 = vmatmul.f32.gmra.mxu0 %v74
  %v196 = vpop.f32.mrf.mxu0
  %v197 = vadd.f32 %v65, %v196
  %198 = vmatmul.f32.gmra.mxu0 %v77
  %v199 = vpop.f32.mrf.mxu0
  %v200 = vadd.f32 %v65, %v199
  %201 = vmatmul.f32.gmra.mxu0 %v80
  %v202 = vpop.f32.mrf.mxu0
  %v203 = vadd.f32 %v65, %v202
  %204 = vmatmul.f32.gmra.mxu0 %v83
  %v205 = vpop.f32.mrf.mxu0
  %v206 = vadd.f32 %v65, %v205
  %207 = vmatmul.f32.gmra.mxu0 %v86
  %v208 = vpop.f32.mrf.mxu0
  %v209 = vadd.f32 %v65, %v208
  %210 = vmatmul.f32.gmra.mxu0 %v89
  %v211 = vpop.f32.mrf.mxu0
  %v212 = vadd.f32 %v65, %v211
  %213 = vmatmul.f32.gmra.mxu0 %v92
  %v214 = vpop.f32.mrf.mxu0
  %v215 = vadd.f32 %v65, %v214
  %216 = vdwg.mxu0
  %217 = vst [vmem:[#allocation2] sm:$0xff] %v112
  %218 = vst [vmem:[#allocation2 + $0x8] sm:$0xff] %v153
  %219 = vst [vmem:[#allocation2 + $0x10] sm:$0xff] %v194
  %220 = vst [vmem:[#allocation2 + $0x18] sm:$0xff] %v115
  %221 = vst [vmem:[#allocation2 + $0x20] sm:$0xff] %v156
  %222 = vst [vmem:[#allocation2 + $0x28] sm:$0xff] %v197
  %223 = vst [vmem:[#allocation2 + $0x30] sm:$0xff] %v118
  %224 = vst [vmem:[#allocation2 + $0x38] sm:$0xff] %v159
  %225 = vst [vmem:[#allocation2 + $0x40] sm:$0xff] %v200
  %226 = vst [vmem:[#allocation2 + $0x48] sm:$0xff] %v121
  %227 = vst [vmem:[#allocation2 + $0x50] sm:$0xff] %v162
  %228 = vst [vmem:[#allocation2 + $0x58] sm:$0xff] %v203
  %229 = vst [vmem:[#allocation2 + $0x60] sm:$0xff] %v124
  %230 = vst [vmem:[#allocation2 + $0x68] sm:$0xff] %v165
  %231 = vst [vmem:[#allocation2 + $0x70] sm:$0xff] %v206
  %232 = vst [vmem:[#allocation2 + $0x78] sm:$0xff] %v127
  %233 = vst [vmem:[#allocation2 + $0x80] sm:$0xff] %v168
  %234 = vst [vmem:[#allocation2 + $0x88] sm:$0xff] %v209
  %235 = vst [vmem:[#allocation2 + $0x90] sm:$0xff] %v130
  %236 = vst [vmem:[#allocation2 + $0x98] sm:$0xff] %v171
  %237 = vst [vmem:[#allocation2 + $0xa0] sm:$0xff] %v212
  %238 = vst [vmem:[#allocation2 + $0xa8] sm:$0xff] %v133
  %239 = vst [vmem:[#allocation2 + $0xb0] sm:$0xff] %v174
  %240 = vst [vmem:[#allocation2 + $0xb8] sm:$0xff] %v215
  %v241 = vld [vmem:[%s2] sm:$0xff]
  %v242 = vld [vmem:[%s2 + $0x8] sm:$0xff]
  %v243 = vld [vmem:[%s2 + $0x10] sm:$0xff]
  %v244 = vld [vmem:[%s2 + $0x18] sm:$0xff]
  %v245 = vld [vmem:[%s2 + $0x20] sm:$0xff]
  %v246 = vld [vmem:[%s2 + $0x28] sm:$0xff]
  %247 = vmatpush.msra.mxu0 0.0
  %248 = vmatpush.msra.mxu0 0.0
  %249 = vmatpush.msra.mxu0 0.0
  %250 = vmatpush.msra.mxu0 0.0
  %251 = vmatpush.msra.mxu0 0.0
  %252 = vmatpush.msra.mxu0 0.0
  %253 = vmatpush.msra.mxu0 0.0
  %254 = vmatpush.msra.mxu0 0.0
  %255 = vmatpush.msra.mxu0 0.0
  %256 = vmatpush.msra.mxu0 0.0
  %257 = vmatpush.msra.mxu0 0.0
  %258 = vmatpush.msra.mxu0 0.0
  %259 = vmatpush.msra.mxu0 0.0
  %260 = vmatpush.msra.mxu0 0.0
  %261 = vmatpush.msra.mxu0 %v244
  %262 = vmatpush.msra.mxu0 %v241
  %263 = vmatmul.f32.gmra.mxu0 %v71
  %v264 = vpop.f32.mrf.mxu0
  %v265 = vadd.f32 0.0, %v264
  %266 = vmatmul.f32.gmra.mxu0 %v74
  %v267 = vpop.f32.mrf.mxu0
  %v268 = vadd.f32 0.0, %v267
  %269 = vmatmul.f32.gmra.mxu0 %v77
  %v270 = vpop.f32.mrf.mxu0
  %v271 = vadd.f32 0.0, %v270
  %272 = vmatmul.f32.gmra.mxu0 %v80
  %v273 = vpop.f32.mrf.mxu0
  %v274 = vadd.f32 0.0, %v273
  %275 = vmatmul.f32.gmra.mxu0 %v83
  %v276 = vpop.f32.mrf.mxu0
  %v277 = vadd.f32 0.0, %v276
  %278 = vmatmul.f32.gmra.mxu0 %v86
  %v279 = vpop.f32.mrf.mxu0
  %v280 = vadd.f32 0.0, %v279
  %281 = vmatmul.f32.gmra.mxu0 %v89
  %v282 = vpop.f32.mrf.mxu0
  %v283 = vadd.f32 0.0, %v282
  %284 = vmatmul.f32.gmra.mxu0 %v92
  %v285 = vpop.f32.mrf.mxu0
  %v286 = vadd.f32 0.0, %v285
  %287 = vdwg.mxu0
  %288 = vmatpush.msra.mxu0 0.0
  %289 = vmatpush.msra.mxu0 0.0
  %290 = vmatpush.msra.mxu0 0.0
  %291 = vmatpush.msra.mxu0 0.0
  %292 = vmatpush.msra.mxu0 0.0
  %293 = vmatpush.msra.mxu0 0.0
  %294 = vmatpush.msra.mxu0 0.0
  %295 = vmatpush.msra.mxu0 0.0
  %296 = vmatpush.msra.mxu0 0.0
  %297 = vmatpush.msra.mxu0 0.0
  %298 = vmatpush.msra.mxu0 0.0
  %299 = vmatpush.msra.mxu0 0.0
  %300 = vmatpush.msra.mxu0 0.0
  %301 = vmatpush.msra.mxu0 0.0
  %302 = vmatpush.msra.mxu0 %v245
  %303 = vmatpush.msra.mxu0 %v242
  %304 = vmatmul.f32.gmra.mxu0 %v71
  %v305 = vpop.f32.mrf.mxu0
  %v306 = vadd.f32 0.0, %v305
  %307 = vmatmul.f32.gmra.mxu0 %v74
  %v308 = vpop.f32.mrf.mxu0
  %v309 = vadd.f32 0.0, %v308
  %310 = vmatmul.f32.gmra.mxu0 %v77
  %v311 = vpop.f32.mrf.mxu0
  %v312 = vadd.f32 0.0, %v311
  %313 = vmatmul.f32.gmra.mxu0 %v80
  %v314 = vpop.f32.mrf.mxu0
  %v315 = vadd.f32 0.0, %v314
  %316 = vmatmul.f32.gmra.mxu0 %v83
  %v317 = vpop.f32.mrf.mxu0
  %v318 = vadd.f32 0.0, %v317
  %319 = vmatmul.f32.gmra.mxu0 %v86
  %v320 = vpop.f32.mrf.mxu0
  %v321 = vadd.f32 0.0, %v320
  %322 = vmatmul.f32.gmra.mxu0 %v89
  %v323 = vpop.f32.mrf.mxu0
  %v324 = vadd.f32 0.0, %v323
  %325 = vmatmul.f32.gmra.mxu0 %v92
  %v326 = vpop.f32.mrf.mxu0
  %v327 = vadd.f32 0.0, %v326
  %328 = vdwg.mxu0
  %329 = vmatpush.msra.mxu0 0.0
  %330 = vmatpush.msra.mxu0 0.0
  %331 = vmatpush.msra.mxu0 0.0
  %332 = vmatpush.msra.mxu0 0.0
  %333 = vmatpush.msra.mxu0 0.0
  %334 = vmatpush.msra.mxu0 0.0
  %335 = vmatpush.msra.mxu0 0.0
  %336 = vmatpush.msra.mxu0 0.0
  %337 = vmatpush.msra.mxu0 0.0
  %338 = vmatpush.msra.mxu0 0.0
  %339 = vmatpush.msra.mxu0 0.0
  %340 = vmatpush.msra.mxu0 0.0
  %341 = vmatpush.msra.mxu0 0.0
  %342 = vmatpush.msra.mxu0 0.0
  %343 = vmatpush.msra.mxu0 %v246
  %344 = vmatpush.msra.mxu0 %v243
  %345 = vmatmul.f32.gmra.mxu0 %v71
  %v346 = vpop.f32.mrf.mxu0
  %v347 = vadd.f32 0.0, %v346
  %348 = vmatmul.f32.gmra.mxu0 %v74
  %v349 = vpop.f32.mrf.mxu0
  %v350 = vadd.f32 0.0, %v349
  %351 = vmatmul.f32.gmra.mxu0 %v77
  %v352 = vpop.f32.mrf.mxu0
  %v353 = vadd.f32 0.0, %v352
  %354 = vmatmul.f32.gmra.mxu0 %v80
  %v355 = vpop.f32.mrf.mxu0
  %v356 = vadd.f32 0.0, %v355
  %357 = vmatmul.f32.gmra.mxu0 %v83
  %v358 = vpop.f32.mrf.mxu0
  %v359 = vadd.f32 0.0, %v358
  %360 = vmatmul.f32.gmra.mxu0 %v86
  %v361 = vpop.f32.mrf.mxu0
  %v362 = vadd.f32 0.0, %v361
  %363 = vmatmul.f32.gmra.mxu0 %v89
  %v364 = vpop.f32.mrf.mxu0
  %v365 = vadd.f32 0.0, %v364
  %366 = vmatmul.f32.gmra.mxu0 %v92
  %v367 = vpop.f32.mrf.mxu0
  %v368 = vadd.f32 0.0, %v367
  %369 = vdwg.mxu0
  %370 = vst [vmem:[#allocation3] sm:$0xff] %v265
  %371 = vst [vmem:[#allocation3 + $0x8] sm:$0xff] %v306
  %372 = vst [vmem:[#allocation3 + $0x10] sm:$0xff] %v347
  %373 = vst [vmem:[#allocation3 + $0x18] sm:$0xff] %v268
  %374 = vst [vmem:[#allocation3 + $0x20] sm:$0xff] %v309
  %375 = vst [vmem:[#allocation3 + $0x28] sm:$0xff] %v350
  %376 = vst [vmem:[#allocation3 + $0x30] sm:$0xff] %v271
  %377 = vst [vmem:[#allocation3 + $0x38] sm:$0xff] %v312
  %378 = vst [vmem:[#allocation3 + $0x40] sm:$0xff] %v353
  %379 = vst [vmem:[#allocation3 + $0x48] sm:$0xff] %v274
  %380 = vst [vmem:[#allocation3 + $0x50] sm:$0xff] %v315
  %381 = vst [vmem:[#allocation3 + $0x58] sm:$0xff] %v356
  %382 = vst [vmem:[#allocation3 + $0x60] sm:$0xff] %v277
  %383 = vst [vmem:[#allocation3 + $0x68] sm:$0xff] %v318
  %384 = vst [vmem:[#allocation3 + $0x70] sm:$0xff] %v359
  %385 = vst [vmem:[#allocation3 + $0x78] sm:$0xff] %v280
  %386 = vst [vmem:[#allocation3 + $0x80] sm:$0xff] %v321
  %387 = vst [vmem:[#allocation3 + $0x88] sm:$0xff] %v362
  %388 = vst [vmem:[#allocation3 + $0x90] sm:$0xff] %v283
  %389 = vst [vmem:[#allocation3 + $0x98] sm:$0xff] %v324
  %390 = vst [vmem:[#allocation3 + $0xa0] sm:$0xff] %v365
  %391 = vst [vmem:[#allocation3 + $0xa8] sm:$0xff] %v286
  %392 = vst [vmem:[#allocation3 + $0xb0] sm:$0xff] %v327
  %393 = vst [vmem:[#allocation3 + $0xb8] sm:$0xff] %v368
  %v394 = vld [vmem:[%s3] sm:$0xff]
  %v395 = vld [vmem:[%s3 + $0x8] sm:$0xff]
  %v396 = vld [vmem:[%s3 + $0x10] sm:$0xff]
  %v397 = vld [vmem:[%s3 + $0x18] sm:$0xff]
  %v398 = vld [vmem:[%s3 + $0x20] sm:$0xff]
  %v399 = vld [vmem:[%s3 + $0x28] sm:$0xff]
  %v400 = vld [vmem:[%s3 + $0x30] sm:$0xff]
  %v401 = vld [vmem:[%s3 + $0x38] sm:$0xff]
  %v402 = vld [vmem:[%s3 + $0x40] sm:$0xff]
  %v403 = vld [vmem:[%s3 + $0x48] sm:$0xff]
  %v404 = vld [vmem:[%s3 + $0x50] sm:$0xff]
  %v405 = vld [vmem:[%s3 + $0x58] sm:$0xff]
  %v406 = vld [vmem:[%s3 + $0x60] sm:$0xff]
  %v407 = vld [vmem:[%s3 + $0x68] sm:$0xff]
  %v408 = vld [vmem:[%s3 + $0x70] sm:$0xff]
  %v409 = vld [vmem:[%s3 + $0x78] sm:$0xff]
  %v410 = vld [vmem:[%s3 + $0x80] sm:$0xff]
  %v411 = vld [vmem:[%s3 + $0x88] sm:$0xff]
  %v412 = vld [vmem:[%s3 + $0x90] sm:$0xff]
  %v413 = vld [vmem:[%s3 + $0x98] sm:$0xff]
  %v414 = vld [vmem:[%s3 + $0xa0] sm:$0xff]
  %v415 = vld [vmem:[%s3 + $0xa8] sm:$0xff]
  %v416 = vld [vmem:[%s3 + $0xb0] sm:$0xff]
  %v417 = vld [vmem:[%s3 + $0xb8] sm:$0xff]
  %v418 = vld [vmem:[%s3 + $0xc0] sm:$0xff]
  %v419 = vld [vmem:[%s3 + $0xc8] sm:$0xff]
  %v420 = vld [vmem:[%s3 + $0xd0] sm:$0xff]
  %v421 = vld [vmem:[%s3 + $0xd8] sm:$0xff]
  %v422 = vld [vmem:[%s3 + $0xe0] sm:$0xff]
  %v423 = vld [vmem:[%s3 + $0xe8] sm:$0xff]
  %v424 = vld [vmem:[%s3 + $0xf0] sm:$0xff]
  %v425 = vld [vmem:[%s3 + $0xf8] sm:$0xff]
  %v426 = vld [vmem:[%s3 + $0x100] sm:$0xff]
  %v427 = vld [vmem:[%s3 + $0x108] sm:$0xff]
  %v428 = vld [vmem:[%s3 + $0x110] sm:$0xff]
  %v429 = vld [vmem:[%s3 + $0x118] sm:$0xff]
  %v430 = vld [vmem:[%s3 + $0x120] sm:$0xff]
  %v431 = vld [vmem:[%s3 + $0x128] sm:$0xff]
  %v432 = vld [vmem:[%s3 + $0x130] sm:$0xff]
  %v433 = vld [vmem:[%s3 + $0x138] sm:$0xff]
  %v434 = vld [vmem:[%s3 + $0x140] sm:$0xff]
  %v435 = vld [vmem:[%s3 + $0x148] sm:$0xff]
  %v436 = vld [vmem:[%s3 + $0x150] sm:$0xff]
  %v437 = vld [vmem:[%s3 + $0x158] sm:$0xff]
  %v438 = vld [vmem:[%s3 + $0x160] sm:$0xff]
  %v439 = vld [vmem:[%s3 + $0x168] sm:$0xff]
  %v440 = vld [vmem:[%s3 + $0x170] sm:$0xff]
  %v441 = vld [vmem:[%s3 + $0x178] sm:$0xff]
  %v442 = vld [vmem:[%s5] sm:$0x1]
  %v444 = vperm.slane %v442, 0
  %v446 = vld [vmem:[#allocation2] sm:$0xff]
  %v447 = vld [vmem:[#allocation2 + $0x8] sm:$0xff]
  %v448 = vld [vmem:[#allocation2 + $0x10] sm:$0xff]
  %v449 = vld [vmem:[#allocation3 + $0xa8] sm:$0xff]
  %v450 = vld [vmem:[#allocation3 + $0xb0] sm:$0xff]
  %v451 = vld [vmem:[#allocation3 + $0xb8] sm:$0xff]
  %v452 = vadd.f32 %v446, %v449
  %v453 = vadd.f32 %v447, %v450
  %v454 = vadd.f32 %v448, %v451
  %455 = vmatpush.msra.mxu0 %v439
  %456 = vmatpush.msra.mxu0 %v436
  %457 = vmatpush.msra.mxu0 %v433
  %458 = vmatpush.msra.mxu0 %v430
  %459 = vmatpush.msra.mxu0 %v427
  %460 = vmatpush.msra.mxu0 %v424
  %461 = vmatpush.msra.mxu0 %v421
  %462 = vmatpush.msra.mxu0 %v418
  %463 = vmatpush.msra.mxu0 %v415
  %464 = vmatpush.msra.mxu0 %v412
  %465 = vmatpush.msra.mxu0 %v409
  %466 = vmatpush.msra.mxu0 %v406
  %467 = vmatpush.msra.mxu0 %v403
  %468 = vmatpush.msra.mxu0 %v400
  %469 = vmatpush.msra.mxu0 %v397
  %470 = vmatpush.msra.mxu0 %v394
  %471 = vmatmul.f32.gmra.mxu0 0.0
  %v472 = vpop.f32.mrf.mxu0
  %v473 = vadd.f32 0.0, %v472
  %474 = vdwg.mxu0
  %475 = vmatpush.msra.mxu0 %v440
  %476 = vmatpush.msra.mxu0 %v437
  %477 = vmatpush.msra.mxu0 %v434
  %478 = vmatpush.msra.mxu0 %v431
  %479 = vmatpush.msra.mxu0 %v428
  %480 = vmatpush.msra.mxu0 %v425
  %481 = vmatpush.msra.mxu0 %v422
  %482 = vmatpush.msra.mxu0 %v419
  %483 = vmatpush.msra.mxu0 %v416
  %484 = vmatpush.msra.mxu0 %v413
  %485 = vmatpush.msra.mxu0 %v410
  %486 = vmatpush.msra.mxu0 %v407
  %487 = vmatpush.msra.mxu0 %v404
  %488 = vmatpush.msra.mxu0 %v401
  %489 = vmatpush.msra.mxu0 %v398
  %490 = vmatpush.msra.mxu0 %v395
  %491 = vmatmul.f32.gmra.mxu0 0.0
  %v492 = vpop.f32.mrf.mxu0
  %v493 = vadd.f32 0.0, %v492
  %494 = vdwg.mxu0
  %495 = vmatpush.msra.mxu0 %v441
  %496 = vmatpush.msra.mxu0 %v438
  %497 = vmatpush.msra.mxu0 %v435
  %498 = vmatpush.msra.mxu0 %v432
  %499 = vmatpush.msra.mxu0 %v429
  %500 = vmatpush.msra.mxu0 %v426
  %501 = vmatpush.msra.mxu0 %v423
  %502 = vmatpush.msra.mxu0 %v420
  %503 = vmatpush.msra.mxu0 %v417
  %504 = vmatpush.msra.mxu0 %v414
  %505 = vmatpush.msra.mxu0 %v411
  %506 = vmatpush.msra.mxu0 %v408
  %507 = vmatpush.msra.mxu0 %v405
  %508 = vmatpush.msra.mxu0 %v402
  %509 = vmatpush.msra.mxu0 %v399
  %510 = vmatpush.msra.mxu0 %v396
  %511 = vmatmul.f32.gmra.mxu0 0.0
  %v512 = vpop.f32.mrf.mxu0
  %v513 = vadd.f32 0.0, %v512
  %514 = vdwg.mxu0
  %v515 = vadd.f32 %v452, %v473
  %v516 = vxor.u32 %v515, 2147483648
  %v517 = vmul.f32 %v516, 1.442695
  %v518 = vpow.pop %v517
  %v519 = vadd.f32 %v518, 1.0
  %v520 = vrcp.pop %v519
  %v521 = vmul.f32 %v519, %v520
  %v522 = vsub.f32 1.0, %v521
  %v523 = vmul.f32 %v520, %v522
  %v524 = vadd.f32 %v520, %v523
  %vm525 = vweird.f32 %v519
  %vm526 = vweird.f32 %v520
  %vm527 = vmor %vm525, %vm526
  %v528 = vsel %vm527, %v520, %v524
  %v529 = vand.u32 2147483647, %v519
  %vm530 = vcmp.eq.f32.partialorder %v529, 8.507059e+37
  %v531 = vand.u32 %v519, 2147483648
  %v532 = vor.u32 1.1754944e-38, %v531
  %v533 = vsel %vm530, %v532, %v528
  %v534 = vmul.f32 1.0, %v533
  %v535 = vadd.f32 %v453, %v493
  %v536 = vxor.u32 %v535, 2147483648
  %v537 = vmul.f32 %v536, 1.442695
  %v538 = vpow.pop %v537
  %v539 = vadd.f32 %v538, 1.0
  %v540 = vrcp.pop %v539
  %v541 = vmul.f32 %v539, %v540
  %v542 = vsub.f32 1.0, %v541
  %v543 = vmul.f32 %v540, %v542
  %v544 = vadd.f32 %v540, %v543
  %vm545 = vweird.f32 %v539
  %vm546 = vweird.f32 %v540
  %vm547 = vmor %vm545, %vm546
  %v548 = vsel %vm547, %v540, %v544
  %v549 = vand.u32 2147483647, %v539
  %vm550 = vcmp.eq.f32.partialorder %v549, 8.507059e+37
  %v551 = vand.u32 %v539, 2147483648
  %v552 = vor.u32 1.1754944e-38, %v551
  %v553 = vsel %vm550, %v552, %v548
  %v554 = vmul.f32 1.0, %v553
  %v555 = vadd.f32 %v513, %v444
  %v556 = vmul.f32 %v534, %v555
  %v557 = vadd.f32 %v454, %v556
  %v558 = vtanh.pop %v557
  %v559 = vsub.f32 1.0, %v554
  %v560 = vmul.f32 %v559, %v558
  %v561 = vmul.f32 %v554, 0.0
  %v562 = vadd.f32 %v560, %v561
  %563 = vst [vmem:[#allocation4] sm:$0xff] %v562
  %v564 = vld [vmem:[#allocation2 + $0x18] sm:$0xff]
  %v565 = vld [vmem:[#allocation2 + $0x20] sm:$0xff]
  %v566 = vld [vmem:[#allocation2 + $0x28] sm:$0xff]
  %v567 = vld [vmem:[#allocation3 + $0x90] sm:$0xff]
  %v568 = vld [vmem:[#allocation3 + $0x98] sm:$0xff]
  %v569 = vld [vmem:[#allocation3 + $0xa0] sm:$0xff]
  %v570 = vadd.f32 %v564, %v567
  %v571 = vadd.f32 %v565, %v568
  %v572 = vadd.f32 %v566, %v569
  %573 = vmatpush.msra.mxu0 %v439
  %574 = vmatpush.msra.mxu0 %v436
  %575 = vmatpush.msra.mxu0 %v433
  %576 = vmatpush.msra.mxu0 %v430
  %577 = vmatpush.msra.mxu0 %v427
  %578 = vmatpush.msra.mxu0 %v424
  %579 = vmatpush.msra.mxu0 %v421
  %580 = vmatpush.msra.mxu0 %v418
  %581 = vmatpush.msra.mxu0 %v415
  %582 = vmatpush.msra.mxu0 %v412
  %583 = vmatpush.msra.mxu0 %v409
  %584 = vmatpush.msra.mxu0 %v406
  %585 = vmatpush.msra.mxu0 %v403
  %586 = vmatpush.msra.mxu0 %v400
  %587 = vmatpush.msra.mxu0 %v397
  %588 = vmatpush.msra.mxu0 %v394
  %589 = vmatmul.f32.gmra.mxu0 %v562
  %v590 = vpop.f32.mrf.mxu0
  %v591 = vadd.f32 0.0, %v590
  %592 = vdwg.mxu0
  %593 = vmatpush.msra.mxu0 %v440
  %594 = vmatpush.msra.mxu0 %v437
  %595 = vmatpush.msra.mxu0 %v434
  %596 = vmatpush.msra.mxu0 %v431
  %597 = vmatpush.msra.mxu0 %v428
  %598 = vmatpush.msra.mxu0 %v425
  %599 = vmatpush.msra.mxu0 %v422
  %600 = vmatpush.msra.mxu0 %v419
  %601 = vmatpush.msra.mxu0 %v416
  %602 = vmatpush.msra.mxu0 %v413
  %603 = vmatpush.msra.mxu0 %v410
  %604 = vmatpush.msra.mxu0 %v407
  %605 = vmatpush.msra.mxu0 %v404
  %606 = vmatpush.msra.mxu0 %v401
  %607 = vmatpush.msra.mxu0 %v398
  %608 = vmatpush.msra.mxu0 %v395
  %609 = vmatmul.f32.gmra.mxu0 %v562
  %v610 = vpop.f32.mrf.mxu0
  %v611 = vadd.f32 0.0, %v610
  %612 = vdwg.mxu0
  %613 = vmatpush.msra.mxu0 %v441
  %614 = vmatpush.msra.mxu0 %v438
  %615 = vmatpush.msra.mxu0 %v435
  %616 = vmatpush.msra.mxu0 %v432
  %617 = vmatpush.msra.mxu0 %v429
  %618 = vmatpush.msra.mxu0 %v426
  %619 = vmatpush.msra.mxu0 %v423
  %620 = vmatpush.msra.mxu0 %v420
  %621 = vmatpush.msra.mxu0 %v417
  %622 = vmatpush.msra.mxu0 %v414
  %623 = vmatpush.msra.mxu0 %v411
  %624 = vmatpush.msra.mxu0 %v408
  %625 = vmatpush.msra.mxu0 %v405
  %626 = vmatpush.msra.mxu0 %v402
  %627 = vmatpush.msra.mxu0 %v399
  %628 = vmatpush.msra.mxu0 %v396
  %629 = vmatmul.f32.gmra.mxu0 %v562
  %v630 = vpop.f32.mrf.mxu0
  %v631 = vadd.f32 0.0, %v630
  %632 = vdwg.mxu0
  %v633 = vadd.f32 %v570, %v591
  %v634 = vxor.u32 %v633, 2147483648
  %v635 = vmul.f32 %v634, 1.442695
  %v636 = vpow.pop %v635
  %v637 = vadd.f32 %v636, 1.0
  %v638 = vrcp.pop %v637
  %v639 = vmul.f32 %v637, %v638
  %v640 = vsub.f32 1.0, %v639
  %v641 = vmul.f32 %v638, %v640
  %v642 = vadd.f32 %v638, %v641
  %vm643 = vweird.f32 %v637
  %vm644 = vweird.f32 %v638
  %vm645 = vmor %vm643, %vm644
  %v646 = vsel %vm645, %v638, %v642
  %v647 = vand.u32 2147483647, %v637
  %vm648 = vcmp.eq.f32.partialorder %v647, 8.507059e+37
  %v649 = vand.u32 %v637, 2147483648
  %v650 = vor.u32 1.1754944e-38, %v649
  %v651 = vsel %vm648, %v650, %v646
  %v652 = vmul.f32 1.0, %v651
  %v653 = vadd.f32 %v571, %v611
  %v654 = vxor.u32 %v653, 2147483648
  %v655 = vmul.f32 %v654, 1.442695
  %v656 = vpow.pop %v655
  %v657 = vadd.f32 %v656, 1.0
  %v658 = vrcp.pop %v657
  %v659 = vmul.f32 %v657, %v658
  %v660 = vsub.f32 1.0, %v659
  %v661 = vmul.f32 %v658, %v660
  %v662 = vadd.f32 %v658, %v661
  %vm663 = vweird.f32 %v657
  %vm664 = vweird.f32 %v658
  %vm665 = vmor %vm663, %vm664
  %v666 = vsel %vm665, %v658, %v662
  %v667 = vand.u32 2147483647, %v657
  %vm668 = vcmp.eq.f32.partialorder %v667, 8.507059e+37
  %v669 = vand.u32 %v657, 2147483648
  %v670 = vor.u32 1.1754944e-38, %v669
  %v671 = vsel %vm668, %v670, %v666
  %v672 = vmul.f32 1.0, %v671
  %v673 = vadd.f32 %v631, %v444
  %v674 = vmul.f32 %v652, %v673
  %v675 = vadd.f32 %v572, %v674
  %v676 = vtanh.pop %v675
  %v677 = vsub.f32 1.0, %v672
  %v678 = vmul.f32 %v677, %v676
  %v679 = vmul.f32 %v672, %v562
  %v680 = vadd.f32 %v678, %v679
  %681 = vst [vmem:[#allocation4 + $0x8] sm:$0xff] %v680
  %v682 = vld [vmem:[#allocation2 + $0x30] sm:$0xff]
  %v683 = vld [vmem:[#allocation2 + $0x38] sm:$0xff]
  %v684 = vld [vmem:[#allocation2 + $0x40] sm:$0xff]
  %v685 = vld [vmem:[#allocation3 + $0x78] sm:$0xff]
  %v686 = vld [vmem:[#allocation3 + $0x80] sm:$0xff]
  %v687 = vld [vmem:[#allocation3 + $0x88] sm:$0xff]
  %v688 = vadd.f32 %v682, %v685
  %v689 = vadd.f32 %v683, %v686
  %v690 = vadd.f32 %v684, %v687
  %691 = vmatpush.msra.mxu0 %v439
  %692 = vmatpush.msra.mxu0 %v436
  %693 = vmatpush.msra.mxu0 %v433
  %694 = vmatpush.msra.mxu0 %v430
  %695 = vmatpush.msra.mxu0 %v427
  %696 = vmatpush.msra.mxu0 %v424
  %697 = vmatpush.msra.mxu0 %v421
  %698 = vmatpush.msra.mxu0 %v418
  %699 = vmatpush.msra.mxu0 %v415
  %700 = vmatpush.msra.mxu0 %v412
  %701 = vmatpush.msra.mxu0 %v409
  %702 = vmatpush.msra.mxu0 %v406
  %703 = vmatpush.msra.mxu0 %v403
  %704 = vmatpush.msra.mxu0 %v400
  %705 = vmatpush.msra.mxu0 %v397
  %706 = vmatpush.msra.mxu0 %v394
  %707 = vmatmul.f32.gmra.mxu0 %v680
  %v708 = vpop.f32.mrf.mxu0
  %v709 = vadd.f32 0.0, %v708
  %710 = vdwg.mxu0
  %711 = vmatpush.msra.mxu0 %v440
  %712 = vmatpush.msra.mxu0 %v437
  %713 = vmatpush.msra.mxu0 %v434
  %714 = vmatpush.msra.mxu0 %v431
  %715 = vmatpush.msra.mxu0 %v428
  %716 = vmatpush.msra.mxu0 %v425
  %717 = vmatpush.msra.mxu0 %v422
  %718 = vmatpush.msra.mxu0 %v419
  %719 = vmatpush.msra.mxu0 %v416
  %720 = vmatpush.msra.mxu0 %v413
  %721 = vmatpush.msra.mxu0 %v410
  %722 = vmatpush.msra.mxu0 %v407
  %723 = vmatpush.msra.mxu0 %v404
  %724 = vmatpush.msra.mxu0 %v401
  %725 = vmatpush.msra.mxu0 %v398
  %726 = vmatpush.msra.mxu0 %v395
  %727 = vmatmul.f32.gmra.mxu0 %v680
  %v728 = vpop.f32.mrf.mxu0
  %v729 = vadd.f32 0.0, %v728
  %730 = vdwg.mxu0
  %731 = vmatpush.msra.mxu0 %v441
  %732 = vmatpush.msra.mxu0 %v438
  %733 = vmatpush.msra.mxu0 %v435
  %734 = vmatpush.msra.mxu0 %v432
  %735 = vmatpush.msra.mxu0 %v429
  %736 = vmatpush.msra.mxu0 %v426
  %737 = vmatpush.msra.mxu0 %v423
  %738 = vmatpush.msra.mxu0 %v420
  %739 = vmatpush.msra.mxu0 %v417
  %740 = vmatpush.msra.mxu0 %v414
  %741 = vmatpush.msra.mxu0 %v411
  %742 = vmatpush.msra.mxu0 %v408
  %743 = vmatpush.msra.mxu0 %v405
  %744 = vmatpush.msra.mxu0 %v402
  %745 = vmatpush.msra.mxu0 %v399
  %746 = vmatpush.msra.mxu0 %v396
  %747 = vmatmul.f32.gmra.mxu0 %v680
  %v748 = vpop.f32.mrf.mxu0
  %v749 = vadd.f32 0.0, %v748
  %750 = vdwg.mxu0
  %v751 = vadd.f32 %v688, %v709
  %v752 = vxor.u32 %v751, 2147483648
  %v753 = vmul.f32 %v752, 1.442695
  %v754 = vpow.pop %v753
  %v755 = vadd.f32 %v754, 1.0
  %v756 = vrcp.pop %v755
  %v757 = vmul.f32 %v755, %v756
  %v758 = vsub.f32 1.0, %v757
  %v759 = vmul.f32 %v756, %v758
  %v760 = vadd.f32 %v756, %v759
  %vm761 = vweird.f32 %v755
  %vm762 = vweird.f32 %v756
  %vm763 = vmor %vm761, %vm762
  %v764 = vsel %vm763, %v756, %v760
  %v765 = vand.u32 2147483647, %v755
  %vm766 = vcmp.eq.f32.partialorder %v765, 8.507059e+37
  %v767 = vand.u32 %v755, 2147483648
  %v768 = vor.u32 1.1754944e-38, %v767
  %v769 = vsel %vm766, %v768, %v764
  %v770 = vmul.f32 1.0, %v769
  %v771 = vadd.f32 %v689, %v729
  %v772 = vxor.u32 %v771, 2147483648
  %v773 = vmul.f32 %v772, 1.442695
  %v774 = vpow.pop %v773
  %v775 = vadd.f32 %v774, 1.0
  %v776 = vrcp.pop %v775
  %v777 = vmul.f32 %v775, %v776
  %v778 = vsub.f32 1.0, %v777
  %v779 = vmul.f32 %v776, %v778
  %v780 = vadd.f32 %v776, %v779
  %vm781 = vweird.f32 %v775
  %vm782 = vweird.f32 %v776
  %vm783 = vmor %vm781, %vm782
  %v784 = vsel %vm783, %v776, %v780
  %v785 = vand.u32 2147483647, %v775
  %vm786 = vcmp.eq.f32.partialorder %v785, 8.507059e+37
  %v787 = vand.u32 %v775, 2147483648
  %v788 = vor.u32 1.1754944e-38, %v787
  %v789 = vsel %vm786, %v788, %v784
  %v790 = vmul.f32 1.0, %v789
  %v791 = vadd.f32 %v749, %v444
  %v792 = vmul.f32 %v770, %v791
  %v793 = vadd.f32 %v690, %v792
  %v794 = vtanh.pop %v793
  %v795 = vsub.f32 1.0, %v790
  %v796 = vmul.f32 %v795, %v794
  %v797 = vmul.f32 %v790, %v680
  %v798 = vadd.f32 %v796, %v797
  %799 = vst [vmem:[#allocation4 + $0x10] sm:$0xff] %v798
  %v800 = vld [vmem:[#allocation2 + $0x48] sm:$0xff]
  %v801 = vld [vmem:[#allocation2 + $0x50] sm:$0xff]
  %v802 = vld [vmem:[#allocation2 + $0x58] sm:$0xff]
  %v803 = vld [vmem:[#allocation3 + $0x60] sm:$0xff]
  %v804 = vld [vmem:[#allocation3 + $0x68] sm:$0xff]
  %v805 = vld [vmem:[#allocation3 + $0x70] sm:$0xff]
  %v806 = vadd.f32 %v800, %v803
  %v807 = vadd.f32 %v801, %v804
  %v808 = vadd.f32 %v802, %v805
  %809 = vmatpush.msra.mxu0 %v439
  %810 = vmatpush.msra.mxu0 %v436
  %811 = vmatpush.msra.mxu0 %v433
  %812 = vmatpush.msra.mxu0 %v430
  %813 = vmatpush.msra.mxu0 %v427
  %814 = vmatpush.msra.mxu0 %v424
  %815 = vmatpush.msra.mxu0 %v421
  %816 = vmatpush.msra.mxu0 %v418
  %817 = vmatpush.msra.mxu0 %v415
  %818 = vmatpush.msra.mxu0 %v412
  %819 = vmatpush.msra.mxu0 %v409
  %820 = vmatpush.msra.mxu0 %v406
  %821 = vmatpush.msra.mxu0 %v403
  %822 = vmatpush.msra.mxu0 %v400
  %823 = vmatpush.msra.mxu0 %v397
  %824 = vmatpush.msra.mxu0 %v394
  %825 = vmatmul.f32.gmra.mxu0 %v798
  %v826 = vpop.f32.mrf.mxu0
  %v827 = vadd.f32 0.0, %v826
  %828 = vdwg.mxu0
  %829 = vmatpush.msra.mxu0 %v440
  %830 = vmatpush.msra.mxu0 %v437
  %831 = vmatpush.msra.mxu0 %v434
  %832 = vmatpush.msra.mxu0 %v431
  %833 = vmatpush.msra.mxu0 %v428
  %834 = vmatpush.msra.mxu0 %v425
  %835 = vmatpush.msra.mxu0 %v422
  %836 = vmatpush.msra.mxu0 %v419
  %837 = vmatpush.msra.mxu0 %v416
  %838 = vmatpush.msra.mxu0 %v413
  %839 = vmatpush.msra.mxu0 %v410
  %840 = vmatpush.msra.mxu0 %v407
  %841 = vmatpush.msra.mxu0 %v404
  %842 = vmatpush.msra.mxu0 %v401
  %843 = vmatpush.msra.mxu0 %v398
  %844 = vmatpush.msra.mxu0 %v395
  %845 = vmatmul.f32.gmra.mxu0 %v798
  %v846 = vpop.f32.mrf.mxu0
  %v847 = vadd.f32 0.0, %v846
  %848 = vdwg.mxu0
  %849 = vmatpush.msra.mxu0 %v441
  %850 = vmatpush.msra.mxu0 %v438
  %851 = vmatpush.msra.mxu0 %v435
  %852 = vmatpush.msra.mxu0 %v432
  %853 = vmatpush.msra.mxu0 %v429
  %854 = vmatpush.msra.mxu0 %v426
  %855 = vmatpush.msra.mxu0 %v423
  %856 = vmatpush.msra.mxu0 %v420
  %857 = vmatpush.msra.mxu0 %v417
  %858 = vmatpush.msra.mxu0 %v414
  %859 = vmatpush.msra.mxu0 %v411
  %860 = vmatpush.msra.mxu0 %v408
  %861 = vmatpush.msra.mxu0 %v405
  %862 = vmatpush.msra.mxu0 %v402
  %863 = vmatpush.msra.mxu0 %v399
  %864 = vmatpush.msra.mxu0 %v396
  %865 = vmatmul.f32.gmra.mxu0 %v798
  %v866 = vpop.f32.mrf.mxu0
  %v867 = vadd.f32 0.0, %v866
  %868 = vdwg.mxu0
  %v869 = vadd.f32 %v806, %v827
  %v870 = vxor.u32 %v869, 2147483648
  %v871 = vmul.f32 %v870, 1.442695
  %v872 = vpow.pop %v871
  %v873 = vadd.f32 %v872, 1.0
  %v874 = vrcp.pop %v873
  %v875 = vmul.f32 %v873, %v874
  %v876 = vsub.f32 1.0, %v875
  %v877 = vmul.f32 %v874, %v876
  %v878 = vadd.f32 %v874, %v877
  %vm879 = vweird.f32 %v873
  %vm880 = vweird.f32 %v874
  %vm881 = vmor %vm879, %vm880
  %v882 = vsel %vm881, %v874, %v878
  %v883 = vand.u32 2147483647, %v873
  %vm884 = vcmp.eq.f32.partialorder %v883, 8.507059e+37
  %v885 = vand.u32 %v873, 2147483648
  %v886 = vor.u32 1.1754944e-38, %v885
  %v887 = vsel %vm884, %v886, %v882
  %v888 = vmul.f32 1.0, %v887
  %v889 = vadd.f32 %v807, %v847
  %v890 = vxor.u32 %v889, 2147483648
  %v891 = vmul.f32 %v890, 1.442695
  %v892 = vpow.pop %v891
  %v893 = vadd.f32 %v892, 1.0
  %v894 = vrcp.pop %v893
  %v895 = vmul.f32 %v893, %v894
  %v896 = vsub.f32 1.0, %v895
  %v897 = vmul.f32 %v894, %v896
  %v898 = vadd.f32 %v894, %v897
  %vm899 = vweird.f32 %v893
  %vm900 = vweird.f32 %v894
  %vm901 = vmor %vm899, %vm900
  %v902 = vsel %vm901, %v894, %v898
  %v903 = vand.u32 2147483647, %v893
  %vm904 = vcmp.eq.f32.partialorder %v903, 8.507059e+37
  %v905 = vand.u32 %v893, 2147483648
  %v906 = vor.u32 1.1754944e-38, %v905
  %v907 = vsel %vm904, %v906, %v902
  %v908 = vmul.f32 1.0, %v907
  %v909 = vadd.f32 %v867, %v444
  %v910 = vmul.f32 %v888, %v909
  %v911 = vadd.f32 %v808, %v910
  %v912 = vtanh.pop %v911
  %v913 = vsub.f32 1.0, %v908
  %v914 = vmul.f32 %v913, %v912
  %v915 = vmul.f32 %v908, %v798
  %v916 = vadd.f32 %v914, %v915
  %917 = vst [vmem:[#allocation4 + $0x18] sm:$0xff] %v916
  %v918 = vld [vmem:[#allocation2 + $0x60] sm:$0xff]
  %v919 = vld [vmem:[#allocation2 + $0x68] sm:$0xff]
  %v920 = vld [vmem:[#allocation2 + $0x70] sm:$0xff]
  %v921 = vld [vmem:[#allocation3 + $0x48] sm:$0xff]
  %v922 = vld [vmem:[#allocation3 + $0x50] sm:$0xff]
  %v923 = vld [vmem:[#allocation3 + $0x58] sm:$0xff]
  %v924 = vadd.f32 %v918, %v921
  %v925 = vadd.f32 %v919, %v922
  %v926 = vadd.f32 %v920, %v923
  %927 = vmatpush.msra.mxu0 %v439
  %928 = vmatpush.msra.mxu0 %v436
  %929 = vmatpush.msra.mxu0 %v433
  %930 = vmatpush.msra.mxu0 %v430
  %931 = vmatpush.msra.mxu0 %v427
  %932 = vmatpush.msra.mxu0 %v424
  %933 = vmatpush.msra.mxu0 %v421
  %934 = vmatpush.msra.mxu0 %v418
  %935 = vmatpush.msra.mxu0 %v415
  %936 = vmatpush.msra.mxu0 %v412
  %937 = vmatpush.msra.mxu0 %v409
  %938 = vmatpush.msra.mxu0 %v406
  %939 = vmatpush.msra.mxu0 %v403
  %940 = vmatpush.msra.mxu0 %v400
  %941 = vmatpush.msra.mxu0 %v397
  %942 = vmatpush.msra.mxu0 %v394
  %943 = vmatmul.f32.gmra.mxu0 %v916
  %v944 = vpop.f32.mrf.mxu0
  %v945 = vadd.f32 0.0, %v944
  %946 = vdwg.mxu0
  %947 = vmatpush.msra.mxu0 %v440
  %948 = vmatpush.msra.mxu0 %v437
  %949 = vmatpush.msra.mxu0 %v434
  %950 = vmatpush.msra.mxu0 %v431
  %951 = vmatpush.msra.mxu0 %v428
  %952 = vmatpush.msra.mxu0 %v425
  %953 = vmatpush.msra.mxu0 %v422
  %954 = vmatpush.msra.mxu0 %v419
  %955 = vmatpush.msra.mxu0 %v416
  %956 = vmatpush.msra.mxu0 %v413
  %957 = vmatpush.msra.mxu0 %v410
  %958 = vmatpush.msra.mxu0 %v407
  %959 = vmatpush.msra.mxu0 %v404
  %960 = vmatpush.msra.mxu0 %v401
  %961 = vmatpush.msra.mxu0 %v398
  %962 = vmatpush.msra.mxu0 %v395
  %963 = vmatmul.f32.gmra.mxu0 %v916
  %v964 = vpop.f32.mrf.mxu0
  %v965 = vadd.f32 0.0, %v964
  %966 = vdwg.mxu0
  %967 = vmatpush.msra.mxu0 %v441
  %968 = vmatpush.msra.mxu0 %v438
  %969 = vmatpush.msra.mxu0 %v435
  %970 = vmatpush.msra.mxu0 %v432
  %971 = vmatpush.msra.mxu0 %v429
  %972 = vmatpush.msra.mxu0 %v426
  %973 = vmatpush.msra.mxu0 %v423
  %974 = vmatpush.msra.mxu0 %v420
  %975 = vmatpush.msra.mxu0 %v417
  %976 = vmatpush.msra.mxu0 %v414
  %977 = vmatpush.msra.mxu0 %v411
  %978 = vmatpush.msra.mxu0 %v408
  %979 = vmatpush.msra.mxu0 %v405
  %980 = vmatpush.msra.mxu0 %v402
  %981 = vmatpush.msra.mxu0 %v399
  %982 = vmatpush.msra.mxu0 %v396
  %983 = vmatmul.f32.gmra.mxu0 %v916
  %v984 = vpop.f32.mrf.mxu0
  %v985 = vadd.f32 0.0, %v984
  %986 = vdwg.mxu0
  %v987 = vadd.f32 %v924, %v945
  %v988 = vxor.u32 %v987, 2147483648
  %v989 = vmul.f32 %v988, 1.442695
  %v990 = vpow.pop %v989
  %v991 = vadd.f32 %v990, 1.0
  %v992 = vrcp.pop %v991
  %v993 = vmul.f32 %v991, %v992
  %v994 = vsub.f32 1.0, %v993
  %v995 = vmul.f32 %v992, %v994
  %v996 = vadd.f32 %v992, %v995
  %vm997 = vweird.f32 %v991
  %vm998 = vweird.f32 %v992
  %vm999 = vmor %vm997, %vm998
  %v1000 = vsel %vm999, %v992, %v996
  %v1001 = vand.u32 2147483647, %v991
  %vm1002 = vcmp.eq.f32.partialorder %v1001, 8.507059e+37
  %v1003 = vand.u32 %v991, 2147483648
  %v1004 = vor.u32 1.1754944e-38, %v1003
  %v1005 = vsel %vm1002, %v1004, %v1000
  %v1006 = vmul.f32 1.0, %v1005
  %v1007 = vadd.f32 %v925, %v965
  %v1008 = vxor.u32 %v1007, 2147483648
  %v1009 = vmul.f32 %v1008, 1.442695
  %v1010 = vpow.pop %v1009
  %v1011 = vadd.f32 %v1010, 1.0
  %v1012 = vrcp.pop %v1011
  %v1013 = vmul.f32 %v1011, %v1012
  %v1014 = vsub.f32 1.0, %v1013
  %v1015 = vmul.f32 %v1012, %v1014
  %v1016 = vadd.f32 %v1012, %v1015
  %vm1017 = vweird.f32 %v1011
  %vm1018 = vweird.f32 %v1012
  %vm1019 = vmor %vm1017, %vm1018
  %v1020 = vsel %vm1019, %v1012, %v1016
  %v1021 = vand.u32 2147483647, %v1011
  %vm1022 = vcmp.eq.f32.partialorder %v1021, 8.507059e+37
  %v1023 = vand.u32 %v1011, 2147483648
  %v1024 = vor.u32 1.1754944e-38, %v1023
  %v1025 = vsel %vm1022, %v1024, %v1020
  %v1026 = vmul.f32 1.0, %v1025
  %v1027 = vadd.f32 %v985, %v444
  %v1028 = vmul.f32 %v1006, %v1027
  %v1029 = vadd.f32 %v926, %v1028
  %v1030 = vtanh.pop %v1029
  %v1031 = vsub.f32 1.0, %v1026
  %v1032 = vmul.f32 %v1031, %v1030
  %v1033 = vmul.f32 %v1026, %v916
  %v1034 = vadd.f32 %v1032, %v1033
  %1035 = vst [vmem:[#allocation4 + $0x20] sm:$0xff] %v1034
  %v1036 = vld [vmem:[#allocation2 + $0x78] sm:$0xff]
  %v1037 = vld [vmem:[#allocation2 + $0x80] sm:$0xff]
  %v1038 = vld [vmem:[#allocation2 + $0x88] sm:$0xff]
  %v1039 = vld [vmem:[#allocation3 + $0x30] sm:$0xff]
  %v1040 = vld [vmem:[#allocation3 + $0x38] sm:$0xff]
  %v1041 = vld [vmem:[#allocation3 + $0x40] sm:$0xff]
  %v1042 = vadd.f32 %v1036, %v1039
  %v1043 = vadd.f32 %v1037, %v1040
  %v1044 = vadd.f32 %v1038, %v1041
  %1045 = vmatpush.msra.mxu0 %v439
  %1046 = vmatpush.msra.mxu0 %v436
  %1047 = vmatpush.msra.mxu0 %v433
  %1048 = vmatpush.msra.mxu0 %v430
  %1049 = vmatpush.msra.mxu0 %v427
  %1050 = vmatpush.msra.mxu0 %v424
  %1051 = vmatpush.msra.mxu0 %v421
  %1052 = vmatpush.msra.mxu0 %v418
  %1053 = vmatpush.msra.mxu0 %v415
  %1054 = vmatpush.msra.mxu0 %v412
  %1055 = vmatpush.msra.mxu0 %v409
  %1056 = vmatpush.msra.mxu0 %v406
  %1057 = vmatpush.msra.mxu0 %v403
  %1058 = vmatpush.msra.mxu0 %v400
  %1059 = vmatpush.msra.mxu0 %v397
  %1060 = vmatpush.msra.mxu0 %v394
  %1061 = vmatmul.f32.gmra.mxu0 %v1034
  %v1062 = vpop.f32.mrf.mxu0
  %v1063 = vadd.f32 0.0, %v1062
  %1064 = vdwg.mxu0
  %1065 = vmatpush.msra.mxu0 %v440
  %1066 = vmatpush.msra.mxu0 %v437
  %1067 = vmatpush.msra.mxu0 %v434
  %1068 = vmatpush.msra.mxu0 %v431
  %1069 = vmatpush.msra.mxu0 %v428
  %1070 = vmatpush.msra.mxu0 %v425
  %1071 = vmatpush.msra.mxu0 %v422
  %1072 = vmatpush.msra.mxu0 %v419
  %1073 = vmatpush.msra.mxu0 %v416
  %1074 = vmatpush.msra.mxu0 %v413
  %1075 = vmatpush.msra.mxu0 %v410
  %1076 = vmatpush.msra.mxu0 %v407
  %1077 = vmatpush.msra.mxu0 %v404
  %1078 = vmatpush.msra.mxu0 %v401
  %1079 = vmatpush.msra.mxu0 %v398
  %1080 = vmatpush.msra.mxu0 %v395
  %1081 = vmatmul.f32.gmra.mxu0 %v1034
  %v1082 = vpop.f32.mrf.mxu0
  %v1083 = vadd.f32 0.0, %v1082
  %1084 = vdwg.mxu0
  %1085 = vmatpush.msra.mxu0 %v441
  %1086 = vmatpush.msra.mxu0 %v438
  %1087 = vmatpush.msra.mxu0 %v435
  %1088 = vmatpush.msra.mxu0 %v432
  %1089 = vmatpush.msra.mxu0 %v429
  %1090 = vmatpush.msra.mxu0 %v426
  %1091 = vmatpush.msra.mxu0 %v423
  %1092 = vmatpush.msra.mxu0 %v420
  %1093 = vmatpush.msra.mxu0 %v417
  %1094 = vmatpush.msra.mxu0 %v414
  %1095 = vmatpush.msra.mxu0 %v411
  %1096 = vmatpush.msra.mxu0 %v408
  %1097 = vmatpush.msra.mxu0 %v405
  %1098 = vmatpush.msra.mxu0 %v402
  %1099 = vmatpush.msra.mxu0 %v399
  %1100 = vmatpush.msra.mxu0 %v396
  %1101 = vmatmul.f32.gmra.mxu0 %v1034
  %v1102 = vpop.f32.mrf.mxu0
  %v1103 = vadd.f32 0.0, %v1102
  %1104 = vdwg.mxu0
  %v1105 = vadd.f32 %v1042, %v1063
  %v1106 = vxor.u32 %v1105, 2147483648
  %v1107 = vmul.f32 %v1106, 1.442695
  %v1108 = vpow.pop %v1107
  %v1109 = vadd.f32 %v1108, 1.0
  %v1110 = vrcp.pop %v1109
  %v1111 = vmul.f32 %v1109, %v1110
  %v1112 = vsub.f32 1.0, %v1111
  %v1113 = vmul.f32 %v1110, %v1112
  %v1114 = vadd.f32 %v1110, %v1113
  %vm1115 = vweird.f32 %v1109
  %vm1116 = vweird.f32 %v1110
  %vm1117 = vmor %vm1115, %vm1116
  %v1118 = vsel %vm1117, %v1110, %v1114
  %v1119 = vand.u32 2147483647, %v1109
  %vm1120 = vcmp.eq.f32.partialorder %v1119, 8.507059e+37
  %v1121 = vand.u32 %v1109, 2147483648
  %v1122 = vor.u32 1.1754944e-38, %v1121
  %v1123 = vsel %vm1120, %v1122, %v1118
  %v1124 = vmul.f32 1.0, %v1123
  %v1125 = vadd.f32 %v1043, %v1083
  %v1126 = vxor.u32 %v1125, 2147483648
  %v1127 = vmul.f32 %v1126, 1.442695
  %v1128 = vpow.pop %v1127
  %v1129 = vadd.f32 %v1128, 1.0
  %v1130 = vrcp.pop %v1129
  %v1131 = vmul.f32 %v1129, %v1130
  %v1132 = vsub.f32 1.0, %v1131
  %v1133 = vmul.f32 %v1130, %v1132
  %v1134 = vadd.f32 %v1130, %v1133
  %vm1135 = vweird.f32 %v1129
  %vm1136 = vweird.f32 %v1130
  %vm1137 = vmor %vm1135, %vm1136
  %v1138 = vsel %vm1137, %v1130, %v1134
  %v1139 = vand.u32 2147483647, %v1129
  %vm1140 = vcmp.eq.f32.partialorder %v1139, 8.507059e+37
  %v1141 = vand.u32 %v1129, 2147483648
  %v1142 = vor.u32 1.1754944e-38, %v1141
  %v1143 = vsel %vm1140, %v1142, %v1138
  %v1144 = vmul.f32 1.0, %v1143
  %v1145 = vadd.f32 %v1103, %v444
  %v1146 = vmul.f32 %v1124, %v1145
  %v1147 = vadd.f32 %v1044, %v1146
  %v1148 = vtanh.pop %v1147
  %v1149 = vsub.f32 1.0, %v1144
  %v1150 = vmul.f32 %v1149, %v1148
  %v1151 = vmul.f32 %v1144, %v1034
  %v1152 = vadd.f32 %v1150, %v1151
  %1153 = vst [vmem:[#allocation4 + $0x28] sm:$0xff] %v1152
  %v1154 = vld [vmem:[#allocation2 + $0x90] sm:$0xff]
  %v1155 = vld [vmem:[#allocation2 + $0x98] sm:$0xff]
  %v1156 = vld [vmem:[#allocation2 + $0xa0] sm:$0xff]
  %v1157 = vld [vmem:[#allocation3 + $0x18] sm:$0xff]
  %v1158 = vld [vmem:[#allocation3 + $0x20] sm:$0xff]
  %v1159 = vld [vmem:[#allocation3 + $0x28] sm:$0xff]
  %v1160 = vadd.f32 %v1154, %v1157
  %v1161 = vadd.f32 %v1155, %v1158
  %v1162 = vadd.f32 %v1156, %v1159
  %1163 = vmatpush.msra.mxu0 %v439
  %1164 = vmatpush.msra.mxu0 %v436
  %1165 = vmatpush.msra.mxu0 %v433
  %1166 = vmatpush.msra.mxu0 %v430
  %1167 = vmatpush.msra.mxu0 %v427
  %1168 = vmatpush.msra.mxu0 %v424
  %1169 = vmatpush.msra.mxu0 %v421
  %1170 = vmatpush.msra.mxu0 %v418
  %1171 = vmatpush.msra.mxu0 %v415
  %1172 = vmatpush.msra.mxu0 %v412
  %1173 = vmatpush.msra.mxu0 %v409
  %1174 = vmatpush.msra.mxu0 %v406
  %1175 = vmatpush.msra.mxu0 %v403
  %1176 = vmatpush.msra.mxu0 %v400
  %1177 = vmatpush.msra.mxu0 %v397
  %1178 = vmatpush.msra.mxu0 %v394
  %1179 = vmatmul.f32.gmra.mxu0 %v1152
  %v1180 = vpop.f32.mrf.mxu0
  %v1181 = vadd.f32 0.0, %v1180
  %1182 = vdwg.mxu0
  %1183 = vmatpush.msra.mxu0 %v440
  %1184 = vmatpush.msra.mxu0 %v437
  %1185 = vmatpush.msra.mxu0 %v434
  %1186 = vmatpush.msra.mxu0 %v431
  %1187 = vmatpush.msra.mxu0 %v428
  %1188 = vmatpush.msra.mxu0 %v425
  %1189 = vmatpush.msra.mxu0 %v422
  %1190 = vmatpush.msra.mxu0 %v419
  %1191 = vmatpush.msra.mxu0 %v416
  %1192 = vmatpush.msra.mxu0 %v413
  %1193 = vmatpush.msra.mxu0 %v410
  %1194 = vmatpush.msra.mxu0 %v407
  %1195 = vmatpush.msra.mxu0 %v404
  %1196 = vmatpush.msra.mxu0 %v401
  %1197 = vmatpush.msra.mxu0 %v398
  %1198 = vmatpush.msra.mxu0 %v395
  %1199 = vmatmul.f32.gmra.mxu0 %v1152
  %v1200 = vpop.f32.mrf.mxu0
  %v1201 = vadd.f32 0.0, %v1200
  %1202 = vdwg.mxu0
  %1203 = vmatpush.msra.mxu0 %v441
  %1204 = vmatpush.msra.mxu0 %v438
  %1205 = vmatpush.msra.mxu0 %v435
  %1206 = vmatpush.msra.mxu0 %v432
  %1207 = vmatpush.msra.mxu0 %v429
  %1208 = vmatpush.msra.mxu0 %v426
  %1209 = vmatpush.msra.mxu0 %v423
  %1210 = vmatpush.msra.mxu0 %v420
  %1211 = vmatpush.msra.mxu0 %v417
  %1212 = vmatpush.msra.mxu0 %v414
  %1213 = vmatpush.msra.mxu0 %v411
  %1214 = vmatpush.msra.mxu0 %v408
  %1215 = vmatpush.msra.mxu0 %v405
  %1216 = vmatpush.msra.mxu0 %v402
  %1217 = vmatpush.msra.mxu0 %v399
  %1218 = vmatpush.msra.mxu0 %v396
  %1219 = vmatmul.f32.gmra.mxu0 %v1152
  %v1220 = vpop.f32.mrf.mxu0
  %v1221 = vadd.f32 0.0, %v1220
  %1222 = vdwg.mxu0
  %v1223 = vadd.f32 %v1160, %v1181
  %v1224 = vxor.u32 %v1223, 2147483648
  %v1225 = vmul.f32 %v1224, 1.442695
  %v1226 = vpow.pop %v1225
  %v1227 = vadd.f32 %v1226, 1.0
  %v1228 = vrcp.pop %v1227
  %v1229 = vmul.f32 %v1227, %v1228
  %v1230 = vsub.f32 1.0, %v1229
  %v1231 = vmul.f32 %v1228, %v1230
  %v1232 = vadd.f32 %v1228, %v1231
  %vm1233 = vweird.f32 %v1227
  %vm1234 = vweird.f32 %v1228
  %vm1235 = vmor %vm1233, %vm1234
  %v1236 = vsel %vm1235, %v1228, %v1232
  %v1237 = vand.u32 2147483647, %v1227
  %vm1238 = vcmp.eq.f32.partialorder %v1237, 8.507059e+37
  %v1239 = vand.u32 %v1227, 2147483648
  %v1240 = vor.u32 1.1754944e-38, %v1239
  %v1241 = vsel %vm1238, %v1240, %v1236
  %v1242 = vmul.f32 1.0, %v1241
  %v1243 = vadd.f32 %v1161, %v1201
  %v1244 = vxor.u32 %v1243, 2147483648
  %v1245 = vmul.f32 %v1244, 1.442695
  %v1246 = vpow.pop %v1245
  %v1247 = vadd.f32 %v1246, 1.0
  %v1248 = vrcp.pop %v1247
  %v1249 = vmul.f32 %v1247, %v1248
  %v1250 = vsub.f32 1.0, %v1249
  %v1251 = vmul.f32 %v1248, %v1250
  %v1252 = vadd.f32 %v1248, %v1251
  %vm1253 = vweird.f32 %v1247
  %vm1254 = vweird.f32 %v1248
  %vm1255 = vmor %vm1253, %vm1254
  %v1256 = vsel %vm1255, %v1248, %v1252
  %v1257 = vand.u32 2147483647, %v1247
  %vm1258 = vcmp.eq.f32.partialorder %v1257, 8.507059e+37
  %v1259 = vand.u32 %v1247, 2147483648
  %v1260 = vor.u32 1.1754944e-38, %v1259
  %v1261 = vsel %vm1258, %v1260, %v1256
  %v1262 = vmul.f32 1.0, %v1261
  %v1263 = vadd.f32 %v1221, %v444
  %v1264 = vmul.f32 %v1242, %v1263
  %v1265 = vadd.f32 %v1162, %v1264
  %v1266 = vtanh.pop %v1265
  %v1267 = vsub.f32 1.0, %v1262
  %v1268 = vmul.f32 %v1267, %v1266
  %v1269 = vmul.f32 %v1262, %v1152
  %v1270 = vadd.f32 %v1268, %v1269
  %1271 = vst [vmem:[#allocation4 + $0x30] sm:$0xff] %v1270
  %v1272 = vld [vmem:[#allocation2 + $0xa8] sm:$0xff]
  %v1273 = vld [vmem:[#allocation2 + $0xb0] sm:$0xff]
  %v1274 = vld [vmem:[#allocation2 + $0xb8] sm:$0xff]
  %v1275 = vld [vmem:[#allocation3] sm:$0xff]
  %v1276 = vld [vmem:[#allocation3 + $0x8] sm:$0xff]
  %v1277 = vld [vmem:[#allocation3 + $0x10] sm:$0xff]
  %v1278 = vadd.f32 %v1272, %v1275
  %v1279 = vadd.f32 %v1273, %v1276
  %v1280 = vadd.f32 %v1274, %v1277
  %1281 = vmatpush.msra.mxu0 %v439
  %1282 = vmatpush.msra.mxu0 %v436
  %1283 = vmatpush.msra.mxu0 %v433
  %1284 = vmatpush.msra.mxu0 %v430
  %1285 = vmatpush.msra.mxu0 %v427
  %1286 = vmatpush.msra.mxu0 %v424
  %1287 = vmatpush.msra.mxu0 %v421
  %1288 = vmatpush.msra.mxu0 %v418
  %1289 = vmatpush.msra.mxu0 %v415
  %1290 = vmatpush.msra.mxu0 %v412
  %1291 = vmatpush.msra.mxu0 %v409
  %1292 = vmatpush.msra.mxu0 %v406
  %1293 = vmatpush.msra.mxu0 %v403
  %1294 = vmatpush.msra.mxu0 %v400
  %1295 = vmatpush.msra.mxu0 %v397
  %1296 = vmatpush.msra.mxu0 %v394
  %1297 = vmatmul.f32.gmra.mxu0 %v1270
  %v1298 = vpop.f32.mrf.mxu0
  %v1299 = vadd.f32 0.0, %v1298
  %1300 = vdwg.mxu0
  %1301 = vmatpush.msra.mxu0 %v440
  %1302 = vmatpush.msra.mxu0 %v437
  %1303 = vmatpush.msra.mxu0 %v434
  %1304 = vmatpush.msra.mxu0 %v431
  %1305 = vmatpush.msra.mxu0 %v428
  %1306 = vmatpush.msra.mxu0 %v425
  %1307 = vmatpush.msra.mxu0 %v422
  %1308 = vmatpush.msra.mxu0 %v419
  %1309 = vmatpush.msra.mxu0 %v416
  %1310 = vmatpush.msra.mxu0 %v413
  %1311 = vmatpush.msra.mxu0 %v410
  %1312 = vmatpush.msra.mxu0 %v407
  %1313 = vmatpush.msra.mxu0 %v404
  %1314 = vmatpush.msra.mxu0 %v401
  %1315 = vmatpush.msra.mxu0 %v398
  %1316 = vmatpush.msra.mxu0 %v395
  %1317 = vmatmul.f32.gmra.mxu0 %v1270
  %v1318 = vpop.f32.mrf.mxu0
  %v1319 = vadd.f32 0.0, %v1318
  %1320 = vdwg.mxu0
  %1321 = vmatpush.msra.mxu0 %v441
  %1322 = vmatpush.msra.mxu0 %v438
  %1323 = vmatpush.msra.mxu0 %v435
  %1324 = vmatpush.msra.mxu0 %v432
  %1325 = vmatpush.msra.mxu0 %v429
  %1326 = vmatpush.msra.mxu0 %v426
  %1327 = vmatpush.msra.mxu0 %v423
  %1328 = vmatpush.msra.mxu0 %v420
  %1329 = vmatpush.msra.mxu0 %v417
  %1330 = vmatpush.msra.mxu0 %v414
  %1331 = vmatpush.msra.mxu0 %v411
  %1332 = vmatpush.msra.mxu0 %v408
  %1333 = vmatpush.msra.mxu0 %v405
  %1334 = vmatpush.msra.mxu0 %v402
  %1335 = vmatpush.msra.mxu0 %v399
  %1336 = vmatpush.msra.mxu0 %v396
  %1337 = vmatmul.f32.gmra.mxu0 %v1270
  %v1338 = vpop.f32.mrf.mxu0
  %v1339 = vadd.f32 0.0, %v1338
  %1340 = vdwg.mxu0
  %v1341 = vadd.f32 %v1278, %v1299
  %v1342 = vxor.u32 %v1341, 2147483648
  %v1343 = vmul.f32 %v1342, 1.442695
  %v1344 = vpow.pop %v1343
  %v1345 = vadd.f32 %v1344, 1.0
  %v1346 = vrcp.pop %v1345
  %v1347 = vmul.f32 %v1345, %v1346
  %v1348 = vsub.f32 1.0, %v1347
  %v1349 = vmul.f32 %v1346, %v1348
  %v1350 = vadd.f32 %v1346, %v1349
  %vm1351 = vweird.f32 %v1345
  %vm1352 = vweird.f32 %v1346
  %vm1353 = vmor %vm1351, %vm1352
  %v1354 = vsel %vm1353, %v1346, %v1350
  %v1355 = vand.u32 2147483647, %v1345
  %vm1356 = vcmp.eq.f32.partialorder %v1355, 8.507059e+37
  %v1357 = vand.u32 %v1345, 2147483648
  %v1358 = vor.u32 1.1754944e-38, %v1357
  %v1359 = vsel %vm1356, %v1358, %v1354
  %v1360 = vmul.f32 1.0, %v1359
  %v1361 = vadd.f32 %v1279, %v1319
  %v1362 = vxor.u32 %v1361, 2147483648
  %v1363 = vmul.f32 %v1362, 1.442695
  %v1364 = vpow.pop %v1363
  %v1365 = vadd.f32 %v1364, 1.0
  %v1366 = vrcp.pop %v1365
  %v1367 = vmul.f32 %v1365, %v1366
  %v1368 = vsub.f32 1.0, %v1367
  %v1369 = vmul.f32 %v1366, %v1368
  %v1370 = vadd.f32 %v1366, %v1369
  %vm1371 = vweird.f32 %v1365
  %vm1372 = vweird.f32 %v1366
  %vm1373 = vmor %vm1371, %vm1372
  %v1374 = vsel %vm1373, %v1366, %v1370
  %v1375 = vand.u32 2147483647, %v1365
  %vm1376 = vcmp.eq.f32.partialorder %v1375, 8.507059e+37
  %v1377 = vand.u32 %v1365, 2147483648
  %v1378 = vor.u32 1.1754944e-38, %v1377
  %v1379 = vsel %vm1376, %v1378, %v1374
  %v1380 = vmul.f32 1.0, %v1379
  %v1381 = vadd.f32 %v1339, %v444
  %v1382 = vmul.f32 %v1360, %v1381
  %v1383 = vadd.f32 %v1280, %v1382
  %v1384 = vtanh.pop %v1383
  %v1385 = vsub.f32 1.0, %v1380
  %v1386 = vmul.f32 %v1385, %v1384
  %v1387 = vmul.f32 %v1380, %v1270
  %v1388 = vadd.f32 %v1386, %v1387
  %1389 = vst [vmem:[#allocation4 + $0x38] sm:$0xff] %v1388
  %v1390 = vld [vmem:[#allocation4] sm:$0xff]
  %v1391 = vld [vmem:[#allocation4 + $0x8] sm:$0xff]
  %v1392 = vld [vmem:[#allocation4 + $0x10] sm:$0xff]
  %v1393 = vld [vmem:[#allocation4 + $0x18] sm:$0xff]
  %v1394 = vld [vmem:[#allocation4 + $0x20] sm:$0xff]
  %v1395 = vld [vmem:[#allocation4 + $0x28] sm:$0xff]
  %v1396 = vld [vmem:[#allocation4 + $0x30] sm:$0xff]
  %v1397 = vld [vmem:[#allocation4 + $0x38] sm:$0xff]
  %v1398 = vld [vmem:[%s6] sm:$0xff]
  %v1399 = vld [vmem:[%s6 + $0x8] sm:$0xff]
  %v1400 = vld [vmem:[%s6 + $0x10] sm:$0xff]
  %v1401 = vld [vmem:[%s6 + $0x18] sm:$0xff]
  %v1402 = vld [vmem:[%s6 + $0x20] sm:$0xff]
  %v1403 = vld [vmem:[%s6 + $0x28] sm:$0xff]
  %v1404 = vld [vmem:[%s6 + $0x30] sm:$0xff]
  %v1405 = vld [vmem:[%s6 + $0x38] sm:$0xff]
  %v1406 = vld [vmem:[%s6 + $0x40] sm:$0xff]
  %v1407 = vld [vmem:[%s6 + $0x48] sm:$0xff]
  %v1408 = vld [vmem:[%s6 + $0x50] sm:$0xff]
  %v1409 = vld [vmem:[%s6 + $0x58] sm:$0xff]
  %v1410 = vld [vmem:[%s6 + $0x60] sm:$0xff]
  %v1411 = vld [vmem:[%s6 + $0x68] sm:$0xff]
  %v1412 = vld [vmem:[%s6 + $0x70] sm:$0xff]
  %v1413 = vld [vmem:[%s6 + $0x78] sm:$0xff]
  %v1414 = vld [vmem:[%s6 + $0x80] sm:$0xff]
  %v1415 = vld [vmem:[%s6 + $0x88] sm:$0xff]
  %v1416 = vld [vmem:[%s6 + $0x90] sm:$0xff]
  %v1417 = vld [vmem:[%s6 + $0x98] sm:$0xff]
  %v1418 = vld [vmem:[%s6 + $0xa0] sm:$0xff]
  %v1419 = vld [vmem:[%s6 + $0xa8] sm:$0xff]
  %v1420 = vld [vmem:[%s6 + $0xb0] sm:$0xff]
  %v1421 = vld [vmem:[%s6 + $0xb8] sm:$0xff]
  %v1422 = vld [vmem:[%s6 + $0xc0] sm:$0xff]
  %v1423 = vld [vmem:[%s6 + $0xc8] sm:$0xff]
  %v1424 = vld [vmem:[%s6 + $0xd0] sm:$0xff]
  %v1425 = vld [vmem:[%s6 + $0xd8] sm:$0xff]
  %v1426 = vld [vmem:[%s6 + $0xe0] sm:$0xff]
  %v1427 = vld [vmem:[%s6 + $0xe8] sm:$0xff]
  %v1428 = vld [vmem:[%s6 + $0xf0] sm:$0xff]
  %v1429 = vld [vmem:[%s6 + $0xf8] sm:$0xff]
  %v1430 = vld [vmem:[%s6 + $0x100] sm:$0xff]
  %v1431 = vld [vmem:[%s6 + $0x108] sm:$0xff]
  %v1432 = vld [vmem:[%s6 + $0x110] sm:$0xff]
  %v1433 = vld [vmem:[%s6 + $0x118] sm:$0xff]
  %v1434 = vld [vmem:[%s6 + $0x120] sm:$0xff]
  %v1435 = vld [vmem:[%s6 + $0x128] sm:$0xff]
  %v1436 = vld [vmem:[%s6 + $0x130] sm:$0xff]
  %v1437 = vld [vmem:[%s6 + $0x138] sm:$0xff]
  %v1438 = vld [vmem:[%s6 + $0x140] sm:$0xff]
  %v1439 = vld [vmem:[%s6 + $0x148] sm:$0xff]
  %v1440 = vld [vmem:[%s6 + $0x150] sm:$0xff]
  %v1441 = vld [vmem:[%s6 + $0x158] sm:$0xff]
  %v1442 = vld [vmem:[%s6 + $0x160] sm:$0xff]
  %v1443 = vld [vmem:[%s6 + $0x168] sm:$0xff]
  %v1444 = vld [vmem:[%s6 + $0x170] sm:$0xff]
  %v1445 = vld [vmem:[%s6 + $0x178] sm:$0xff]
  %v1446 = vld [vmem:[%s9] sm:$0x7]
  %v1448 = vperm.slane %v1446, 0
  %v1449 = vperm.slane %v1446, 1
  %v1450 = vperm.slane %v1446, 2
  %1454 = vmatpush.msra.mxu0 %v1443
  %1455 = vmatpush.msra.mxu0 %v1440
  %1456 = vmatpush.msra.mxu0 %v1437
  %1457 = vmatpush.msra.mxu0 %v1434
  %1458 = vmatpush.msra.mxu0 %v1431
  %1459 = vmatpush.msra.mxu0 %v1428
  %1460 = vmatpush.msra.mxu0 %v1425
  %1461 = vmatpush.msra.mxu0 %v1422
  %1462 = vmatpush.msra.mxu0 %v1419
  %1463 = vmatpush.msra.mxu0 %v1416
  %1464 = vmatpush.msra.mxu0 %v1413
  %1465 = vmatpush.msra.mxu0 %v1410
  %1466 = vmatpush.msra.mxu0 %v1407
  %1467 = vmatpush.msra.mxu0 %v1404
  %1468 = vmatpush.msra.mxu0 %v1401
  %1469 = vmatpush.msra.mxu0 %v1398
  %1470 = vmatmul.f32.gmra.mxu0 %v1390
  %v1471 = vpop.f32.mrf.mxu0
  %v1472 = vadd.f32 %v1448, %v1471
  %1473 = vmatmul.f32.gmra.mxu0 %v1391
  %v1474 = vpop.f32.mrf.mxu0
  %v1475 = vadd.f32 %v1448, %v1474
  %1476 = vmatmul.f32.gmra.mxu0 %v1392
  %v1477 = vpop.f32.mrf.mxu0
  %v1478 = vadd.f32 %v1448, %v1477
  %1479 = vmatmul.f32.gmra.mxu0 %v1393
  %v1480 = vpop.f32.mrf.mxu0
  %v1481 = vadd.f32 %v1448, %v1480
  %1482 = vmatmul.f32.gmra.mxu0 %v1394
  %v1483 = vpop.f32.mrf.mxu0
  %v1484 = vadd.f32 %v1448, %v1483
  %1485 = vmatmul.f32.gmra.mxu0 %v1395
  %v1486 = vpop.f32.mrf.mxu0
  %v1487 = vadd.f32 %v1448, %v1486
  %1488 = vmatmul.f32.gmra.mxu0 %v1396
  %v1489 = vpop.f32.mrf.mxu0
  %v1490 = vadd.f32 %v1448, %v1489
  %1491 = vmatmul.f32.gmra.mxu0 %v1397
  %v1492 = vpop.f32.mrf.mxu0
  %v1493 = vadd.f32 %v1448, %v1492
  %1494 = vdwg.mxu0
  %1495 = vmatpush.msra.mxu0 %v1444
  %1496 = vmatpush.msra.mxu0 %v1441
  %1497 = vmatpush.msra.mxu0 %v1438
  %1498 = vmatpush.msra.mxu0 %v1435
  %1499 = vmatpush.msra.mxu0 %v1432
  %1500 = vmatpush.msra.mxu0 %v1429
  %1501 = vmatpush.msra.mxu0 %v1426
  %1502 = vmatpush.msra.mxu0 %v1423
  %1503 = vmatpush.msra.mxu0 %v1420
  %1504 = vmatpush.msra.mxu0 %v1417
  %1505 = vmatpush.msra.mxu0 %v1414
  %1506 = vmatpush.msra.mxu0 %v1411
  %1507 = vmatpush.msra.mxu0 %v1408
  %1508 = vmatpush.msra.mxu0 %v1405
  %1509 = vmatpush.msra.mxu0 %v1402
  %1510 = vmatpush.msra.mxu0 %v1399
  %1511 = vmatmul.f32.gmra.mxu0 %v1390
  %v1512 = vpop.f32.mrf.mxu0
  %v1513 = vadd.f32 %v1449, %v1512
  %1514 = vmatmul.f32.gmra.mxu0 %v1391
  %v1515 = vpop.f32.mrf.mxu0
  %v1516 = vadd.f32 %v1449, %v1515
  %1517 = vmatmul.f32.gmra.mxu0 %v1392
  %v1518 = vpop.f32.mrf.mxu0
  %v1519 = vadd.f32 %v1449, %v1518
  %1520 = vmatmul.f32.gmra.mxu0 %v1393
  %v1521 = vpop.f32.mrf.mxu0
  %v1522 = vadd.f32 %v1449, %v1521
  %1523 = vmatmul.f32.gmra.mxu0 %v1394
  %v1524 = vpop.f32.mrf.mxu0
  %v1525 = vadd.f32 %v1449, %v1524
  %1526 = vmatmul.f32.gmra.mxu0 %v1395
  %v1527 = vpop.f32.mrf.mxu0
  %v1528 = vadd.f32 %v1449, %v1527
  %1529 = vmatmul.f32.gmra.mxu0 %v1396
  %v1530 = vpop.f32.mrf.mxu0
  %v1531 = vadd.f32 %v1449, %v1530
  %1532 = vmatmul.f32.gmra.mxu0 %v1397
  %v1533 = vpop.f32.mrf.mxu0
  %v1534 = vadd.f32 %v1449, %v1533
  %1535 = vdwg.mxu0
  %1536 = vmatpush.msra.mxu0 %v1445
  %1537 = vmatpush.msra.mxu0 %v1442
  %1538 = vmatpush.msra.mxu0 %v1439
  %1539 = vmatpush.msra.mxu0 %v1436
  %1540 = vmatpush.msra.mxu0 %v1433
  %1541 = vmatpush.msra.mxu0 %v1430
  %1542 = vmatpush.msra.mxu0 %v1427
  %1543 = vmatpush.msra.mxu0 %v1424
  %1544 = vmatpush.msra.mxu0 %v1421
  %1545 = vmatpush.msra.mxu0 %v1418
  %1546 = vmatpush.msra.mxu0 %v1415
  %1547 = vmatpush.msra.mxu0 %v1412
  %1548 = vmatpush.msra.mxu0 %v1409
  %1549 = vmatpush.msra.mxu0 %v1406
  %1550 = vmatpush.msra.mxu0 %v1403
  %1551 = vmatpush.msra.mxu0 %v1400
  %1552 = vmatmul.f32.gmra.mxu0 %v1390
  %v1553 = vpop.f32.mrf.mxu0
  %v1554 = vadd.f32 %v1450, %v1553
  %1555 = vmatmul.f32.gmra.mxu0 %v1391
  %v1556 = vpop.f32.mrf.mxu0
  %v1557 = vadd.f32 %v1450, %v1556
  %1558 = vmatmul.f32.gmra.mxu0 %v1392
  %v1559 = vpop.f32.mrf.mxu0
  %v1560 = vadd.f32 %v1450, %v1559
  %1561 = vmatmul.f32.gmra.mxu0 %v1393
  %v1562 = vpop.f32.mrf.mxu0
  %v1563 = vadd.f32 %v1450, %v1562
  %1564 = vmatmul.f32.gmra.mxu0 %v1394
  %v1565 = vpop.f32.mrf.mxu0
  %v1566 = vadd.f32 %v1450, %v1565
  %1567 = vmatmul.f32.gmra.mxu0 %v1395
  %v1568 = vpop.f32.mrf.mxu0
  %v1569 = vadd.f32 %v1450, %v1568
  %1570 = vmatmul.f32.gmra.mxu0 %v1396
  %v1571 = vpop.f32.mrf.mxu0
  %v1572 = vadd.f32 %v1450, %v1571
  %1573 = vmatmul.f32.gmra.mxu0 %v1397
  %v1574 = vpop.f32.mrf.mxu0
  %v1575 = vadd.f32 %v1450, %v1574
  %1576 = vdwg.mxu0
  %1577 = vst [vmem:[#allocation2] sm:$0xff] %v1472
  %1578 = vst [vmem:[#allocation2 + $0x8] sm:$0xff] %v1513
  %1579 = vst [vmem:[#allocation2 + $0x10] sm:$0xff] %v1554
  %1580 = vst [vmem:[#allocation2 + $0x18] sm:$0xff] %v1475
  %1581 = vst [vmem:[#allocation2 + $0x20] sm:$0xff] %v1516
  %1582 = vst [vmem:[#allocation2 + $0x28] sm:$0xff] %v1557
  %1583 = vst [vmem:[#allocation2 + $0x30] sm:$0xff] %v1478
  %1584 = vst [vmem:[#allocation2 + $0x38] sm:$0xff] %v1519
  %1585 = vst [vmem:[#allocation2 + $0x40] sm:$0xff] %v1560
  %1586 = vst [vmem:[#allocation2 + $0x48] sm:$0xff] %v1481
  %1587 = vst [vmem:[#allocation2 + $0x50] sm:$0xff] %v1522
  %1588 = vst [vmem:[#allocation2 + $0x58] sm:$0xff] %v1563
  %1589 = vst [vmem:[#allocation2 + $0x60] sm:$0xff] %v1484
  %1590 = vst [vmem:[#allocation2 + $0x68] sm:$0xff] %v1525
  %1591 = vst [vmem:[#allocation2 + $0x70] sm:$0xff] %v1566
  %1592 = vst [vmem:[#allocation2 + $0x78] sm:$0xff] %v1487
  %1593 = vst [vmem:[#allocation2 + $0x80] sm:$0xff] %v1528
  %1594 = vst [vmem:[#allocation2 + $0x88] sm:$0xff] %v1569
  %1595 = vst [vmem:[#allocation2 + $0x90] sm:$0xff] %v1490
  %1596 = vst [vmem:[#allocation2 + $0x98] sm:$0xff] %v1531
  %1597 = vst [vmem:[#allocation2 + $0xa0] sm:$0xff] %v1572
  %1598 = vst [vmem:[#allocation2 + $0xa8] sm:$0xff] %v1493
  %1599 = vst [vmem:[#allocation2 + $0xb0] sm:$0xff] %v1534
  %1600 = vst [vmem:[#allocation2 + $0xb8] sm:$0xff] %v1575
  %v1601 = vld [vmem:[%s7] sm:$0xff]
  %v1602 = vld [vmem:[%s7 + $0x8] sm:$0xff]
  %v1603 = vld [vmem:[%s7 + $0x10] sm:$0xff]
  %v1604 = vld [vmem:[%s7 + $0x18] sm:$0xff]
  %v1605 = vld [vmem:[%s7 + $0x20] sm:$0xff]
  %v1606 = vld [vmem:[%s7 + $0x28] sm:$0xff]
  %v1607 = vld [vmem:[%s7 + $0x30] sm:$0xff]
  %v1608 = vld [vmem:[%s7 + $0x38] sm:$0xff]
  %v1609 = vld [vmem:[%s7 + $0x40] sm:$0xff]
  %v1610 = vld [vmem:[%s7 + $0x48] sm:$0xff]
  %v1611 = vld [vmem:[%s7 + $0x50] sm:$0xff]
  %v1612 = vld [vmem:[%s7 + $0x58] sm:$0xff]
  %v1613 = vld [vmem:[%s7 + $0x60] sm:$0xff]
  %v1614 = vld [vmem:[%s7 + $0x68] sm:$0xff]
  %v1615 = vld [vmem:[%s7 + $0x70] sm:$0xff]
  %v1616 = vld [vmem:[%s7 + $0x78] sm:$0xff]
  %v1617 = vld [vmem:[%s7 + $0x80] sm:$0xff]
  %v1618 = vld [vmem:[%s7 + $0x88] sm:$0xff]
  %v1619 = vld [vmem:[%s7 + $0x90] sm:$0xff]
  %v1620 = vld [vmem:[%s7 + $0x98] sm:$0xff]
  %v1621 = vld [vmem:[%s7 + $0xa0] sm:$0xff]
  %v1622 = vld [vmem:[%s7 + $0xa8] sm:$0xff]
  %v1623 = vld [vmem:[%s7 + $0xb0] sm:$0xff]
  %v1624 = vld [vmem:[%s7 + $0xb8] sm:$0xff]
  %v1625 = vld [vmem:[%s7 + $0xc0] sm:$0xff]
  %v1626 = vld [vmem:[%s7 + $0xc8] sm:$0xff]
  %v1627 = vld [vmem:[%s7 + $0xd0] sm:$0xff]
  %v1628 = vld [vmem:[%s7 + $0xd8] sm:$0xff]
  %v1629 = vld [vmem:[%s7 + $0xe0] sm:$0xff]
  %v1630 = vld [vmem:[%s7 + $0xe8] sm:$0xff]
  %v1631 = vld [vmem:[%s7 + $0xf0] sm:$0xff]
  %v1632 = vld [vmem:[%s7 + $0xf8] sm:$0xff]
  %v1633 = vld [vmem:[%s7 + $0x100] sm:$0xff]
  %v1634 = vld [vmem:[%s7 + $0x108] sm:$0xff]
  %v1635 = vld [vmem:[%s7 + $0x110] sm:$0xff]
  %v1636 = vld [vmem:[%s7 + $0x118] sm:$0xff]
  %v1637 = vld [vmem:[%s7 + $0x120] sm:$0xff]
  %v1638 = vld [vmem:[%s7 + $0x128] sm:$0xff]
  %v1639 = vld [vmem:[%s7 + $0x130] sm:$0xff]
  %v1640 = vld [vmem:[%s7 + $0x138] sm:$0xff]
  %v1641 = vld [vmem:[%s7 + $0x140] sm:$0xff]
  %v1642 = vld [vmem:[%s7 + $0x148] sm:$0xff]
  %v1643 = vld [vmem:[%s7 + $0x150] sm:$0xff]
  %v1644 = vld [vmem:[%s7 + $0x158] sm:$0xff]
  %v1645 = vld [vmem:[%s7 + $0x160] sm:$0xff]
  %v1646 = vld [vmem:[%s7 + $0x168] sm:$0xff]
  %v1647 = vld [vmem:[%s7 + $0x170] sm:$0xff]
  %v1648 = vld [vmem:[%s7 + $0x178] sm:$0xff]
  %1649 = vmatpush.msra.mxu0 %v1646
  %1650 = vmatpush.msra.mxu0 %v1643
  %1651 = vmatpush.msra.mxu0 %v1640
  %1652 = vmatpush.msra.mxu0 %v1637
  %1653 = vmatpush.msra.mxu0 %v1634
  %1654 = vmatpush.msra.mxu0 %v1631
  %1655 = vmatpush.msra.mxu0 %v1628
  %1656 = vmatpush.msra.mxu0 %v1625
  %1657 = vmatpush.msra.mxu0 %v1622
  %1658 = vmatpush.msra.mxu0 %v1619
  %1659 = vmatpush.msra.mxu0 %v1616
  %1660 = vmatpush.msra.mxu0 %v1613
  %1661 = vmatpush.msra.mxu0 %v1610
  %1662 = vmatpush.msra.mxu0 %v1607
  %1663 = vmatpush.msra.mxu0 %v1604
  %1664 = vmatpush.msra.mxu0 %v1601
  %1665 = vmatmul.f32.gmra.mxu0 %v1390
  %v1666 = vpop.f32.mrf.mxu0
  %v1667 = vadd.f32 0.0, %v1666
  %1668 = vmatmul.f32.gmra.mxu0 %v1391
  %v1669 = vpop.f32.mrf.mxu0
  %v1670 = vadd.f32 0.0, %v1669
  %1671 = vmatmul.f32.gmra.mxu0 %v1392
  %v1672 = vpop.f32.mrf.mxu0
  %v1673 = vadd.f32 0.0, %v1672
  %1674 = vmatmul.f32.gmra.mxu0 %v1393
  %v1675 = vpop.f32.mrf.mxu0
  %v1676 = vadd.f32 0.0, %v1675
  %1677 = vmatmul.f32.gmra.mxu0 %v1394
  %v1678 = vpop.f32.mrf.mxu0
  %v1679 = vadd.f32 0.0, %v1678
  %1680 = vmatmul.f32.gmra.mxu0 %v1395
  %v1681 = vpop.f32.mrf.mxu0
  %v1682 = vadd.f32 0.0, %v1681
  %1683 = vmatmul.f32.gmra.mxu0 %v1396
  %v1684 = vpop.f32.mrf.mxu0
  %v1685 = vadd.f32 0.0, %v1684
  %1686 = vmatmul.f32.gmra.mxu0 %v1397
  %v1687 = vpop.f32.mrf.mxu0
  %v1688 = vadd.f32 0.0, %v1687
  %1689 = vdwg.mxu0
  %1690 = vmatpush.msra.mxu0 %v1647
  %1691 = vmatpush.msra.mxu0 %v1644
  %1692 = vmatpush.msra.mxu0 %v1641
  %1693 = vmatpush.msra.mxu0 %v1638
  %1694 = vmatpush.msra.mxu0 %v1635
  %1695 = vmatpush.msra.mxu0 %v1632
  %1696 = vmatpush.msra.mxu0 %v1629
  %1697 = vmatpush.msra.mxu0 %v1626
  %1698 = vmatpush.msra.mxu0 %v1623
  %1699 = vmatpush.msra.mxu0 %v1620
  %1700 = vmatpush.msra.mxu0 %v1617
  %1701 = vmatpush.msra.mxu0 %v1614
  %1702 = vmatpush.msra.mxu0 %v1611
  %1703 = vmatpush.msra.mxu0 %v1608
  %1704 = vmatpush.msra.mxu0 %v1605
  %1705 = vmatpush.msra.mxu0 %v1602
  %1706 = vmatmul.f32.gmra.mxu0 %v1390
  %v1707 = vpop.f32.mrf.mxu0
  %v1708 = vadd.f32 0.0, %v1707
  %1709 = vmatmul.f32.gmra.mxu0 %v1391
  %v1710 = vpop.f32.mrf.mxu0
  %v1711 = vadd.f32 0.0, %v1710
  %1712 = vmatmul.f32.gmra.mxu0 %v1392
  %v1713 = vpop.f32.mrf.mxu0
  %v1714 = vadd.f32 0.0, %v1713
  %1715 = vmatmul.f32.gmra.mxu0 %v1393
  %v1716 = vpop.f32.mrf.mxu0
  %v1717 = vadd.f32 0.0, %v1716
  %1718 = vmatmul.f32.gmra.mxu0 %v1394
  %v1719 = vpop.f32.mrf.mxu0
  %v1720 = vadd.f32 0.0, %v1719
  %1721 = vmatmul.f32.gmra.mxu0 %v1395
  %v1722 = vpop.f32.mrf.mxu0
  %v1723 = vadd.f32 0.0, %v1722
  %1724 = vmatmul.f32.gmra.mxu0 %v1396
  %v1725 = vpop.f32.mrf.mxu0
  %v1726 = vadd.f32 0.0, %v1725
  %1727 = vmatmul.f32.gmra.mxu0 %v1397
  %v1728 = vpop.f32.mrf.mxu0
  %v1729 = vadd.f32 0.0, %v1728
  %1730 = vdwg.mxu0
  %1731 = vmatpush.msra.mxu0 %v1648
  %1732 = vmatpush.msra.mxu0 %v1645
  %1733 = vmatpush.msra.mxu0 %v1642
  %1734 = vmatpush.msra.mxu0 %v1639
  %1735 = vmatpush.msra.mxu0 %v1636
  %1736 = vmatpush.msra.mxu0 %v1633
  %1737 = vmatpush.msra.mxu0 %v1630
  %1738 = vmatpush.msra.mxu0 %v1627
  %1739 = vmatpush.msra.mxu0 %v1624
  %1740 = vmatpush.msra.mxu0 %v1621
  %1741 = vmatpush.msra.mxu0 %v1618
  %1742 = vmatpush.msra.mxu0 %v1615
  %1743 = vmatpush.msra.mxu0 %v1612
  %1744 = vmatpush.msra.mxu0 %v1609
  %1745 = vmatpush.msra.mxu0 %v1606
  %1746 = vmatpush.msra.mxu0 %v1603
  %1747 = vmatmul.f32.gmra.mxu0 %v1390
  %v1748 = vpop.f32.mrf.mxu0
  %v1749 = vadd.f32 0.0, %v1748
  %1750 = vmatmul.f32.gmra.mxu0 %v1391
  %v1751 = vpop.f32.mrf.mxu0
  %v1752 = vadd.f32 0.0, %v1751
  %1753 = vmatmul.f32.gmra.mxu0 %v1392
  %v1754 = vpop.f32.mrf.mxu0
  %v1755 = vadd.f32 0.0, %v1754
  %1756 = vmatmul.f32.gmra.mxu0 %v1393
  %v1757 = vpop.f32.mrf.mxu0
  %v1758 = vadd.f32 0.0, %v1757
  %1759 = vmatmul.f32.gmra.mxu0 %v1394
  %v1760 = vpop.f32.mrf.mxu0
  %v1761 = vadd.f32 0.0, %v1760
  %1762 = vmatmul.f32.gmra.mxu0 %v1395
  %v1763 = vpop.f32.mrf.mxu0
  %v1764 = vadd.f32 0.0, %v1763
  %1765 = vmatmul.f32.gmra.mxu0 %v1396
  %v1766 = vpop.f32.mrf.mxu0
  %v1767 = vadd.f32 0.0, %v1766
  %1768 = vmatmul.f32.gmra.mxu0 %v1397
  %v1769 = vpop.f32.mrf.mxu0
  %v1770 = vadd.f32 0.0, %v1769
  %1771 = vdwg.mxu0
  %1772 = vst [vmem:[#allocation3] sm:$0xff] %v1667
  %1773 = vst [vmem:[#allocation3 + $0x8] sm:$0xff] %v1708
  %1774 = vst [vmem:[#allocation3 + $0x10] sm:$0xff] %v1749
  %1775 = vst [vmem:[#allocation3 + $0x18] sm:$0xff] %v1670
  %1776 = vst [vmem:[#allocation3 + $0x20] sm:$0xff] %v1711
  %1777 = vst [vmem:[#allocation3 + $0x28] sm:$0xff] %v1752
  %1778 = vst [vmem:[#allocation3 + $0x30] sm:$0xff] %v1673
  %1779 = vst [vmem:[#allocation3 + $0x38] sm:$0xff] %v1714
  %1780 = vst [vmem:[#allocation3 + $0x40] sm:$0xff] %v1755
  %1781 = vst [vmem:[#allocation3 + $0x48] sm:$0xff] %v1676
  %1782 = vst [vmem:[#allocation3 + $0x50] sm:$0xff] %v1717
  %1783 = vst [vmem:[#allocation3 + $0x58] sm:$0xff] %v1758
  %1784 = vst [vmem:[#allocation3 + $0x60] sm:$0xff] %v1679
  %1785 = vst [vmem:[#allocation3 + $0x68] sm:$0xff] %v1720
  %1786 = vst [vmem:[#allocation3 + $0x70] sm:$0xff] %v1761
  %1787 = vst [vmem:[#allocation3 + $0x78] sm:$0xff] %v1682
  %1788 = vst [vmem:[#allocation3 + $0x80] sm:$0xff] %v1723
  %1789 = vst [vmem:[#allocation3 + $0x88] sm:$0xff] %v1764
  %1790 = vst [vmem:[#allocation3 + $0x90] sm:$0xff] %v1685
  %1791 = vst [vmem:[#allocation3 + $0x98] sm:$0xff] %v1726
  %1792 = vst [vmem:[#allocation3 + $0xa0] sm:$0xff] %v1767
  %1793 = vst [vmem:[#allocation3 + $0xa8] sm:$0xff] %v1688
  %1794 = vst [vmem:[#allocation3 + $0xb0] sm:$0xff] %v1729
  %1795 = vst [vmem:[#allocation3 + $0xb8] sm:$0xff] %v1770
  %v1796 = vld [vmem:[%s8] sm:$0xff]
  %v1797 = vld [vmem:[%s8 + $0x8] sm:$0xff]
  %v1798 = vld [vmem:[%s8 + $0x10] sm:$0xff]
  %v1799 = vld [vmem:[%s8 + $0x18] sm:$0xff]
  %v1800 = vld [vmem:[%s8 + $0x20] sm:$0xff]
  %v1801 = vld [vmem:[%s8 + $0x28] sm:$0xff]
  %v1802 = vld [vmem:[%s8 + $0x30] sm:$0xff]
  %v1803 = vld [vmem:[%s8 + $0x38] sm:$0xff]
  %v1804 = vld [vmem:[%s8 + $0x40] sm:$0xff]
  %v1805 = vld [vmem:[%s8 + $0x48] sm:$0xff]
  %v1806 = vld [vmem:[%s8 + $0x50] sm:$0xff]
  %v1807 = vld [vmem:[%s8 + $0x58] sm:$0xff]
  %v1808 = vld [vmem:[%s8 + $0x60] sm:$0xff]
  %v1809 = vld [vmem:[%s8 + $0x68] sm:$0xff]
  %v1810 = vld [vmem:[%s8 + $0x70] sm:$0xff]
  %v1811 = vld [vmem:[%s8 + $0x78] sm:$0xff]
  %v1812 = vld [vmem:[%s8 + $0x80] sm:$0xff]
  %v1813 = vld [vmem:[%s8 + $0x88] sm:$0xff]
  %v1814 = vld [vmem:[%s8 + $0x90] sm:$0xff]
  %v1815 = vld [vmem:[%s8 + $0x98] sm:$0xff]
  %v1816 = vld [vmem:[%s8 + $0xa0] sm:$0xff]
  %v1817 = vld [vmem:[%s8 + $0xa8] sm:$0xff]
  %v1818 = vld [vmem:[%s8 + $0xb0] sm:$0xff]
  %v1819 = vld [vmem:[%s8 + $0xb8] sm:$0xff]
  %v1820 = vld [vmem:[%s8 + $0xc0] sm:$0xff]
  %v1821 = vld [vmem:[%s8 + $0xc8] sm:$0xff]
  %v1822 = vld [vmem:[%s8 + $0xd0] sm:$0xff]
  %v1823 = vld [vmem:[%s8 + $0xd8] sm:$0xff]
  %v1824 = vld [vmem:[%s8 + $0xe0] sm:$0xff]
  %v1825 = vld [vmem:[%s8 + $0xe8] sm:$0xff]
  %v1826 = vld [vmem:[%s8 + $0xf0] sm:$0xff]
  %v1827 = vld [vmem:[%s8 + $0xf8] sm:$0xff]
  %v1828 = vld [vmem:[%s8 + $0x100] sm:$0xff]
  %v1829 = vld [vmem:[%s8 + $0x108] sm:$0xff]
  %v1830 = vld [vmem:[%s8 + $0x110] sm:$0xff]
  %v1831 = vld [vmem:[%s8 + $0x118] sm:$0xff]
  %v1832 = vld [vmem:[%s8 + $0x120] sm:$0xff]
  %v1833 = vld [vmem:[%s8 + $0x128] sm:$0xff]
  %v1834 = vld [vmem:[%s8 + $0x130] sm:$0xff]
  %v1835 = vld [vmem:[%s8 + $0x138] sm:$0xff]
  %v1836 = vld [vmem:[%s8 + $0x140] sm:$0xff]
  %v1837 = vld [vmem:[%s8 + $0x148] sm:$0xff]
  %v1838 = vld [vmem:[%s8 + $0x150] sm:$0xff]
  %v1839 = vld [vmem:[%s8 + $0x158] sm:$0xff]
  %v1840 = vld [vmem:[%s8 + $0x160] sm:$0xff]
  %v1841 = vld [vmem:[%s8 + $0x168] sm:$0xff]
  %v1842 = vld [vmem:[%s8 + $0x170] sm:$0xff]
  %v1843 = vld [vmem:[%s8 + $0x178] sm:$0xff]
  %v1844 = vld [vmem:[%s10] sm:$0x1]
  %v1846 = vperm.slane %v1844, 0
  %v1848 = vld [vmem:[#allocation2] sm:$0xff]
  %v1849 = vld [vmem:[#allocation2 + $0x8] sm:$0xff]
  %v1850 = vld [vmem:[#allocation2 + $0x10] sm:$0xff]
  %v1851 = vld [vmem:[#allocation3 + $0xa8] sm:$0xff]
  %v1852 = vld [vmem:[#allocation3 + $0xb0] sm:$0xff]
  %v1853 = vld [vmem:[#allocation3 + $0xb8] sm:$0xff]
  %v1854 = vadd.f32 %v1848, %v1851
  %v1855 = vadd.f32 %v1849, %v1852
  %v1856 = vadd.f32 %v1850, %v1853
  %1857 = vmatpush.msra.mxu0 %v1841
  %1858 = vmatpush.msra.mxu0 %v1838
  %1859 = vmatpush.msra.mxu0 %v1835
  %1860 = vmatpush.msra.mxu0 %v1832
  %1861 = vmatpush.msra.mxu0 %v1829
  %1862 = vmatpush.msra.mxu0 %v1826
  %1863 = vmatpush.msra.mxu0 %v1823
  %1864 = vmatpush.msra.mxu0 %v1820
  %1865 = vmatpush.msra.mxu0 %v1817
  %1866 = vmatpush.msra.mxu0 %v1814
  %1867 = vmatpush.msra.mxu0 %v1811
  %1868 = vmatpush.msra.mxu0 %v1808
  %1869 = vmatpush.msra.mxu0 %v1805
  %1870 = vmatpush.msra.mxu0 %v1802
  %1871 = vmatpush.msra.mxu0 %v1799
  %1872 = vmatpush.msra.mxu0 %v1796
  %1873 = vmatmul.f32.gmra.mxu0 0.0
  %v1874 = vpop.f32.mrf.mxu0
  %v1875 = vadd.f32 0.0, %v1874
  %1876 = vdwg.mxu0
  %1877 = vmatpush.msra.mxu0 %v1842
  %1878 = vmatpush.msra.mxu0 %v1839
  %1879 = vmatpush.msra.mxu0 %v1836
  %1880 = vmatpush.msra.mxu0 %v1833
  %1881 = vmatpush.msra.mxu0 %v1830
  %1882 = vmatpush.msra.mxu0 %v1827
  %1883 = vmatpush.msra.mxu0 %v1824
  %1884 = vmatpush.msra.mxu0 %v1821
  %1885 = vmatpush.msra.mxu0 %v1818
  %1886 = vmatpush.msra.mxu0 %v1815
  %1887 = vmatpush.msra.mxu0 %v1812
  %1888 = vmatpush.msra.mxu0 %v1809
  %1889 = vmatpush.msra.mxu0 %v1806
  %1890 = vmatpush.msra.mxu0 %v1803
  %1891 = vmatpush.msra.mxu0 %v1800
  %1892 = vmatpush.msra.mxu0 %v1797
  %1893 = vmatmul.f32.gmra.mxu0 0.0
  %v1894 = vpop.f32.mrf.mxu0
  %v1895 = vadd.f32 0.0, %v1894
  %1896 = vdwg.mxu0
  %1897 = vmatpush.msra.mxu0 %v1843
  %1898 = vmatpush.msra.mxu0 %v1840
  %1899 = vmatpush.msra.mxu0 %v1837
  %1900 = vmatpush.msra.mxu0 %v1834
  %1901 = vmatpush.msra.mxu0 %v1831
  %1902 = vmatpush.msra.mxu0 %v1828
  %1903 = vmatpush.msra.mxu0 %v1825
  %1904 = vmatpush.msra.mxu0 %v1822
  %1905 = vmatpush.msra.mxu0 %v1819
  %1906 = vmatpush.msra.mxu0 %v1816
  %1907 = vmatpush.msra.mxu0 %v1813
  %1908 = vmatpush.msra.mxu0 %v1810
  %1909 = vmatpush.msra.mxu0 %v1807
  %1910 = vmatpush.msra.mxu0 %v1804
  %1911 = vmatpush.msra.mxu0 %v1801
  %1912 = vmatpush.msra.mxu0 %v1798
  %1913 = vmatmul.f32.gmra.mxu0 0.0
  %v1914 = vpop.f32.mrf.mxu0
  %v1915 = vadd.f32 0.0, %v1914
  %1916 = vdwg.mxu0
  %v1917 = vadd.f32 %v1854, %v1875
  %v1918 = vxor.u32 %v1917, 2147483648
  %v1919 = vmul.f32 %v1918, 1.442695
  %v1920 = vpow.pop %v1919
  %v1921 = vadd.f32 %v1920, 1.0
  %v1922 = vrcp.pop %v1921
  %v1923 = vmul.f32 %v1921, %v1922
  %v1924 = vsub.f32 1.0, %v1923
  %v1925 = vmul.f32 %v1922, %v1924
  %v1926 = vadd.f32 %v1922, %v1925
  %vm1927 = vweird.f32 %v1921
  %vm1928 = vweird.f32 %v1922
  %vm1929 = vmor %vm1927, %vm1928
  %v1930 = vsel %vm1929, %v1922, %v1926
  %v1931 = vand.u32 2147483647, %v1921
  %vm1932 = vcmp.eq.f32.partialorder %v1931, 8.507059e+37
  %v1933 = vand.u32 %v1921, 2147483648
  %v1934 = vor.u32 1.1754944e-38, %v1933
  %v1935 = vsel %vm1932, %v1934, %v1930
  %v1936 = vmul.f32 1.0, %v1935
  %v1937 = vadd.f32 %v1855, %v1895
  %v1938 = vxor.u32 %v1937, 2147483648
  %v1939 = vmul.f32 %v1938, 1.442695
  %v1940 = vpow.pop %v1939
  %v1941 = vadd.f32 %v1940, 1.0
  %v1942 = vrcp.pop %v1941
  %v1943 = vmul.f32 %v1941, %v1942
  %v1944 = vsub.f32 1.0, %v1943
  %v1945 = vmul.f32 %v1942, %v1944
  %v1946 = vadd.f32 %v1942, %v1945
  %vm1947 = vweird.f32 %v1941
  %vm1948 = vweird.f32 %v1942
  %vm1949 = vmor %vm1947, %vm1948
  %v1950 = vsel %vm1949, %v1942, %v1946
  %v1951 = vand.u32 2147483647, %v1941
  %vm1952 = vcmp.eq.f32.partialorder %v1951, 8.507059e+37
  %v1953 = vand.u32 %v1941, 2147483648
  %v1954 = vor.u32 1.1754944e-38, %v1953
  %v1955 = vsel %vm1952, %v1954, %v1950
  %v1956 = vmul.f32 1.0, %v1955
  %v1957 = vadd.f32 %v1915, %v1846
  %v1958 = vmul.f32 %v1936, %v1957
  %v1959 = vadd.f32 %v1856, %v1958
  %v1960 = vtanh.pop %v1959
  %v1961 = vsub.f32 1.0, %v1956
  %v1962 = vmul.f32 %v1961, %v1960
  %v1963 = vmul.f32 %v1956, 0.0
  %v1964 = vadd.f32 %v1962, %v1963
  %1965 = vst [vmem:[#allocation4] sm:$0xff] %v1964
  %v1966 = vld [vmem:[#allocation2 + $0x18] sm:$0xff]
  %v1967 = vld [vmem:[#allocation2 + $0x20] sm:$0xff]
  %v1968 = vld [vmem:[#allocation2 + $0x28] sm:$0xff]
  %v1969 = vld [vmem:[#allocation3 + $0x90] sm:$0xff]
  %v1970 = vld [vmem:[#allocation3 + $0x98] sm:$0xff]
  %v1971 = vld [vmem:[#allocation3 + $0xa0] sm:$0xff]
  %v1972 = vadd.f32 %v1966, %v1969
  %v1973 = vadd.f32 %v1967, %v1970
  %v1974 = vadd.f32 %v1968, %v1971
  %1975 = vmatpush.msra.mxu0 %v1841
  %1976 = vmatpush.msra.mxu0 %v1838
  %1977 = vmatpush.msra.mxu0 %v1835
  %1978 = vmatpush.msra.mxu0 %v1832
  %1979 = vmatpush.msra.mxu0 %v1829
  %1980 = vmatpush.msra.mxu0 %v1826
  %1981 = vmatpush.msra.mxu0 %v1823
  %1982 = vmatpush.msra.mxu0 %v1820
  %1983 = vmatpush.msra.mxu0 %v1817
  %1984 = vmatpush.msra.mxu0 %v1814
  %1985 = vmatpush.msra.mxu0 %v1811
  %1986 = vmatpush.msra.mxu0 %v1808
  %1987 = vmatpush.msra.mxu0 %v1805
  %1988 = vmatpush.msra.mxu0 %v1802
  %1989 = vmatpush.msra.mxu0 %v1799
  %1990 = vmatpush.msra.mxu0 %v1796
  %1991 = vmatmul.f32.gmra.mxu0 %v1964
  %v1992 = vpop.f32.mrf.mxu0
  %v1993 = vadd.f32 0.0, %v1992
  %1994 = vdwg.mxu0
  %1995 = vmatpush.msra.mxu0 %v1842
  %1996 = vmatpush.msra.mxu0 %v1839
  %1997 = vmatpush.msra.mxu0 %v1836
  %1998 = vmatpush.msra.mxu0 %v1833
  %1999 = vmatpush.msra.mxu0 %v1830
  %2000 = vmatpush.msra.mxu0 %v1827
  %2001 = vmatpush.msra.mxu0 %v1824
  %2002 = vmatpush.msra.mxu0 %v1821
  %2003 = vmatpush.msra.mxu0 %v1818
  %2004 = vmatpush.msra.mxu0 %v1815
  %2005 = vmatpush.msra.mxu0 %v1812
  %2006 = vmatpush.msra.mxu0 %v1809
  %2007 = vmatpush.msra.mxu0 %v1806
  %2008 = vmatpush.msra.mxu0 %v1803
  %2009 = vmatpush.msra.mxu0 %v1800
  %2010 = vmatpush.msra.mxu0 %v1797
  %2011 = vmatmul.f32.gmra.mxu0 %v1964
  %v2012 = vpop.f32.mrf.mxu0
  %v2013 = vadd.f32 0.0, %v2012
  %2014 = vdwg.mxu0
  %2015 = vmatpush.msra.mxu0 %v1843
  %2016 = vmatpush.msra.mxu0 %v1840
  %2017 = vmatpush.msra.mxu0 %v1837
  %2018 = vmatpush.msra.mxu0 %v1834
  %2019 = vmatpush.msra.mxu0 %v1831
  %2020 = vmatpush.msra.mxu0 %v1828
  %2021 = vmatpush.msra.mxu0 %v1825
  %2022 = vmatpush.msra.mxu0 %v1822
  %2023 = vmatpush.msra.mxu0 %v1819
  %2024 = vmatpush.msra.mxu0 %v1816
  %2025 = vmatpush.msra.mxu0 %v1813
  %2026 = vmatpush.msra.mxu0 %v1810
  %2027 = vmatpush.msra.mxu0 %v1807
  %2028 = vmatpush.msra.mxu0 %v1804
  %2029 = vmatpush.msra.mxu0 %v1801
  %2030 = vmatpush.msra.mxu0 %v1798
  %2031 = vmatmul.f32.gmra.mxu0 %v1964
  %v2032 = vpop.f32.mrf.mxu0
  %v2033 = vadd.f32 0.0, %v2032
  %2034 = vdwg.mxu0
  %v2035 = vadd.f32 %v1972, %v1993
  %v2036 = vxor.u32 %v2035, 2147483648
  %v2037 = vmul.f32 %v2036, 1.442695
  %v2038 = vpow.pop %v2037
  %v2039 = vadd.f32 %v2038, 1.0
  %v2040 = vrcp.pop %v2039
  %v2041 = vmul.f32 %v2039, %v2040
  %v2042 = vsub.f32 1.0, %v2041
  %v2043 = vmul.f32 %v2040, %v2042
  %v2044 = vadd.f32 %v2040, %v2043
  %vm2045 = vweird.f32 %v2039
  %vm2046 = vweird.f32 %v2040
  %vm2047 = vmor %vm2045, %vm2046
  %v2048 = vsel %vm2047, %v2040, %v2044
  %v2049 = vand.u32 2147483647, %v2039
  %vm2050 = vcmp.eq.f32.partialorder %v2049, 8.507059e+37
  %v2051 = vand.u32 %v2039, 2147483648
  %v2052 = vor.u32 1.1754944e-38, %v2051
  %v2053 = vsel %vm2050, %v2052, %v2048
  %v2054 = vmul.f32 1.0, %v2053
  %v2055 = vadd.f32 %v1973, %v2013
  %v2056 = vxor.u32 %v2055, 2147483648
  %v2057 = vmul.f32 %v2056, 1.442695
  %v2058 = vpow.pop %v2057
  %v2059 = vadd.f32 %v2058, 1.0
  %v2060 = vrcp.pop %v2059
  %v2061 = vmul.f32 %v2059, %v2060
  %v2062 = vsub.f32 1.0, %v2061
  %v2063 = vmul.f32 %v2060, %v2062
  %v2064 = vadd.f32 %v2060, %v2063
  %vm2065 = vweird.f32 %v2059
  %vm2066 = vweird.f32 %v2060
  %vm2067 = vmor %vm2065, %vm2066
  %v2068 = vsel %vm2067, %v2060, %v2064
  %v2069 = vand.u32 2147483647, %v2059
  %vm2070 = vcmp.eq.f32.partialorder %v2069, 8.507059e+37
  %v2071 = vand.u32 %v2059, 2147483648
  %v2072 = vor.u32 1.1754944e-38, %v2071
  %v2073 = vsel %vm2070, %v2072, %v2068
  %v2074 = vmul.f32 1.0, %v2073
  %v2075 = vadd.f32 %v2033, %v1846
  %v2076 = vmul.f32 %v2054, %v2075
  %v2077 = vadd.f32 %v1974, %v2076
  %v2078 = vtanh.pop %v2077
  %v2079 = vsub.f32 1.0, %v2074
  %v2080 = vmul.f32 %v2079, %v2078
  %v2081 = vmul.f32 %v2074, %v1964
  %v2082 = vadd.f32 %v2080, %v2081
  %2083 = vst [vmem:[#allocation4 + $0x8] sm:$0xff] %v2082
  %v2084 = vld [vmem:[#allocation2 + $0x30] sm:$0xff]
  %v2085 = vld [vmem:[#allocation2 + $0x38] sm:$0xff]
  %v2086 = vld [vmem:[#allocation2 + $0x40] sm:$0xff]
  %v2087 = vld [vmem:[#allocation3 + $0x78] sm:$0xff]
  %v2088 = vld [vmem:[#allocation3 + $0x80] sm:$0xff]
  %v2089 = vld [vmem:[#allocation3 + $0x88] sm:$0xff]
  %v2090 = vadd.f32 %v2084, %v2087
  %v2091 = vadd.f32 %v2085, %v2088
  %v2092 = vadd.f32 %v2086, %v2089
  %2093 = vmatpush.msra.mxu0 %v1841
  %2094 = vmatpush.msra.mxu0 %v1838
  %2095 = vmatpush.msra.mxu0 %v1835
  %2096 = vmatpush.msra.mxu0 %v1832
  %2097 = vmatpush.msra.mxu0 %v1829
  %2098 = vmatpush.msra.mxu0 %v1826
  %2099 = vmatpush.msra.mxu0 %v1823
  %2100 = vmatpush.msra.mxu0 %v1820
  %2101 = vmatpush.msra.mxu0 %v1817
  %2102 = vmatpush.msra.mxu0 %v1814
  %2103 = vmatpush.msra.mxu0 %v1811
  %2104 = vmatpush.msra.mxu0 %v1808
  %2105 = vmatpush.msra.mxu0 %v1805
  %2106 = vmatpush.msra.mxu0 %v1802
  %2107 = vmatpush.msra.mxu0 %v1799
  %2108 = vmatpush.msra.mxu0 %v1796
  %2109 = vmatmul.f32.gmra.mxu0 %v2082
  %v2110 = vpop.f32.mrf.mxu0
  %v2111 = vadd.f32 0.0, %v2110
  %2112 = vdwg.mxu0
  %2113 = vmatpush.msra.mxu0 %v1842
  %2114 = vmatpush.msra.mxu0 %v1839
  %2115 = vmatpush.msra.mxu0 %v1836
  %2116 = vmatpush.msra.mxu0 %v1833
  %2117 = vmatpush.msra.mxu0 %v1830
  %2118 = vmatpush.msra.mxu0 %v1827
  %2119 = vmatpush.msra.mxu0 %v1824
  %2120 = vmatpush.msra.mxu0 %v1821
  %2121 = vmatpush.msra.mxu0 %v1818
  %2122 = vmatpush.msra.mxu0 %v1815
  %2123 = vmatpush.msra.mxu0 %v1812
  %2124 = vmatpush.msra.mxu0 %v1809
  %2125 = vmatpush.msra.mxu0 %v1806
  %2126 = vmatpush.msra.mxu0 %v1803
  %2127 = vmatpush.msra.mxu0 %v1800
  %2128 = vmatpush.msra.mxu0 %v1797
  %2129 = vmatmul.f32.gmra.mxu0 %v2082
  %v2130 = vpop.f32.mrf.mxu0
  %v2131 = vadd.f32 0.0, %v2130
  %2132 = vdwg.mxu0
  %2133 = vmatpush.msra.mxu0 %v1843
  %2134 = vmatpush.msra.mxu0 %v1840
  %2135 = vmatpush.msra.mxu0 %v1837
  %2136 = vmatpush.msra.mxu0 %v1834
  %2137 = vmatpush.msra.mxu0 %v1831
  %2138 = vmatpush.msra.mxu0 %v1828
  %2139 = vmatpush.msra.mxu0 %v1825
  %2140 = vmatpush.msra.mxu0 %v1822
  %2141 = vmatpush.msra.mxu0 %v1819
  %2142 = vmatpush.msra.mxu0 %v1816
  %2143 = vmatpush.msra.mxu0 %v1813
  %2144 = vmatpush.msra.mxu0 %v1810
  %2145 = vmatpush.msra.mxu0 %v1807
  %2146 = vmatpush.msra.mxu0 %v1804
  %2147 = vmatpush.msra.mxu0 %v1801
  %2148 = vmatpush.msra.mxu0 %v1798
  %2149 = vmatmul.f32.gmra.mxu0 %v2082
  %v2150 = vpop.f32.mrf.mxu0
  %v2151 = vadd.f32 0.0, %v2150
  %2152 = vdwg.mxu0
  %v2153 = vadd.f32 %v2090, %v2111
  %v2154 = vxor.u32 %v2153, 2147483648
  %v2155 = vmul.f32 %v2154, 1.442695
  %v2156 = vpow.pop %v2155
  %v2157 = vadd.f32 %v2156, 1.0
  %v2158 = vrcp.pop %v2157
  %v2159 = vmul.f32 %v2157, %v2158
  %v2160 = vsub.f32 1.0, %v2159
  %v2161 = vmul.f32 %v2158, %v2160
  %v2162 = vadd.f32 %v2158, %v2161
  %vm2163 = vweird.f32 %v2157
  %vm2164 = vweird.f32 %v2158
  %vm2165 = vmor %vm2163, %vm2164
  %v2166 = vsel %vm2165, %v2158, %v2162
  %v2167 = vand.u32 2147483647, %v2157
  %vm2168 = vcmp.eq.f32.partialorder %v2167, 8.507059e+37
  %v2169 = vand.u32 %v2157, 2147483648
  %v2170 = vor.u32 1.1754944e-38, %v2169
  %v2171 = vsel %vm2168, %v2170, %v2166
  %v2172 = vmul.f32 1.0, %v2171
  %v2173 = vadd.f32 %v2091, %v2131
  %v2174 = vxor.u32 %v2173, 2147483648
  %v2175 = vmul.f32 %v2174, 1.442695
  %v2176 = vpow.pop %v2175
  %v2177 = vadd.f32 %v2176, 1.0
  %v2178 = vrcp.pop %v2177
  %v2179 = vmul.f32 %v2177, %v2178
  %v2180 = vsub.f32 1.0, %v2179
  %v2181 = vmul.f32 %v2178, %v2180
  %v2182 = vadd.f32 %v2178, %v2181
  %vm2183 = vweird.f32 %v2177
  %vm2184 = vweird.f32 %v2178
  %vm2185 = vmor %vm2183, %vm2184
  %v2186 = vsel %vm2185, %v2178, %v2182
  %v2187 = vand.u32 2147483647, %v2177
  %vm2188 = vcmp.eq.f32.partialorder %v2187, 8.507059e+37
  %v2189 = vand.u32 %v2177, 2147483648
  %v2190 = vor.u32 1.1754944e-38, %v2189
  %v2191 = vsel %vm2188, %v2190, %v2186
  %v2192 = vmul.f32 1.0, %v2191
  %v2193 = vadd.f32 %v2151, %v1846
  %v2194 = vmul.f32 %v2172, %v2193
  %v2195 = vadd.f32 %v2092, %v2194
  %v2196 = vtanh.pop %v2195
  %v2197 = vsub.f32 1.0, %v2192
  %v2198 = vmul.f32 %v2197, %v2196
  %v2199 = vmul.f32 %v2192, %v2082
  %v2200 = vadd.f32 %v2198, %v2199
  %2201 = vst [vmem:[#allocation4 + $0x10] sm:$0xff] %v2200
  %v2202 = vld [vmem:[#allocation2 + $0x48] sm:$0xff]
  %v2203 = vld [vmem:[#allocation2 + $0x50] sm:$0xff]
  %v2204 = vld [vmem:[#allocation2 + $0x58] sm:$0xff]
  %v2205 = vld [vmem:[#allocation3 + $0x60] sm:$0xff]
  %v2206 = vld [vmem:[#allocation3 + $0x68] sm:$0xff]
  %v2207 = vld [vmem:[#allocation3 + $0x70] sm:$0xff]
  %v2208 = vadd.f32 %v2202, %v2205
  %v2209 = vadd.f32 %v2203, %v2206
  %v2210 = vadd.f32 %v2204, %v2207
  %2211 = vmatpush.msra.mxu0 %v1841
  %2212 = vmatpush.msra.mxu0 %v1838
  %2213 = vmatpush.msra.mxu0 %v1835
  %2214 = vmatpush.msra.mxu0 %v1832
  %2215 = vmatpush.msra.mxu0 %v1829
  %2216 = vmatpush.msra.mxu0 %v1826
  %2217 = vmatpush.msra.mxu0 %v1823
  %2218 = vmatpush.msra.mxu0 %v1820
  %2219 = vmatpush.msra.mxu0 %v1817
  %2220 = vmatpush.msra.mxu0 %v1814
  %2221 = vmatpush.msra.mxu0 %v1811
  %2222 = vmatpush.msra.mxu0 %v1808
  %2223 = vmatpush.msra.mxu0 %v1805
  %2224 = vmatpush.msra.mxu0 %v1802
  %2225 = vmatpush.msra.mxu0 %v1799
  %2226 = vmatpush.msra.mxu0 %v1796
  %2227 = vmatmul.f32.gmra.mxu0 %v2200
  %v2228 = vpop.f32.mrf.mxu0
  %v2229 = vadd.f32 0.0, %v2228
  %2230 = vdwg.mxu0
  %2231 = vmatpush.msra.mxu0 %v1842
  %2232 = vmatpush.msra.mxu0 %v1839
  %2233 = vmatpush.msra.mxu0 %v1836
  %2234 = vmatpush.msra.mxu0 %v1833
  %2235 = vmatpush.msra.mxu0 %v1830
  %2236 = vmatpush.msra.mxu0 %v1827
  %2237 = vmatpush.msra.mxu0 %v1824
  %2238 = vmatpush.msra.mxu0 %v1821
  %2239 = vmatpush.msra.mxu0 %v1818
  %2240 = vmatpush.msra.mxu0 %v1815
  %2241 = vmatpush.msra.mxu0 %v1812
  %2242 = vmatpush.msra.mxu0 %v1809
  %2243 = vmatpush.msra.mxu0 %v1806
  %2244 = vmatpush.msra.mxu0 %v1803
  %2245 = vmatpush.msra.mxu0 %v1800
  %2246 = vmatpush.msra.mxu0 %v1797
  %2247 = vmatmul.f32.gmra.mxu0 %v2200
  %v2248 = vpop.f32.mrf.mxu0
  %v2249 = vadd.f32 0.0, %v2248
  %2250 = vdwg.mxu0
  %2251 = vmatpush.msra.mxu0 %v1843
  %2252 = vmatpush.msra.mxu0 %v1840
  %2253 = vmatpush.msra.mxu0 %v1837
  %2254 = vmatpush.msra.mxu0 %v1834
  %2255 = vmatpush.msra.mxu0 %v1831
  %2256 = vmatpush.msra.mxu0 %v1828
  %2257 = vmatpush.msra.mxu0 %v1825
  %2258 = vmatpush.msra.mxu0 %v1822
  %2259 = vmatpush.msra.mxu0 %v1819
  %2260 = vmatpush.msra.mxu0 %v1816
  %2261 = vmatpush.msra.mxu0 %v1813
  %2262 = vmatpush.msra.mxu0 %v1810
  %2263 = vmatpush.msra.mxu0 %v1807
  %2264 = vmatpush.msra.mxu0 %v1804
  %2265 = vmatpush.msra.mxu0 %v1801
  %2266 = vmatpush.msra.mxu0 %v1798
  %2267 = vmatmul.f32.gmra.mxu0 %v2200
  %v2268 = vpop.f32.mrf.mxu0
  %v2269 = vadd.f32 0.0, %v2268
  %2270 = vdwg.mxu0
  %v2271 = vadd.f32 %v2208, %v2229
  %v2272 = vxor.u32 %v2271, 2147483648
  %v2273 = vmul.f32 %v2272, 1.442695
  %v2274 = vpow.pop %v2273
  %v2275 = vadd.f32 %v2274, 1.0
  %v2276 = vrcp.pop %v2275
  %v2277 = vmul.f32 %v2275, %v2276
  %v2278 = vsub.f32 1.0, %v2277
  %v2279 = vmul.f32 %v2276, %v2278
  %v2280 = vadd.f32 %v2276, %v2279
  %vm2281 = vweird.f32 %v2275
  %vm2282 = vweird.f32 %v2276
  %vm2283 = vmor %vm2281, %vm2282
  %v2284 = vsel %vm2283, %v2276, %v2280
  %v2285 = vand.u32 2147483647, %v2275
  %vm2286 = vcmp.eq.f32.partialorder %v2285, 8.507059e+37
  %v2287 = vand.u32 %v2275, 2147483648
  %v2288 = vor.u32 1.1754944e-38, %v2287
  %v2289 = vsel %vm2286, %v2288, %v2284
  %v2290 = vmul.f32 1.0, %v2289
  %v2291 = vadd.f32 %v2209, %v2249
  %v2292 = vxor.u32 %v2291, 2147483648
  %v2293 = vmul.f32 %v2292, 1.442695
  %v2294 = vpow.pop %v2293
  %v2295 = vadd.f32 %v2294, 1.0
  %v2296 = vrcp.pop %v2295
  %v2297 = vmul.f32 %v2295, %v2296
  %v2298 = vsub.f32 1.0, %v2297
  %v2299 = vmul.f32 %v2296, %v2298
  %v2300 = vadd.f32 %v2296, %v2299
  %vm2301 = vweird.f32 %v2295
  %vm2302 = vweird.f32 %v2296
  %vm2303 = vmor %vm2301, %vm2302
  %v2304 = vsel %vm2303, %v2296, %v2300
  %v2305 = vand.u32 2147483647, %v2295
  %vm2306 = vcmp.eq.f32.partialorder %v2305, 8.507059e+37
  %v2307 = vand.u32 %v2295, 2147483648
  %v2308 = vor.u32 1.1754944e-38, %v2307
  %v2309 = vsel %vm2306, %v2308, %v2304
  %v2310 = vmul.f32 1.0, %v2309
  %v2311 = vadd.f32 %v2269, %v1846
  %v2312 = vmul.f32 %v2290, %v2311
  %v2313 = vadd.f32 %v2210, %v2312
  %v2314 = vtanh.pop %v2313
  %v2315 = vsub.f32 1.0, %v2310
  %v2316 = vmul.f32 %v2315, %v2314
  %v2317 = vmul.f32 %v2310, %v2200
  %v2318 = vadd.f32 %v2316, %v2317
  %2319 = vst [vmem:[#allocation4 + $0x18] sm:$0xff] %v2318
  %v2320 = vld [vmem:[#allocation2 + $0x60] sm:$0xff]
  %v2321 = vld [vmem:[#allocation2 + $0x68] sm:$0xff]
  %v2322 = vld [vmem:[#allocation2 + $0x70] sm:$0xff]
  %v2323 = vld [vmem:[#allocation3 + $0x48] sm:$0xff]
  %v2324 = vld [vmem:[#allocation3 + $0x50] sm:$0xff]
  %v2325 = vld [vmem:[#allocation3 + $0x58] sm:$0xff]
  %v2326 = vadd.f32 %v2320, %v2323
  %v2327 = vadd.f32 %v2321, %v2324
  %v2328 = vadd.f32 %v2322, %v2325
  %2329 = vmatpush.msra.mxu0 %v1841
  %2330 = vmatpush.msra.mxu0 %v1838
  %2331 = vmatpush.msra.mxu0 %v1835
  %2332 = vmatpush.msra.mxu0 %v1832
  %2333 = vmatpush.msra.mxu0 %v1829
  %2334 = vmatpush.msra.mxu0 %v1826
  %2335 = vmatpush.msra.mxu0 %v1823
  %2336 = vmatpush.msra.mxu0 %v1820
  %2337 = vmatpush.msra.mxu0 %v1817
  %2338 = vmatpush.msra.mxu0 %v1814
  %2339 = vmatpush.msra.mxu0 %v1811
  %2340 = vmatpush.msra.mxu0 %v1808
  %2341 = vmatpush.msra.mxu0 %v1805
  %2342 = vmatpush.msra.mxu0 %v1802
  %2343 = vmatpush.msra.mxu0 %v1799
  %2344 = vmatpush.msra.mxu0 %v1796
  %2345 = vmatmul.f32.gmra.mxu0 %v2318
  %v2346 = vpop.f32.mrf.mxu0
  %v2347 = vadd.f32 0.0, %v2346
  %2348 = vdwg.mxu0
  %2349 = vmatpush.msra.mxu0 %v1842
  %2350 = vmatpush.msra.mxu0 %v1839
  %2351 = vmatpush.msra.mxu0 %v1836
  %2352 = vmatpush.msra.mxu0 %v1833
  %2353 = vmatpush.msra.mxu0 %v1830
  %2354 = vmatpush.msra.mxu0 %v1827
  %2355 = vmatpush.msra.mxu0 %v1824
  %2356 = vmatpush.msra.mxu0 %v1821
  %2357 = vmatpush.msra.mxu0 %v1818
  %2358 = vmatpush.msra.mxu0 %v1815
  %2359 = vmatpush.msra.mxu0 %v1812
  %2360 = vmatpush.msra.mxu0 %v1809
  %2361 = vmatpush.msra.mxu0 %v1806
  %2362 = vmatpush.msra.mxu0 %v1803
  %2363 = vmatpush.msra.mxu0 %v1800
  %2364 = vmatpush.msra.mxu0 %v1797
  %2365 = vmatmul.f32.gmra.mxu0 %v2318
  %v2366 = vpop.f32.mrf.mxu0
  %v2367 = vadd.f32 0.0, %v2366
  %2368 = vdwg.mxu0
  %2369 = vmatpush.msra.mxu0 %v1843
  %2370 = vmatpush.msra.mxu0 %v1840
  %2371 = vmatpush.msra.mxu0 %v1837
  %2372 = vmatpush.msra.mxu0 %v1834
  %2373 = vmatpush.msra.mxu0 %v1831
  %2374 = vmatpush.msra.mxu0 %v1828
  %2375 = vmatpush.msra.mxu0 %v1825
  %2376 = vmatpush.msra.mxu0 %v1822
  %2377 = vmatpush.msra.mxu0 %v1819
  %2378 = vmatpush.msra.mxu0 %v1816
  %2379 = vmatpush.msra.mxu0 %v1813
  %2380 = vmatpush.msra.mxu0 %v1810
  %2381 = vmatpush.msra.mxu0 %v1807
  %2382 = vmatpush.msra.mxu0 %v1804
  %2383 = vmatpush.msra.mxu0 %v1801
  %2384 = vmatpush.msra.mxu0 %v1798
  %2385 = vmatmul.f32.gmra.mxu0 %v2318
  %v2386 = vpop.f32.mrf.mxu0
  %v2387 = vadd.f32 0.0, %v2386
  %2388 = vdwg.mxu0
  %v2389 = vadd.f32 %v2326, %v2347
  %v2390 = vxor.u32 %v2389, 2147483648
  %v2391 = vmul.f32 %v2390, 1.442695
  %v2392 = vpow.pop %v2391
  %v2393 = vadd.f32 %v2392, 1.0
  %v2394 = vrcp.pop %v2393
  %v2395 = vmul.f32 %v2393, %v2394
  %v2396 = vsub.f32 1.0, %v2395
  %v2397 = vmul.f32 %v2394, %v2396
  %v2398 = vadd.f32 %v2394, %v2397
  %vm2399 = vweird.f32 %v2393
  %vm2400 = vweird.f32 %v2394
  %vm2401 = vmor %vm2399, %vm2400
  %v2402 = vsel %vm2401, %v2394, %v2398
  %v2403 = vand.u32 2147483647, %v2393
  %vm2404 = vcmp.eq.f32.partialorder %v2403, 8.507059e+37
  %v2405 = vand.u32 %v2393, 2147483648
  %v2406 = vor.u32 1.1754944e-38, %v2405
  %v2407 = vsel %vm2404, %v2406, %v2402
  %v2408 = vmul.f32 1.0, %v2407
  %v2409 = vadd.f32 %v2327, %v2367
  %v2410 = vxor.u32 %v2409, 2147483648
  %v2411 = vmul.f32 %v2410, 1.442695
  %v2412 = vpow.pop %v2411
  %v2413 = vadd.f32 %v2412, 1.0
  %v2414 = vrcp.pop %v2413
  %v2415 = vmul.f32 %v2413, %v2414
  %v2416 = vsub.f32 1.0, %v2415
  %v2417 = vmul.f32 %v2414, %v2416
  %v2418 = vadd.f32 %v2414, %v2417
  %vm2419 = vweird.f32 %v2413
  %vm2420 = vweird.f32 %v2414
  %vm2421 = vmor %vm2419, %vm2420
  %v2422 = vsel %vm2421, %v2414, %v2418
  %v2423 = vand.u32 2147483647, %v2413
  %vm2424 = vcmp.eq.f32.partialorder %v2423, 8.507059e+37
  %v2425 = vand.u32 %v2413, 2147483648
  %v2426 = vor.u32 1.1754944e-38, %v2425
  %v2427 = vsel %vm2424, %v2426, %v2422
  %v2428 = vmul.f32 1.0, %v2427
  %v2429 = vadd.f32 %v2387, %v1846
  %v2430 = vmul.f32 %v2408, %v2429
  %v2431 = vadd.f32 %v2328, %v2430
  %v2432 = vtanh.pop %v2431
  %v2433 = vsub.f32 1.0, %v2428
  %v2434 = vmul.f32 %v2433, %v2432
  %v2435 = vmul.f32 %v2428, %v2318
  %v2436 = vadd.f32 %v2434, %v2435
  %2437 = vst [vmem:[#allocation4 + $0x20] sm:$0xff] %v2436
  %v2438 = vld [vmem:[#allocation2 + $0x78] sm:$0xff]
  %v2439 = vld [vmem:[#allocation2 + $0x80] sm:$0xff]
  %v2440 = vld [vmem:[#allocation2 + $0x88] sm:$0xff]
  %v2441 = vld [vmem:[#allocation3 + $0x30] sm:$0xff]
  %v2442 = vld [vmem:[#allocation3 + $0x38] sm:$0xff]
  %v2443 = vld [vmem:[#allocation3 + $0x40] sm:$0xff]
  %v2444 = vadd.f32 %v2438, %v2441
  %v2445 = vadd.f32 %v2439, %v2442
  %v2446 = vadd.f32 %v2440, %v2443
  %2447 = vmatpush.msra.mxu0 %v1841
  %2448 = vmatpush.msra.mxu0 %v1838
  %2449 = vmatpush.msra.mxu0 %v1835
  %2450 = vmatpush.msra.mxu0 %v1832
  %2451 = vmatpush.msra.mxu0 %v1829
  %2452 = vmatpush.msra.mxu0 %v1826
  %2453 = vmatpush.msra.mxu0 %v1823
  %2454 = vmatpush.msra.mxu0 %v1820
  %2455 = vmatpush.msra.mxu0 %v1817
  %2456 = vmatpush.msra.mxu0 %v1814
  %2457 = vmatpush.msra.mxu0 %v1811
  %2458 = vmatpush.msra.mxu0 %v1808
  %2459 = vmatpush.msra.mxu0 %v1805
  %2460 = vmatpush.msra.mxu0 %v1802
  %2461 = vmatpush.msra.mxu0 %v1799
  %2462 = vmatpush.msra.mxu0 %v1796
  %2463 = vmatmul.f32.gmra.mxu0 %v2436
  %v2464 = vpop.f32.mrf.mxu0
  %v2465 = vadd.f32 0.0, %v2464
  %2466 = vdwg.mxu0
  %2467 = vmatpush.msra.mxu0 %v1842
  %2468 = vmatpush.msra.mxu0 %v1839
  %2469 = vmatpush.msra.mxu0 %v1836
  %2470 = vmatpush.msra.mxu0 %v1833
  %2471 = vmatpush.msra.mxu0 %v1830
  %2472 = vmatpush.msra.mxu0 %v1827
  %2473 = vmatpush.msra.mxu0 %v1824
  %2474 = vmatpush.msra.mxu0 %v1821
  %2475 = vmatpush.msra.mxu0 %v1818
  %2476 = vmatpush.msra.mxu0 %v1815
  %2477 = vmatpush.msra.mxu0 %v1812
  %2478 = vmatpush.msra.mxu0 %v1809
  %2479 = vmatpush.msra.mxu0 %v1806
  %2480 = vmatpush.msra.mxu0 %v1803
  %2481 = vmatpush.msra.mxu0 %v1800
  %2482 = vmatpush.msra.mxu0 %v1797
  %2483 = vmatmul.f32.gmra.mxu0 %v2436
  %v2484 = vpop.f32.mrf.mxu0
  %v2485 = vadd.f32 0.0, %v2484
  %2486 = vdwg.mxu0
  %2487 = vmatpush.msra.mxu0 %v1843
  %2488 = vmatpush.msra.mxu0 %v1840
  %2489 = vmatpush.msra.mxu0 %v1837
  %2490 = vmatpush.msra.mxu0 %v1834
  %2491 = vmatpush.msra.mxu0 %v1831
  %2492 = vmatpush.msra.mxu0 %v1828
  %2493 = vmatpush.msra.mxu0 %v1825
  %2494 = vmatpush.msra.mxu0 %v1822
  %2495 = vmatpush.msra.mxu0 %v1819
  %2496 = vmatpush.msra.mxu0 %v1816
  %2497 = vmatpush.msra.mxu0 %v1813
  %2498 = vmatpush.msra.mxu0 %v1810
  %2499 = vmatpush.msra.mxu0 %v1807
  %2500 = vmatpush.msra.mxu0 %v1804
  %2501 = vmatpush.msra.mxu0 %v1801
  %2502 = vmatpush.msra.mxu0 %v1798
  %2503 = vmatmul.f32.gmra.mxu0 %v2436
  %v2504 = vpop.f32.mrf.mxu0
  %v2505 = vadd.f32 0.0, %v2504
  %2506 = vdwg.mxu0
  %v2507 = vadd.f32 %v2444, %v2465
  %v2508 = vxor.u32 %v2507, 2147483648
  %v2509 = vmul.f32 %v2508, 1.442695
  %v2510 = vpow.pop %v2509
  %v2511 = vadd.f32 %v2510, 1.0
  %v2512 = vrcp.pop %v2511
  %v2513 = vmul.f32 %v2511, %v2512
  %v2514 = vsub.f32 1.0, %v2513
  %v2515 = vmul.f32 %v2512, %v2514
  %v2516 = vadd.f32 %v2512, %v2515
  %vm2517 = vweird.f32 %v2511
  %vm2518 = vweird.f32 %v2512
  %vm2519 = vmor %vm2517, %vm2518
  %v2520 = vsel %vm2519, %v2512, %v2516
  %v2521 = vand.u32 2147483647, %v2511
  %vm2522 = vcmp.eq.f32.partialorder %v2521, 8.507059e+37
  %v2523 = vand.u32 %v2511, 2147483648
  %v2524 = vor.u32 1.1754944e-38, %v2523
  %v2525 = vsel %vm2522, %v2524, %v2520
  %v2526 = vmul.f32 1.0, %v2525
  %v2527 = vadd.f32 %v2445, %v2485
  %v2528 = vxor.u32 %v2527, 2147483648
  %v2529 = vmul.f32 %v2528, 1.442695
  %v2530 = vpow.pop %v2529
  %v2531 = vadd.f32 %v2530, 1.0
  %v2532 = vrcp.pop %v2531
  %v2533 = vmul.f32 %v2531, %v2532
  %v2534 = vsub.f32 1.0, %v2533
  %v2535 = vmul.f32 %v2532, %v2534
  %v2536 = vadd.f32 %v2532, %v2535
  %vm2537 = vweird.f32 %v2531
  %vm2538 = vweird.f32 %v2532
  %vm2539 = vmor %vm2537, %vm2538
  %v2540 = vsel %vm2539, %v2532, %v2536
  %v2541 = vand.u32 2147483647, %v2531
  %vm2542 = vcmp.eq.f32.partialorder %v2541, 8.507059e+37
  %v2543 = vand.u32 %v2531, 2147483648
  %v2544 = vor.u32 1.1754944e-38, %v2543
  %v2545 = vsel %vm2542, %v2544, %v2540
  %v2546 = vmul.f32 1.0, %v2545
  %v2547 = vadd.f32 %v2505, %v1846
  %v2548 = vmul.f32 %v2526, %v2547
  %v2549 = vadd.f32 %v2446, %v2548
  %v2550 = vtanh.pop %v2549
  %v2551 = vsub.f32 1.0, %v2546
  %v2552 = vmul.f32 %v2551, %v2550
  %v2553 = vmul.f32 %v2546, %v2436
  %v2554 = vadd.f32 %v2552, %v2553
  %2555 = vst [vmem:[#allocation4 + $0x28] sm:$0xff] %v2554
  %v2556 = vld [vmem:[#allocation2 + $0x90] sm:$0xff]
  %v2557 = vld [vmem:[#allocation2 + $0x98] sm:$0xff]
  %v2558 = vld [vmem:[#allocation2 + $0xa0] sm:$0xff]
  %v2559 = vld [vmem:[#allocation3 + $0x18] sm:$0xff]
  %v2560 = vld [vmem:[#allocation3 + $0x20] sm:$0xff]
  %v2561 = vld [vmem:[#allocation3 + $0x28] sm:$0xff]
  %v2562 = vadd.f32 %v2556, %v2559
  %v2563 = vadd.f32 %v2557, %v2560
  %v2564 = vadd.f32 %v2558, %v2561
  %2565 = vmatpush.msra.mxu0 %v1841
  %2566 = vmatpush.msra.mxu0 %v1838
  %2567 = vmatpush.msra.mxu0 %v1835
  %2568 = vmatpush.msra.mxu0 %v1832
  %2569 = vmatpush.msra.mxu0 %v1829
  %2570 = vmatpush.msra.mxu0 %v1826
  %2571 = vmatpush.msra.mxu0 %v1823
  %2572 = vmatpush.msra.mxu0 %v1820
  %2573 = vmatpush.msra.mxu0 %v1817
  %2574 = vmatpush.msra.mxu0 %v1814
  %2575 = vmatpush.msra.mxu0 %v1811
  %2576 = vmatpush.msra.mxu0 %v1808
  %2577 = vmatpush.msra.mxu0 %v1805
  %2578 = vmatpush.msra.mxu0 %v1802
  %2579 = vmatpush.msra.mxu0 %v1799
  %2580 = vmatpush.msra.mxu0 %v1796
  %2581 = vmatmul.f32.gmra.mxu0 %v2554
  %v2582 = vpop.f32.mrf.mxu0
  %v2583 = vadd.f32 0.0, %v2582
  %2584 = vdwg.mxu0
  %2585 = vmatpush.msra.mxu0 %v1842
  %2586 = vmatpush.msra.mxu0 %v1839
  %2587 = vmatpush.msra.mxu0 %v1836
  %2588 = vmatpush.msra.mxu0 %v1833
  %2589 = vmatpush.msra.mxu0 %v1830
  %2590 = vmatpush.msra.mxu0 %v1827
  %2591 = vmatpush.msra.mxu0 %v1824
  %2592 = vmatpush.msra.mxu0 %v1821
  %2593 = vmatpush.msra.mxu0 %v1818
  %2594 = vmatpush.msra.mxu0 %v1815
  %2595 = vmatpush.msra.mxu0 %v1812
  %2596 = vmatpush.msra.mxu0 %v1809
  %2597 = vmatpush.msra.mxu0 %v1806
  %2598 = vmatpush.msra.mxu0 %v1803
  %2599 = vmatpush.msra.mxu0 %v1800
  %2600 = vmatpush.msra.mxu0 %v1797
  %2601 = vmatmul.f32.gmra.mxu0 %v2554
  %v2602 = vpop.f32.mrf.mxu0
  %v2603 = vadd.f32 0.0, %v2602
  %2604 = vdwg.mxu0
  %2605 = vmatpush.msra.mxu0 %v1843
  %2606 = vmatpush.msra.mxu0 %v1840
  %2607 = vmatpush.msra.mxu0 %v1837
  %2608 = vmatpush.msra.mxu0 %v1834
  %2609 = vmatpush.msra.mxu0 %v1831
  %2610 = vmatpush.msra.mxu0 %v1828
  %2611 = vmatpush.msra.mxu0 %v1825
  %2612 = vmatpush.msra.mxu0 %v1822
  %2613 = vmatpush.msra.mxu0 %v1819
  %2614 = vmatpush.msra.mxu0 %v1816
  %2615 = vmatpush.msra.mxu0 %v1813
  %2616 = vmatpush.msra.mxu0 %v1810
  %2617 = vmatpush.msra.mxu0 %v1807
  %2618 = vmatpush.msra.mxu0 %v1804
  %2619 = vmatpush.msra.mxu0 %v1801
  %2620 = vmatpush.msra.mxu0 %v1798
  %2621 = vmatmul.f32.gmra.mxu0 %v2554
  %v2622 = vpop.f32.mrf.mxu0
  %v2623 = vadd.f32 0.0, %v2622
  %2624 = vdwg.mxu0
  %v2625 = vadd.f32 %v2562, %v2583
  %v2626 = vxor.u32 %v2625, 2147483648
  %v2627 = vmul.f32 %v2626, 1.442695
  %v2628 = vpow.pop %v2627
  %v2629 = vadd.f32 %v2628, 1.0
  %v2630 = vrcp.pop %v2629
  %v2631 = vmul.f32 %v2629, %v2630
  %v2632 = vsub.f32 1.0, %v2631
  %v2633 = vmul.f32 %v2630, %v2632
  %v2634 = vadd.f32 %v2630, %v2633
  %vm2635 = vweird.f32 %v2629
  %vm2636 = vweird.f32 %v2630
  %vm2637 = vmor %vm2635, %vm2636
  %v2638 = vsel %vm2637, %v2630, %v2634
  %v2639 = vand.u32 2147483647, %v2629
  %vm2640 = vcmp.eq.f32.partialorder %v2639, 8.507059e+37
  %v2641 = vand.u32 %v2629, 2147483648
  %v2642 = vor.u32 1.1754944e-38, %v2641
  %v2643 = vsel %vm2640, %v2642, %v2638
  %v2644 = vmul.f32 1.0, %v2643
  %v2645 = vadd.f32 %v2563, %v2603
  %v2646 = vxor.u32 %v2645, 2147483648
  %v2647 = vmul.f32 %v2646, 1.442695
  %v2648 = vpow.pop %v2647
  %v2649 = vadd.f32 %v2648, 1.0
  %v2650 = vrcp.pop %v2649
  %v2651 = vmul.f32 %v2649, %v2650
  %v2652 = vsub.f32 1.0, %v2651
  %v2653 = vmul.f32 %v2650, %v2652
  %v2654 = vadd.f32 %v2650, %v2653
  %vm2655 = vweird.f32 %v2649
  %vm2656 = vweird.f32 %v2650
  %vm2657 = vmor %vm2655, %vm2656
  %v2658 = vsel %vm2657, %v2650, %v2654
  %v2659 = vand.u32 2147483647, %v2649
  %vm2660 = vcmp.eq.f32.partialorder %v2659, 8.507059e+37
  %v2661 = vand.u32 %v2649, 2147483648
  %v2662 = vor.u32 1.1754944e-38, %v2661
  %v2663 = vsel %vm2660, %v2662, %v2658
  %v2664 = vmul.f32 1.0, %v2663
  %v2665 = vadd.f32 %v2623, %v1846
  %v2666 = vmul.f32 %v2644, %v2665
  %v2667 = vadd.f32 %v2564, %v2666
  %v2668 = vtanh.pop %v2667
  %v2669 = vsub.f32 1.0, %v2664
  %v2670 = vmul.f32 %v2669, %v2668
  %v2671 = vmul.f32 %v2664, %v2554
  %v2672 = vadd.f32 %v2670, %v2671
  %2673 = vst [vmem:[#allocation4 + $0x30] sm:$0xff] %v2672
  %v2674 = vld [vmem:[#allocation2 + $0xa8] sm:$0xff]
  %v2675 = vld [vmem:[#allocation2 + $0xb0] sm:$0xff]
  %v2676 = vld [vmem:[#allocation2 + $0xb8] sm:$0xff]
  %v2677 = vld [vmem:[#allocation3] sm:$0xff]
  %v2678 = vld [vmem:[#allocation3 + $0x8] sm:$0xff]
  %v2679 = vld [vmem:[#allocation3 + $0x10] sm:$0xff]
  %v2680 = vadd.f32 %v2674, %v2677
  %v2681 = vadd.f32 %v2675, %v2678
  %v2682 = vadd.f32 %v2676, %v2679
  %2683 = vmatpush.msra.mxu0 %v1841
  %2684 = vmatpush.msra.mxu0 %v1838
  %2685 = vmatpush.msra.mxu0 %v1835
  %2686 = vmatpush.msra.mxu0 %v1832
  %2687 = vmatpush.msra.mxu0 %v1829
  %2688 = vmatpush.msra.mxu0 %v1826
  %2689 = vmatpush.msra.mxu0 %v1823
  %2690 = vmatpush.msra.mxu0 %v1820
  %2691 = vmatpush.msra.mxu0 %v1817
  %2692 = vmatpush.msra.mxu0 %v1814
  %2693 = vmatpush.msra.mxu0 %v1811
  %2694 = vmatpush.msra.mxu0 %v1808
  %2695 = vmatpush.msra.mxu0 %v1805
  %2696 = vmatpush.msra.mxu0 %v1802
  %2697 = vmatpush.msra.mxu0 %v1799
  %2698 = vmatpush.msra.mxu0 %v1796
  %2699 = vmatmul.f32.gmra.mxu0 %v2672
  %v2700 = vpop.f32.mrf.mxu0
  %v2701 = vadd.f32 0.0, %v2700
  %2702 = vdwg.mxu0
  %2703 = vmatpush.msra.mxu0 %v1842
  %2704 = vmatpush.msra.mxu0 %v1839
  %2705 = vmatpush.msra.mxu0 %v1836
  %2706 = vmatpush.msra.mxu0 %v1833
  %2707 = vmatpush.msra.mxu0 %v1830
  %2708 = vmatpush.msra.mxu0 %v1827
  %2709 = vmatpush.msra.mxu0 %v1824
  %2710 = vmatpush.msra.mxu0 %v1821
  %2711 = vmatpush.msra.mxu0 %v1818
  %2712 = vmatpush.msra.mxu0 %v1815
  %2713 = vmatpush.msra.mxu0 %v1812
  %2714 = vmatpush.msra.mxu0 %v1809
  %2715 = vmatpush.msra.mxu0 %v1806
  %2716 = vmatpush.msra.mxu0 %v1803
  %2717 = vmatpush.msra.mxu0 %v1800
  %2718 = vmatpush.msra.mxu0 %v1797
  %2719 = vmatmul.f32.gmra.mxu0 %v2672
  %v2720 = vpop.f32.mrf.mxu0
  %v2721 = vadd.f32 0.0, %v2720
  %2722 = vdwg.mxu0
  %2723 = vmatpush.msra.mxu0 %v1843
  %2724 = vmatpush.msra.mxu0 %v1840
  %2725 = vmatpush.msra.mxu0 %v1837
  %2726 = vmatpush.msra.mxu0 %v1834
  %2727 = vmatpush.msra.mxu0 %v1831
  %2728 = vmatpush.msra.mxu0 %v1828
  %2729 = vmatpush.msra.mxu0 %v1825
  %2730 = vmatpush.msra.mxu0 %v1822
  %2731 = vmatpush.msra.mxu0 %v1819
  %2732 = vmatpush.msra.mxu0 %v1816
  %2733 = vmatpush.msra.mxu0 %v1813
  %2734 = vmatpush.msra.mxu0 %v1810
  %2735 = vmatpush.msra.mxu0 %v1807
  %2736 = vmatpush.msra.mxu0 %v1804
  %2737 = vmatpush.msra.mxu0 %v1801
  %2738 = vmatpush.msra.mxu0 %v1798
  %2739 = vmatmul.f32.gmra.mxu0 %v2672
  %v2740 = vpop.f32.mrf.mxu0
  %v2741 = vadd.f32 0.0, %v2740
  %2742 = vdwg.mxu0
  %v2743 = vadd.f32 %v2680, %v2701
  %v2744 = vxor.u32 %v2743, 2147483648
  %v2745 = vmul.f32 %v2744, 1.442695
  %v2746 = vpow.pop %v2745
  %v2747 = vadd.f32 %v2746, 1.0
  %v2748 = vrcp.pop %v2747
  %v2749 = vmul.f32 %v2747, %v2748
  %v2750 = vsub.f32 1.0, %v2749
  %v2751 = vmul.f32 %v2748, %v2750
  %v2752 = vadd.f32 %v2748, %v2751
  %vm2753 = vweird.f32 %v2747
  %vm2754 = vweird.f32 %v2748
  %vm2755 = vmor %vm2753, %vm2754
  %v2756 = vsel %vm2755, %v2748, %v2752
  %v2757 = vand.u32 2147483647, %v2747
  %vm2758 = vcmp.eq.f32.partialorder %v2757, 8.507059e+37
  %v2759 = vand.u32 %v2747, 2147483648
  %v2760 = vor.u32 1.1754944e-38, %v2759
  %v2761 = vsel %vm2758, %v2760, %v2756
  %v2762 = vmul.f32 1.0, %v2761
  %v2763 = vadd.f32 %v2681, %v2721
  %v2764 = vxor.u32 %v2763, 2147483648
  %v2765 = vmul.f32 %v2764, 1.442695
  %v2766 = vpow.pop %v2765
  %v2767 = vadd.f32 %v2766, 1.0
  %v2768 = vrcp.pop %v2767
  %v2769 = vmul.f32 %v2767, %v2768
  %v2770 = vsub.f32 1.0, %v2769
  %v2771 = vmul.f32 %v2768, %v2770
  %v2772 = vadd.f32 %v2768, %v2771
  %vm2773 = vweird.f32 %v2767
  %vm2774 = vweird.f32 %v2768
  %vm2775 = vmor %vm2773, %vm2774
  %v2776 = vsel %vm2775, %v2768, %v2772
  %v2777 = vand.u32 2147483647, %v2767
  %vm2778 = vcmp.eq.f32.partialorder %v2777, 8.507059e+37
  %v2779 = vand.u32 %v2767, 2147483648
  %v2780 = vor.u32 1.1754944e-38, %v2779
  %v2781 = vsel %vm2778, %v2780, %v2776
  %v2782 = vmul.f32 1.0, %v2781
  %v2783 = vadd.f32 %v2741, %v1846
  %v2784 = vmul.f32 %v2762, %v2783
  %v2785 = vadd.f32 %v2682, %v2784
  %v2786 = vtanh.pop %v2785
  %v2787 = vsub.f32 1.0, %v2782
  %v2788 = vmul.f32 %v2787, %v2786
  %v2789 = vmul.f32 %v2782, %v2672
  %v2790 = vadd.f32 %v2788, %v2789
  %2791 = vst [vmem:[#allocation4 + $0x38] sm:$0xff] %v2790
  %v2792 = vld [vmem:[#allocation4 + $0x38] sm:$0xff]
  %v2793 = vld [vmem:[%s11] sm:$0xff]
  %v2794 = vld [vmem:[%s11 + $0x8] sm:$0xff]
  %v2795 = vld [vmem:[%s11 + $0x10] sm:$0xff]
  %v2796 = vld [vmem:[%s11 + $0x18] sm:$0xff]
  %v2797 = vld [vmem:[%s11 + $0x20] sm:$0xff]
  %v2798 = vld [vmem:[%s11 + $0x28] sm:$0xff]
  %v2799 = vld [vmem:[%s11 + $0x30] sm:$0xff]
  %v2800 = vld [vmem:[%s11 + $0x38] sm:$0xff]
  %v2801 = vld [vmem:[%s11 + $0x40] sm:$0xff]
  %v2802 = vld [vmem:[%s11 + $0x48] sm:$0xff]
  %v2803 = vld [vmem:[%s11 + $0x50] sm:$0xff]
  %v2804 = vld [vmem:[%s11 + $0x58] sm:$0xff]
  %v2805 = vld [vmem:[%s11 + $0x60] sm:$0xff]
  %v2806 = vld [vmem:[%s11 + $0x68] sm:$0xff]
  %v2807 = vld [vmem:[%s11 + $0x70] sm:$0xff]
  %v2808 = vld [vmem:[%s11 + $0x78] sm:$0xff]
  %v2809 = vld [vmem:[#allocation4] sm:$0xff]
  %v2810 = vld [vmem:[%s12] sm:$0xff]
  %v2811 = vld [vmem:[%s12 + $0x8] sm:$0xff]
  %v2812 = vld [vmem:[%s12 + $0x10] sm:$0xff]
  %v2813 = vld [vmem:[%s12 + $0x18] sm:$0xff]
  %v2814 = vld [vmem:[%s12 + $0x20] sm:$0xff]
  %v2815 = vld [vmem:[%s12 + $0x28] sm:$0xff]
  %v2816 = vld [vmem:[%s12 + $0x30] sm:$0xff]
  %v2817 = vld [vmem:[%s12 + $0x38] sm:$0xff]
  %v2818 = vld [vmem:[%s12 + $0x40] sm:$0xff]
  %v2819 = vld [vmem:[%s12 + $0x48] sm:$0xff]
  %v2820 = vld [vmem:[%s12 + $0x50] sm:$0xff]
  %v2821 = vld [vmem:[%s12 + $0x58] sm:$0xff]
  %v2822 = vld [vmem:[%s12 + $0x60] sm:$0xff]
  %v2823 = vld [vmem:[%s12 + $0x68] sm:$0xff]
  %v2824 = vld [vmem:[%s12 + $0x70] sm:$0xff]
  %v2825 = vld [vmem:[%s12 + $0x78] sm:$0xff]
  %2826 = vmatpush.msra.mxu0 %v2825
  %2827 = vmatpush.msra.mxu0 %v2824
  %2828 = vmatpush.msra.mxu0 %v2823
  %2829 = vmatpush.msra.mxu0 %v2822
  %2830 = vmatpush.msra.mxu0 %v2821
  %2831 = vmatpush.msra.mxu0 %v2820
  %2832 = vmatpush.msra.mxu0 %v2819
  %2833 = vmatpush.msra.mxu0 %v2818
  %2834 = vmatpush.msra.mxu0 %v2817
  %2835 = vmatpush.msra.mxu0 %v2816
  %2836 = vmatpush.msra.mxu0 %v2815
  %2837 = vmatpush.msra.mxu0 %v2814
  %2838 = vmatpush.msra.mxu0 %v2813
  %2839 = vmatpush.msra.mxu0 %v2812
  %2840 = vmatpush.msra.mxu0 %v2811
  %2841 = vmatpush.msra.mxu0 %v2810
  %2842 = vmatmul.f32.gmra.mxu0 %v2809
  %v2843 = vpop.f32.mrf.mxu0
  %v2844 = vadd.f32 0.0, %v2843
  %2845 = vdwg.mxu0
  %2846 = vmatpush.msra.mxu0 %v2808
  %2847 = vmatpush.msra.mxu0 %v2807
  %2848 = vmatpush.msra.mxu0 %v2806
  %2849 = vmatpush.msra.mxu0 %v2805
  %2850 = vmatpush.msra.mxu0 %v2804
  %2851 = vmatpush.msra.mxu0 %v2803
  %2852 = vmatpush.msra.mxu0 %v2802
  %2853 = vmatpush.msra.mxu0 %v2801
  %2854 = vmatpush.msra.mxu0 %v2800
  %2855 = vmatpush.msra.mxu0 %v2799
  %2856 = vmatpush.msra.mxu0 %v2798
  %2857 = vmatpush.msra.mxu0 %v2797
  %2858 = vmatpush.msra.mxu0 %v2796
  %2859 = vmatpush.msra.mxu0 %v2795
  %2860 = vmatpush.msra.mxu0 %v2794
  %2861 = vmatpush.msra.mxu0 %v2793
  %2862 = vmatmul.f32.gmra.mxu0 %v2792
  %v2863 = vpop.f32.mrf.mxu0
  %v2864 = vadd.f32 %v2844, %v2863
  %2865 = vdwg.mxu0
  %v2866 = vld [vmem:[%s13] sm:$0x1]
  %v2868 = vperm.slane %v2866, 0
  %v2870 = vadd.f32 %v2864, %v2868
  %2871 = vst [vmem:[%s14] sm:$0xff] %v2870
  // Predicated region
  $region58: #{gru_model_forward.1} parent=0 // pred_check
    _
  $region59: #{gru_model_forward.1} parent=0 // pred_check_branch
    %2873 = sbr.rel (0) target = $region61
  $region60: #{gru_model_forward.1} parent=0 // pred_region
    _
  $region61: #{gru_model_forward.1} parent=0 // pred_fallthru
    _
  // Predicated region
  $region62: #{gru_model_forward.1} parent=0 // pred_check
    _
  $region63: #{gru_model_forward.1} parent=0 // pred_check_branch
    %2875 = sbr.rel (0) target = $region65
  $region64: #{gru_model_forward.1} parent=0 // pred_region
    _
  $region65: #{gru_model_forward.1} parent=0 // pred_fallthru
    _

</llo_original>
